<compile_context>
chip_gen: v7x
topology: tpu7x:2x2x1
jax: 0.10.0
libtpu: 0.0.40
codegen_flags: <defaults>
</compile_context>

<pallas_src>
import jax
import jax.numpy as jnp
from jax.experimental import pallas as pl
from jax.experimental.pallas import tpu as pltpu

_HIGH = jax.lax.Precision.HIGHEST  # used only by the pure-JAX reference


def _round_up(x, m):
    return -(-x // m) * m


def hier_lstm_kernel(embs_ref,
                     w_l_ref, b_l_ref,
                     w_u_ref, b_u_ref,
                     wstop_ref, bstop_ref,
                     wout_ref, bout_ref,
                     out_ref, stops_out_ref):
    M, Np, E = embs_ref.shape

    # Hoist all recurrent weights/biases out of the unrolled loop (stay in vregs).
    w_l = w_l_ref[...]          # (2E, 4E) = [Wih_l ; Whh_l]
    b_l = b_l_ref[...]          # (1, 4E)
    w_u = w_u_ref[...]          # (2E, 4E) = [Wih_u ; Whh_u]
    b_u = b_u_ref[...]          # (1, 4E)
    wstop = wstop_ref[...]      # (1, E)   stop-gate weights as a row
    bstop = bstop_ref[...]      # (1, 1)

    def lstm_cell(x, h, c, w, b):
        # Fused single MXU push per cell: concat([x, h]) @ [Wih; Whh] + b
        xh = jnp.concatenate([x, h], axis=1)                     # (Np, 2E)
        gates = jnp.dot(xh, w, preferred_element_type=jnp.float32) + b
        i = jax.nn.sigmoid(gates[:, 0:E])
        f = jax.nn.sigmoid(gates[:, E:2 * E])
        g = jnp.tanh(gates[:, 2 * E:3 * E])
        o = jax.nn.sigmoid(gates[:, 3 * E:4 * E])
        c_new = f * c + i * g
        h_new = o * jnp.tanh(c_new)
        return h_new, c_new

    # State init (matches torch.zeros / torch.ones in the reference module).
    zero = jnp.zeros((Np, E), jnp.float32)
    h_l, c_l, h_u, c_u = zero, zero, zero, zero
    s = jnp.ones((Np, 1), jnp.float32)

    # Fully unrolled recurrence: M is static, all indices/slices are static,
    # states live in vregs (no per-step VMEM round trips).
    for m in range(M):
        x_m = embs_ref[m]                                        # (Np, E)

        # reset lower state where the previous token closed a segment
        one_minus_s = 1.0 - s                                    # hoisted broadcast
        h_l, c_l = lstm_cell(x_m, h_l * one_minus_s, c_l * one_minus_s, w_l, b_l)

        # stop gate on the lower hidden state: VPU multiply + XLU lane-reduce
        # (no MXU round trip for a 1-column RHS)
        s = jax.nn.sigmoid(jnp.sum(h_l * wstop, axis=-1, keepdims=True) + bstop)
        stops_out_ref[:, m:m + 1] = s                            # time along lanes

        # upper LSTM cell, gated by stopness
        hu_new, cu_new = lstm_cell(h_l, h_u, c_u, w_u, b_u)
        one_minus_snew = 1.0 - s                                 # hoisted broadcast
        h_u = s * hu_new + one_minus_snew * h_u
        c_u = s * cu_new + one_minus_snew * c_u

    # Zero the lane padding of the lane-dense stopness output (lanes >= M).
    if M < stops_out_ref.shape[1]:
        stops_out_ref[:, M:] = jnp.zeros(
            (Np, stops_out_ref.shape[1] - M), jnp.float32)

    # linear_out on the final upper hidden state (wout lane-padded to 128 cols).
    out_ref[...] = (jnp.dot(h_u, wout_ref[...], preferred_element_type=jnp.float32)
                    + bout_ref[...])


def hier_model_forward(utts, params, num_meaning_types, meanings_per_type):
    """utts: int32 [M, N] (seq_len, batch).  Returns (x [N,T,P], stopness [M,N])."""
    embs = params['embedding'][utts].astype(jnp.float32)         # lookup glue (M,N,E)
    M, N, E = embs.shape
    TP = num_meaning_types * meanings_per_type

    # Pad batch to a full f32 sublane group (8 rows); slice back after the call.
    N_pad = max(8, _round_up(N, 8))
    if N_pad != N:
        embs = jnp.pad(embs, ((0, 0), (0, N_pad - N), (0, 0)))

    out_pad = max(128, _round_up(TP, 128))       # lane-dense logits output
    stop_pad = max(128, _round_up(M, 128))       # lane-dense stopness output

    # Pre-stack LSTM weights so each cell is a single (N,2E)x(2E,4E) matmul,
    # present the stop gate as a row, and lane-pad the output projection.
    w_l = jnp.concatenate([params['wih_l'], params['whh_l']], axis=0)   # (2E,4E)
    w_u = jnp.concatenate([params['wih_u'], params['whh_u']], axis=0)   # (2E,4E)
    wstop_row = params['wstop'].T                                        # (1, E)
    wout_p = jnp.zeros((E, out_pad), jnp.float32).at[:, :TP].set(params['wout'])
    bout_p = jnp.zeros((1, out_pad), jnp.float32).at[:, :TP].set(params['bout'])

    vmem = pl.BlockSpec(memory_space=pltpu.MemorySpace.VMEM)
    kernel_fn = pl.pallas_call(
        hier_lstm_kernel,
        out_shape=(jax.ShapeDtypeStruct((N_pad, out_pad), jnp.float32),
                   jax.ShapeDtypeStruct((N_pad, stop_pad), jnp.float32)),
        in_specs=[vmem] * 9,
        out_specs=(vmem, vmem),
    )
    logits_p, stops_p = kernel_fn(
        embs, w_l, params['b_l'], w_u, params['b_u'],
        wstop_row, params['bstop'], wout_p, bout_p)

    x = logits_p[:N, :TP].reshape(N, num_meaning_types, meanings_per_type)
    all_lower_stopness = stops_p[:N, :M].T                       # (M, N)
    return x, all_lower_stopness


def init_params(key, vocab_size, E, T, P):
    ks = jax.random.split(key, 11)
    s = 1.0 / (E ** 0.5)

    def u(k, shape, scale):
        return jax.random.uniform(k, shape, jnp.float32, -scale, scale)

    return {
        'embedding': u(ks[0], (vocab_size + 1, E), 1.0),
        # LSTMCell weights (gate order i, f, g, o), bias_ih + bias_hh folded.
        'wih_l': u(ks[1], (E, 4 * E), s),
        'whh_l': u(ks[2], (E, 4 * E), s),
        'b_l':   u(ks[3], (1, 4 * E), s),
        'wih_u': u(ks[4], (E, 4 * E), s),
        'whh_u': u(ks[5], (E, 4 * E), s),
        'b_u':   u(ks[6], (1, 4 * E), s),
        'wstop': u(ks[7], (E, 1), s),
        'bstop': u(ks[8], (1, 1), s),
        'wout':  u(ks[9], (E, T * P), s),
        'bout':  u(ks[10], (1, T * P), s),
    }


def reference_forward(utts, params, T, P):
    """Pure-JAX re-implementation of the PyTorch forward (LSTM path), f32/HIGHEST."""
    embs = params['embedding'][utts].astype(jnp.float32)
    M, N, E = embs.shape

    def dot(a, b):
        return jnp.dot(a, b, precision=_HIGH)

    def cell(x, h, c, wih, whh, b):
        g = dot(x, wih) + dot(h, whh) + b
        i = jax.nn.sigmoid(g[:, 0:E])
        f = jax.nn.sigmoid(g[:, E:2 * E])
        gg = jnp.tanh(g[:, 2 * E:3 * E])
        o = jax.nn.sigmoid(g[:, 3 * E:4 * E])
        c_new = f * c + i * gg
        return o * jnp.tanh(c_new), c_new

    h_l = jnp.zeros((N, E), jnp.float32)
    c_l = jnp.zeros((N, E), jnp.float32)
    h_u = jnp.zeros((N, E), jnp.float32)
    c_u = jnp.zeros((N, E), jnp.float32)
    stop = jnp.ones((N, 1), jnp.float32)
    all_stops = []
    for m in range(M):
        h_l = h_l * (1.0 - stop)
        c_l = c_l * (1.0 - stop)
        h_l, c_l = cell(embs[m], h_l, c_l,
                        params['wih_l'], params['whh_l'], params['b_l'])
        stop = jax.nn.sigmoid(dot(h_l, params['wstop']) + params['bstop'])
        all_stops.append(stop[:, 0])
        nh_u, nc_u = cell(h_l, h_u, c_u,
                          params['wih_u'], params['whh_u'], params['b_u'])
        h_u = stop * nh_u + (1.0 - stop) * h_u
        c_u = stop * nc_u + (1.0 - stop) * c_u
    logits = dot(h_u, params['wout']) + params['bout']
    return logits.reshape(N, T, P), jnp.stack(all_stops)


if __name__ == "__main__":
    embedding_size = 32
    vocab_size = 10
    utt_len = 8            # M (seq_len)
    batch = 4              # N
    num_meaning_types = 4  # T
    meanings_per_type = 8  # P

    key = jax.random.PRNGKey(0)
    k_utt, k_param = jax.random.split(key)
    utts = jax.random.randint(k_utt, (utt_len, batch), 0, vocab_size + 1,
                              dtype=jnp.int32)
    params = init_params(k_param, vocab_size, embedding_size,
                         num_meaning_types, meanings_per_type)

    x, stopness = hier_model_forward(utts, params,
                                     num_meaning_types, meanings_per_type)
    jax.block_until_ready((x, stopness))

    x_exp, stop_exp = reference_forward(utts, params,
                                        num_meaning_types, meanings_per_type)
    assert x.shape == (batch, num_meaning_types, meanings_per_type)
    assert stopness.shape == (utt_len, batch)
    # Kernel matmuls run at default (single-pass bf16) MXU precision per the
    # perf review; the reference is f32/HIGHEST, hence the 1e-2 tolerance.
    assert jnp.allclose(x, x_exp, atol=1e-2, rtol=1e-2)
    assert jnp.allclose(stopness, stop_exp, atol=1e-2, rtol=1e-2)
    print("KERNEL_OK")
</pallas_src>

<mosaic_0001>
module attributes {stable_mosaic.version = 11 : i64} {
  func.func @hier_lstm_kernel(%arg0: memref<8x8x32xf32, #tpu.memory_space<vmem>>, %arg1: memref<64x128xf32, #tpu.memory_space<vmem>>, %arg2: memref<1x128xf32, #tpu.memory_space<vmem>>, %arg3: memref<64x128xf32, #tpu.memory_space<vmem>>, %arg4: memref<1x128xf32, #tpu.memory_space<vmem>>, %arg5: memref<1x32xf32, #tpu.memory_space<vmem>>, %arg6: memref<1x1xf32, #tpu.memory_space<vmem>>, %arg7: memref<32x128xf32, #tpu.memory_space<vmem>>, %arg8: memref<1x128xf32, #tpu.memory_space<vmem>>, %arg9: memref<8x128xf32, #tpu.memory_space<vmem>>, %arg10: memref<8x128xf32, #tpu.memory_space<vmem>>) attributes {dimension_semantics = [], scalar_prefetch = 0 : i64, scratch_operands = 0 : i64, tpu.core_type = #tpu.core_type<tc>} {
    %c0 = arith.constant 0 : index
    %c0_0 = arith.constant 0 : index
    %0 = vector.load %arg1[%c0, %c0_0] : memref<64x128xf32, #tpu.memory_space<vmem>>, vector<64x128xf32>
    %c0_1 = arith.constant 0 : index
    %c0_2 = arith.constant 0 : index
    %1 = vector.load %arg2[%c0_1, %c0_2] : memref<1x128xf32, #tpu.memory_space<vmem>>, vector<1x128xf32>
    %c0_3 = arith.constant 0 : index
    %c0_4 = arith.constant 0 : index
    %2 = vector.load %arg3[%c0_3, %c0_4] : memref<64x128xf32, #tpu.memory_space<vmem>>, vector<64x128xf32>
    %c0_5 = arith.constant 0 : index
    %c0_6 = arith.constant 0 : index
    %3 = vector.load %arg4[%c0_5, %c0_6] : memref<1x128xf32, #tpu.memory_space<vmem>>, vector<1x128xf32>
    %c0_7 = arith.constant 0 : index
    %c0_8 = arith.constant 0 : index
    %4 = vector.load %arg5[%c0_7, %c0_8] : memref<1x32xf32, #tpu.memory_space<vmem>>, vector<1x32xf32>
    %c0_9 = arith.constant 0 : index
    %c0_10 = arith.constant 0 : index
    %5 = vector.load %arg6[%c0_9, %c0_10] : memref<1x1xf32, #tpu.memory_space<vmem>>, vector<1x1xf32>
    %cst = arith.constant 0.000000e+00 : f32
    %6 = vector.broadcast %cst : f32 to vector<8x32xf32>
    %cst_11 = arith.constant 1.000000e+00 : f32
    %7 = vector.broadcast %cst_11 : f32 to vector<8x1xf32>
    %c0_12 = arith.constant 0 : index
    %c0_13 = arith.constant 0 : index
    %c0_14 = arith.constant 0 : index
    %8 = vector.load %arg0[%c0_12, %c0_13, %c0_14] : memref<8x8x32xf32, #tpu.memory_space<vmem>>, vector<1x8x32xf32>
    %9 = vector.shape_cast %8 : vector<1x8x32xf32> to vector<8x32xf32>
    %cst_15 = arith.constant 1.000000e+00 : f32
    %10 = vector.broadcast %cst_15 : f32 to vector<8x1xf32>
    %11 = arith.subf %10, %7 : vector<8x1xf32>
    %12 = vector.broadcast %11 : vector<8x1xf32> to vector<8x32xf32>
    %13 = arith.mulf %6, %12 : vector<8x32xf32>
    %14 = vector.broadcast %11 : vector<8x1xf32> to vector<8x32xf32>
    %15 = arith.mulf %6, %14 : vector<8x32xf32>
    %16 = tpu.concatenate %9, %13 in 1 : vector<8x32xf32>, vector<8x32xf32> -> vector<8x64xf32>
    %cst_16 = arith.constant dense<0.000000e+00> : vector<8x128xf32>
    %17 = tpu.matmul %16, %0, %cst_16 {dimension_numbers = #tpu.dot_dimension_numbers<[1], [0], [0], [1], [0, 0, 1, 1], [], []>} : vector<8x64xf32>, vector<64x128xf32>, vector<8x128xf32> -> vector<8x128xf32>
    %18 = vector.broadcast %1 : vector<1x128xf32> to vector<8x128xf32>
    %19 = arith.addf %17, %18 : vector<8x128xf32>
    %20 = vector.extract_strided_slice %19 {offsets = [0, 0], sizes = [8, 32], strides = [1, 1]} : vector<8x128xf32> to vector<8x32xf32>
    %21 = arith.negf %20 : vector<8x32xf32>
    %22 = math.exp %21 : vector<8x32xf32>
    %cst_17 = arith.constant 1.000000e+00 : f32
    %23 = vector.broadcast %cst_17 : f32 to vector<8x32xf32>
    %24 = arith.addf %23, %22 : vector<8x32xf32>
    %25 = arith.divf %23, %24 : vector<8x32xf32>
    %26 = vector.extract_strided_slice %19 {offsets = [0, 32], sizes = [8, 32], strides = [1, 1]} : vector<8x128xf32> to vector<8x32xf32>
    %27 = arith.negf %26 : vector<8x32xf32>
    %28 = math.exp %27 : vector<8x32xf32>
    %cst_18 = arith.constant 1.000000e+00 : f32
    %29 = vector.broadcast %cst_18 : f32 to vector<8x32xf32>
    %30 = arith.addf %29, %28 : vector<8x32xf32>
    %31 = arith.divf %29, %30 : vector<8x32xf32>
    %32 = vector.extract_strided_slice %19 {offsets = [0, 64], sizes = [8, 32], strides = [1, 1]} : vector<8x128xf32> to vector<8x32xf32>
    %33 = math.tanh %32 : vector<8x32xf32>
    %34 = vector.extract_strided_slice %19 {offsets = [0, 96], sizes = [8, 32], strides = [1, 1]} : vector<8x128xf32> to vector<8x32xf32>
    %35 = arith.negf %34 : vector<8x32xf32>
    %36 = math.exp %35 : vector<8x32xf32>
    %cst_19 = arith.constant 1.000000e+00 : f32
    %37 = vector.broadcast %cst_19 : f32 to vector<8x32xf32>
    %38 = arith.addf %37, %36 : vector<8x32xf32>
    %39 = arith.divf %37, %38 : vector<8x32xf32>
    %40 = arith.mulf %31, %15 : vector<8x32xf32>
    %41 = arith.mulf %25, %33 : vector<8x32xf32>
    %42 = arith.addf %40, %41 : vector<8x32xf32>
    %43 = math.tanh %42 : vector<8x32xf32>
    %44 = arith.mulf %39, %43 : vector<8x32xf32>
    %45 = vector.broadcast %4 : vector<1x32xf32> to vector<8x32xf32>
    %46 = arith.mulf %44, %45 : vector<8x32xf32>
    %cst_20 = arith.constant dense<0.000000e+00> : vector<8xf32>
    %47 = vector.multi_reduction <add>, %46, %cst_20 [1] : vector<8x32xf32> to vector<8xf32>
    %48 = vector.shape_cast %47 : vector<8xf32> to vector<8x1xf32>
    %49 = vector.broadcast %5 : vector<1x1xf32> to vector<8x1xf32>
    %50 = arith.addf %48, %49 : vector<8x1xf32>
    %51 = arith.negf %50 : vector<8x1xf32>
    %52 = math.exp %51 : vector<8x1xf32>
    %cst_21 = arith.constant 1.000000e+00 : f32
    %53 = vector.broadcast %cst_21 : f32 to vector<8x1xf32>
    %54 = arith.addf %53, %52 : vector<8x1xf32>
    %55 = arith.divf %53, %54 : vector<8x1xf32>
    %c0_22 = arith.constant 0 : index
    %c0_23 = arith.constant 0 : index
    %56 = vector.load %arg10[%c0_22, %c0_23] : memref<8x128xf32, #tpu.memory_space<vmem>>, vector<8x1xf32>
    tpu.vector_store %arg10[%c0_22, %c0_23], %55 {strides = array<i32>} : memref<8x128xf32, #tpu.memory_space<vmem>>, vector<8x1xf32>,
    %57 = tpu.concatenate %44, %6 in 1 : vector<8x32xf32>, vector<8x32xf32> -> vector<8x64xf32>
    %cst_24 = arith.constant dense<0.000000e+00> : vector<8x128xf32>
    %58 = tpu.matmul %57, %2, %cst_24 {dimension_numbers = #tpu.dot_dimension_numbers<[1], [0], [0], [1], [0, 0, 1, 1], [], []>} : vector<8x64xf32>, vector<64x128xf32>, vector<8x128xf32> -> vector<8x128xf32>
    %59 = vector.broadcast %3 : vector<1x128xf32> to vector<8x128xf32>
    %60 = arith.addf %58, %59 : vector<8x128xf32>
    %61 = vector.extract_strided_slice %60 {offsets = [0, 0], sizes = [8, 32], strides = [1, 1]} : vector<8x128xf32> to vector<8x32xf32>
    %62 = arith.negf %61 : vector<8x32xf32>
    %63 = math.exp %62 : vector<8x32xf32>
    %cst_25 = arith.constant 1.000000e+00 : f32
    %64 = vector.broadcast %cst_25 : f32 to vector<8x32xf32>
    %65 = arith.addf %64, %63 : vector<8x32xf32>
    %66 = arith.divf %64, %65 : vector<8x32xf32>
    %67 = vector.extract_strided_slice %60 {offsets = [0, 32], sizes = [8, 32], strides = [1, 1]} : vector<8x128xf32> to vector<8x32xf32>
    %68 = arith.negf %67 : vector<8x32xf32>
    %69 = math.exp %68 : vector<8x32xf32>
    %cst_26 = arith.constant 1.000000e+00 : f32
    %70 = vector.broadcast %cst_26 : f32 to vector<8x32xf32>
    %71 = arith.addf %70, %69 : vector<8x32xf32>
    %72 = arith.divf %70, %71 : vector<8x32xf32>
    %73 = vector.extract_strided_slice %60 {offsets = [0, 64], sizes = [8, 32], strides = [1, 1]} : vector<8x128xf32> to vector<8x32xf32>
    %74 = math.tanh %73 : vector<8x32xf32>
    %75 = vector.extract_strided_slice %60 {offsets = [0, 96], sizes = [8, 32], strides = [1, 1]} : vector<8x128xf32> to vector<8x32xf32>
    %76 = arith.negf %75 : vector<8x32xf32>
    %77 = math.exp %76 : vector<8x32xf32>
    %cst_27 = arith.constant 1.000000e+00 : f32
    %78 = vector.broadcast %cst_27 : f32 to vector<8x32xf32>
    %79 = arith.addf %78, %77 : vector<8x32xf32>
    %80 = arith.divf %78, %79 : vector<8x32xf32>
    %81 = arith.mulf %72, %6 : vector<8x32xf32>
    %82 = arith.mulf %66, %74 : vector<8x32xf32>
    %83 = arith.addf %81, %82 : vector<8x32xf32>
    %84 = math.tanh %83 : vector<8x32xf32>
    %85 = arith.mulf %80, %84 : vector<8x32xf32>
    %cst_28 = arith.constant 1.000000e+00 : f32
    %86 = vector.broadcast %cst_28 : f32 to vector<8x1xf32>
    %87 = arith.subf %86, %55 : vector<8x1xf32>
    %88 = vector.broadcast %55 : vector<8x1xf32> to vector<8x32xf32>
    %89 = arith.mulf %88, %85 : vector<8x32xf32>
    %90 = vector.broadcast %87 : vector<8x1xf32> to vector<8x32xf32>
    %91 = arith.mulf %90, %6 : vector<8x32xf32>
    %92 = arith.addf %89, %91 : vector<8x32xf32>
    %93 = vector.broadcast %55 : vector<8x1xf32> to vector<8x32xf32>
    %94 = arith.mulf %93, %83 : vector<8x32xf32>
    %95 = vector.broadcast %87 : vector<8x1xf32> to vector<8x32xf32>
    %96 = arith.mulf %95, %6 : vector<8x32xf32>
    %97 = arith.addf %94, %96 : vector<8x32xf32>
    %c1 = arith.constant 1 : index
    %c0_29 = arith.constant 0 : index
    %c0_30 = arith.constant 0 : index
    %98 = vector.load %arg0[%c1, %c0_29, %c0_30] : memref<8x8x32xf32, #tpu.memory_space<vmem>>, vector<1x8x32xf32>
    %99 = vector.shape_cast %98 : vector<1x8x32xf32> to vector<8x32xf32>
    %cst_31 = arith.constant 1.000000e+00 : f32
    %100 = vector.broadcast %cst_31 : f32 to vector<8x1xf32>
    %101 = arith.subf %100, %55 : vector<8x1xf32>
    %102 = vector.broadcast %101 : vector<8x1xf32> to vector<8x32xf32>
    %103 = arith.mulf %44, %102 : vector<8x32xf32>
    %104 = vector.broadcast %101 : vector<8x1xf32> to vector<8x32xf32>
    %105 = arith.mulf %42, %104 : vector<8x32xf32>
    %106 = tpu.concatenate %99, %103 in 1 : vector<8x32xf32>, vector<8x32xf32> -> vector<8x64xf32>
    %cst_32 = arith.constant dense<0.000000e+00> : vector<8x128xf32>
    %107 = tpu.matmul %106, %0, %cst_32 {dimension_numbers = #tpu.dot_dimension_numbers<[1], [0], [0], [1], [0, 0, 1, 1], [], []>} : vector<8x64xf32>, vector<64x128xf32>, vector<8x128xf32> -> vector<8x128xf32>
    %108 = vector.broadcast %1 : vector<1x128xf32> to vector<8x128xf32>
    %109 = arith.addf %107, %108 : vector<8x128xf32>
    %110 = vector.extract_strided_slice %109 {offsets = [0, 0], sizes = [8, 32], strides = [1, 1]} : vector<8x128xf32> to vector<8x32xf32>
    %111 = arith.negf %110 : vector<8x32xf32>
    %112 = math.exp %111 : vector<8x32xf32>
    %cst_33 = arith.constant 1.000000e+00 : f32
    %113 = vector.broadcast %cst_33 : f32 to vector<8x32xf32>
    %114 = arith.addf %113, %112 : vector<8x32xf32>
    %115 = arith.divf %113, %114 : vector<8x32xf32>
    %116 = vector.extract_strided_slice %109 {offsets = [0, 32], sizes = [8, 32], strides = [1, 1]} : vector<8x128xf32> to vector<8x32xf32>
    %117 = arith.negf %116 : vector<8x32xf32>
    %118 = math.exp %117 : vector<8x32xf32>
    %cst_34 = arith.constant 1.000000e+00 : f32
    %119 = vector.broadcast %cst_34 : f32 to vector<8x32xf32>
    %120 = arith.addf %119, %118 : vector<8x32xf32>
    %121 = arith.divf %119, %120 : vector<8x32xf32>
    %122 = vector.extract_strided_slice %109 {offsets = [0, 64], sizes = [8, 32], strides = [1, 1]} : vector<8x128xf32> to vector<8x32xf32>
    %123 = math.tanh %122 : vector<8x32xf32>
    %124 = vector.extract_strided_slice %109 {offsets = [0, 96], sizes = [8, 32], strides = [1, 1]} : vector<8x128xf32> to vector<8x32xf32>
    %125 = arith.negf %124 : vector<8x32xf32>
    %126 = math.exp %125 : vector<8x32xf32>
    %cst_35 = arith.constant 1.000000e+00 : f32
    %127 = vector.broadcast %cst_35 : f32 to vector<8x32xf32>
    %128 = arith.addf %127, %126 : vector<8x32xf32>
    %129 = arith.divf %127, %128 : vector<8x32xf32>
    %130 = arith.mulf %121, %105 : vector<8x32xf32>
    %131 = arith.mulf %115, %123 : vector<8x32xf32>
    %132 = arith.addf %130, %131 : vector<8x32xf32>
    %133 = math.tanh %132 : vector<8x32xf32>
    %134 = arith.mulf %129, %133 : vector<8x32xf32>
    %135 = vector.broadcast %4 : vector<1x32xf32> to vector<8x32xf32>
    %136 = arith.mulf %134, %135 : vector<8x32xf32>
    %cst_36 = arith.constant dense<0.000000e+00> : vector<8xf32>
    %137 = vector.multi_reduction <add>, %136, %cst_36 [1] : vector<8x32xf32> to vector<8xf32>
    %138 = vector.shape_cast %137 : vector<8xf32> to vector<8x1xf32>
    %139 = vector.broadcast %5 : vector<1x1xf32> to vector<8x1xf32>
    %140 = arith.addf %138, %139 : vector<8x1xf32>
    %141 = arith.negf %140 : vector<8x1xf32>
    %142 = math.exp %141 : vector<8x1xf32>
    %cst_37 = arith.constant 1.000000e+00 : f32
    %143 = vector.broadcast %cst_37 : f32 to vector<8x1xf32>
    %144 = arith.addf %143, %142 : vector<8x1xf32>
    %145 = arith.divf %143, %144 : vector<8x1xf32>
    %c0_38 = arith.constant 0 : index
    %c1_39 = arith.constant 1 : index
    %146 = vector.load %arg10[%c0_38, %c1_39] : memref<8x128xf32, #tpu.memory_space<vmem>>, vector<8x1xf32>
    tpu.vector_store %arg10[%c0_38, %c1_39], %145 {strides = array<i32>} : memref<8x128xf32, #tpu.memory_space<vmem>>, vector<8x1xf32>,
    %147 = tpu.concatenate %134, %92 in 1 : vector<8x32xf32>, vector<8x32xf32> -> vector<8x64xf32>
    %cst_40 = arith.constant dense<0.000000e+00> : vector<8x128xf32>
    %148 = tpu.matmul %147, %2, %cst_40 {dimension_numbers = #tpu.dot_dimension_numbers<[1], [0], [0], [1], [0, 0, 1, 1], [], []>} : vector<8x64xf32>, vector<64x128xf32>, vector<8x128xf32> -> vector<8x128xf32>
    %149 = vector.broadcast %3 : vector<1x128xf32> to vector<8x128xf32>
    %150 = arith.addf %148, %149 : vector<8x128xf32>
    %151 = vector.extract_strided_slice %150 {offsets = [0, 0], sizes = [8, 32], strides = [1, 1]} : vector<8x128xf32> to vector<8x32xf32>
    %152 = arith.negf %151 : vector<8x32xf32>
    %153 = math.exp %152 : vector<8x32xf32>
    %cst_41 = arith.constant 1.000000e+00 : f32
    %154 = vector.broadcast %cst_41 : f32 to vector<8x32xf32>
    %155 = arith.addf %154, %153 : vector<8x32xf32>
    %156 = arith.divf %154, %155 : vector<8x32xf32>
    %157 = vector.extract_strided_slice %150 {offsets = [0, 32], sizes = [8, 32], strides = [1, 1]} : vector<8x128xf32> to vector<8x32xf32>
    %158 = arith.negf %157 : vector<8x32xf32>
    %159 = math.exp %158 : vector<8x32xf32>
    %cst_42 = arith.constant 1.000000e+00 : f32
    %160 = vector.broadcast %cst_42 : f32 to vector<8x32xf32>
    %161 = arith.addf %160, %159 : vector<8x32xf32>
    %162 = arith.divf %160, %161 : vector<8x32xf32>
    %163 = vector.extract_strided_slice %150 {offsets = [0, 64], sizes = [8, 32], strides = [1, 1]} : vector<8x128xf32> to vector<8x32xf32>
    %164 = math.tanh %163 : vector<8x32xf32>
    %165 = vector.extract_strided_slice %150 {offsets = [0, 96], sizes = [8, 32], strides = [1, 1]} : vector<8x128xf32> to vector<8x32xf32>
    %166 = arith.negf %165 : vector<8x32xf32>
    %167 = math.exp %166 : vector<8x32xf32>
    %cst_43 = arith.constant 1.000000e+00 : f32
    %168 = vector.broadcast %cst_43 : f32 to vector<8x32xf32>
    %169 = arith.addf %168, %167 : vector<8x32xf32>
    %170 = arith.divf %168, %169 : vector<8x32xf32>
    %171 = arith.mulf %162, %97 : vector<8x32xf32>
    %172 = arith.mulf %156, %164 : vector<8x32xf32>
    %173 = arith.addf %171, %172 : vector<8x32xf32>
    %174 = math.tanh %173 : vector<8x32xf32>
    %175 = arith.mulf %170, %174 : vector<8x32xf32>
    %cst_44 = arith.constant 1.000000e+00 : f32
    %176 = vector.broadcast %cst_44 : f32 to vector<8x1xf32>
    %177 = arith.subf %176, %145 : vector<8x1xf32>
    %178 = vector.broadcast %145 : vector<8x1xf32> to vector<8x32xf32>
    %179 = arith.mulf %178, %175 : vector<8x32xf32>
    %180 = vector.broadcast %177 : vector<8x1xf32> to vector<8x32xf32>
    %181 = arith.mulf %180, %92 : vector<8x32xf32>
    %182 = arith.addf %179, %181 : vector<8x32xf32>
    %183 = vector.broadcast %145 : vector<8x1xf32> to vector<8x32xf32>
    %184 = arith.mulf %183, %173 : vector<8x32xf32>
    %185 = vector.broadcast %177 : vector<8x1xf32> to vector<8x32xf32>
    %186 = arith.mulf %185, %97 : vector<8x32xf32>
    %187 = arith.addf %184, %186 : vector<8x32xf32>
    %c2 = arith.constant 2 : index
    %c0_45 = arith.constant 0 : index
    %c0_46 = arith.constant 0 : index
    %188 = vector.load %arg0[%c2, %c0_45, %c0_46] : memref<8x8x32xf32, #tpu.memory_space<vmem>>, vector<1x8x32xf32>
    %189 = vector.shape_cast %188 : vector<1x8x32xf32> to vector<8x32xf32>
    %cst_47 = arith.constant 1.000000e+00 : f32
    %190 = vector.broadcast %cst_47 : f32 to vector<8x1xf32>
    %191 = arith.subf %190, %145 : vector<8x1xf32>
    %192 = vector.broadcast %191 : vector<8x1xf32> to vector<8x32xf32>
    %193 = arith.mulf %134, %192 : vector<8x32xf32>
    %194 = vector.broadcast %191 : vector<8x1xf32> to vector<8x32xf32>
    %195 = arith.mulf %132, %194 : vector<8x32xf32>
    %196 = tpu.concatenate %189, %193 in 1 : vector<8x32xf32>, vector<8x32xf32> -> vector<8x64xf32>
    %cst_48 = arith.constant dense<0.000000e+00> : vector<8x128xf32>
    %197 = tpu.matmul %196, %0, %cst_48 {dimension_numbers = #tpu.dot_dimension_numbers<[1], [0], [0], [1], [0, 0, 1, 1], [], []>} : vector<8x64xf32>, vector<64x128xf32>, vector<8x128xf32> -> vector<8x128xf32>
    %198 = vector.broadcast %1 : vector<1x128xf32> to vector<8x128xf32>
    %199 = arith.addf %197, %198 : vector<8x128xf32>
    %200 = vector.extract_strided_slice %199 {offsets = [0, 0], sizes = [8, 32], strides = [1, 1]} : vector<8x128xf32> to vector<8x32xf32>
    %201 = arith.negf %200 : vector<8x32xf32>
    %202 = math.exp %201 : vector<8x32xf32>
    %cst_49 = arith.constant 1.000000e+00 : f32
    %203 = vector.broadcast %cst_49 : f32 to vector<8x32xf32>
    %204 = arith.addf %203, %202 : vector<8x32xf32>
    %205 = arith.divf %203, %204 : vector<8x32xf32>
    %206 = vector.extract_strided_slice %199 {offsets = [0, 32], sizes = [8, 32], strides = [1, 1]} : vector<8x128xf32> to vector<8x32xf32>
    %207 = arith.negf %206 : vector<8x32xf32>
    %208 = math.exp %207 : vector<8x32xf32>
    %cst_50 = arith.constant 1.000000e+00 : f32
    %209 = vector.broadcast %cst_50 : f32 to vector<8x32xf32>
    %210 = arith.addf %209, %208 : vector<8x32xf32>
    %211 = arith.divf %209, %210 : vector<8x32xf32>
    %212 = vector.extract_strided_slice %199 {offsets = [0, 64], sizes = [8, 32], strides = [1, 1]} : vector<8x128xf32> to vector<8x32xf32>
    %213 = math.tanh %212 : vector<8x32xf32>
    %214 = vector.extract_strided_slice %199 {offsets = [0, 96], sizes = [8, 32], strides = [1, 1]} : vector<8x128xf32> to vector<8x32xf32>
    %215 = arith.negf %214 : vector<8x32xf32>
    %216 = math.exp %215 : vector<8x32xf32>
    %cst_51 = arith.constant 1.000000e+00 : f32
    %217 = vector.broadcast %cst_51 : f32 to vector<8x32xf32>
    %218 = arith.addf %217, %216 : vector<8x32xf32>
    %219 = arith.divf %217, %218 : vector<8x32xf32>
    %220 = arith.mulf %211, %195 : vector<8x32xf32>
    %221 = arith.mulf %205, %213 : vector<8x32xf32>
    %222 = arith.addf %220, %221 : vector<8x32xf32>
    %223 = math.tanh %222 : vector<8x32xf32>
    %224 = arith.mulf %219, %223 : vector<8x32xf32>
    %225 = vector.broadcast %4 : vector<1x32xf32> to vector<8x32xf32>
    %226 = arith.mulf %224, %225 : vector<8x32xf32>
    %cst_52 = arith.constant dense<0.000000e+00> : vector<8xf32>
    %227 = vector.multi_reduction <add>, %226, %cst_52 [1] : vector<8x32xf32> to vector<8xf32>
    %228 = vector.shape_cast %227 : vector<8xf32> to vector<8x1xf32>
    %229 = vector.broadcast %5 : vector<1x1xf32> to vector<8x1xf32>
    %230 = arith.addf %228, %229 : vector<8x1xf32>
    %231 = arith.negf %230 : vector<8x1xf32>
    %232 = math.exp %231 : vector<8x1xf32>
    %cst_53 = arith.constant 1.000000e+00 : f32
    %233 = vector.broadcast %cst_53 : f32 to vector<8x1xf32>
    %234 = arith.addf %233, %232 : vector<8x1xf32>
    %235 = arith.divf %233, %234 : vector<8x1xf32>
    %c0_54 = arith.constant 0 : index
    %c2_55 = arith.constant 2 : index
    %236 = vector.load %arg10[%c0_54, %c2_55] : memref<8x128xf32, #tpu.memory_space<vmem>>, vector<8x1xf32>
    tpu.vector_store %arg10[%c0_54, %c2_55], %235 {strides = array<i32>} : memref<8x128xf32, #tpu.memory_space<vmem>>, vector<8x1xf32>,
    %237 = tpu.concatenate %224, %182 in 1 : vector<8x32xf32>, vector<8x32xf32> -> vector<8x64xf32>
    %cst_56 = arith.constant dense<0.000000e+00> : vector<8x128xf32>
    %238 = tpu.matmul %237, %2, %cst_56 {dimension_numbers = #tpu.dot_dimension_numbers<[1], [0], [0], [1], [0, 0, 1, 1], [], []>} : vector<8x64xf32>, vector<64x128xf32>, vector<8x128xf32> -> vector<8x128xf32>
    %239 = vector.broadcast %3 : vector<1x128xf32> to vector<8x128xf32>
    %240 = arith.addf %238, %239 : vector<8x128xf32>
    %241 = vector.extract_strided_slice %240 {offsets = [0, 0], sizes = [8, 32], strides = [1, 1]} : vector<8x128xf32> to vector<8x32xf32>
    %242 = arith.negf %241 : vector<8x32xf32>
    %243 = math.exp %242 : vector<8x32xf32>
    %cst_57 = arith.constant 1.000000e+00 : f32
    %244 = vector.broadcast %cst_57 : f32 to vector<8x32xf32>
    %245 = arith.addf %244, %243 : vector<8x32xf32>
    %246 = arith.divf %244, %245 : vector<8x32xf32>
    %247 = vector.extract_strided_slice %240 {offsets = [0, 32], sizes = [8, 32], strides = [1, 1]} : vector<8x128xf32> to vector<8x32xf32>
    %248 = arith.negf %247 : vector<8x32xf32>
    %249 = math.exp %248 : vector<8x32xf32>
    %cst_58 = arith.constant 1.000000e+00 : f32
    %250 = vector.broadcast %cst_58 : f32 to vector<8x32xf32>
    %251 = arith.addf %250, %249 : vector<8x32xf32>
    %252 = arith.divf %250, %251 : vector<8x32xf32>
    %253 = vector.extract_strided_slice %240 {offsets = [0, 64], sizes = [8, 32], strides = [1, 1]} : vector<8x128xf32> to vector<8x32xf32>
    %254 = math.tanh %253 : vector<8x32xf32>
    %255 = vector.extract_strided_slice %240 {offsets = [0, 96], sizes = [8, 32], strides = [1, 1]} : vector<8x128xf32> to vector<8x32xf32>
    %256 = arith.negf %255 : vector<8x32xf32>
    %257 = math.exp %256 : vector<8x32xf32>
    %cst_59 = arith.constant 1.000000e+00 : f32
    %258 = vector.broadcast %cst_59 : f32 to vector<8x32xf32>
    %259 = arith.addf %258, %257 : vector<8x32xf32>
    %260 = arith.divf %258, %259 : vector<8x32xf32>
    %261 = arith.mulf %252, %187 : vector<8x32xf32>
    %262 = arith.mulf %246, %254 : vector<8x32xf32>
    %263 = arith.addf %261, %262 : vector<8x32xf32>
    %264 = math.tanh %263 : vector<8x32xf32>
    %265 = arith.mulf %260, %264 : vector<8x32xf32>
    %cst_60 = arith.constant 1.000000e+00 : f32
    %266 = vector.broadcast %cst_60 : f32 to vector<8x1xf32>
    %267 = arith.subf %266, %235 : vector<8x1xf32>
    %268 = vector.broadcast %235 : vector<8x1xf32> to vector<8x32xf32>
    %269 = arith.mulf %268, %265 : vector<8x32xf32>
    %270 = vector.broadcast %267 : vector<8x1xf32> to vector<8x32xf32>
    %271 = arith.mulf %270, %182 : vector<8x32xf32>
    %272 = arith.addf %269, %271 : vector<8x32xf32>
    %273 = vector.broadcast %235 : vector<8x1xf32> to vector<8x32xf32>
    %274 = arith.mulf %273, %263 : vector<8x32xf32>
    %275 = vector.broadcast %267 : vector<8x1xf32> to vector<8x32xf32>
    %276 = arith.mulf %275, %187 : vector<8x32xf32>
    %277 = arith.addf %274, %276 : vector<8x32xf32>
    %c3 = arith.constant 3 : index
    %c0_61 = arith.constant 0 : index
    %c0_62 = arith.constant 0 : index
    %278 = vector.load %arg0[%c3, %c0_61, %c0_62] : memref<8x8x32xf32, #tpu.memory_space<vmem>>, vector<1x8x32xf32>
    %279 = vector.shape_cast %278 : vector<1x8x32xf32> to vector<8x32xf32>
    %cst_63 = arith.constant 1.000000e+00 : f32
    %280 = vector.broadcast %cst_63 : f32 to vector<8x1xf32>
    %281 = arith.subf %280, %235 : vector<8x1xf32>
    %282 = vector.broadcast %281 : vector<8x1xf32> to vector<8x32xf32>
    %283 = arith.mulf %224, %282 : vector<8x32xf32>
    %284 = vector.broadcast %281 : vector<8x1xf32> to vector<8x32xf32>
    %285 = arith.mulf %222, %284 : vector<8x32xf32>
    %286 = tpu.concatenate %279, %283 in 1 : vector<8x32xf32>, vector<8x32xf32> -> vector<8x64xf32>
    %cst_64 = arith.constant dense<0.000000e+00> : vector<8x128xf32>
    %287 = tpu.matmul %286, %0, %cst_64 {dimension_numbers = #tpu.dot_dimension_numbers<[1], [0], [0], [1], [0, 0, 1, 1], [], []>} : vector<8x64xf32>, vector<64x128xf32>, vector<8x128xf32> -> vector<8x128xf32>
    %288 = vector.broadcast %1 : vector<1x128xf32> to vector<8x128xf32>
    %289 = arith.addf %287, %288 : vector<8x128xf32>
    %290 = vector.extract_strided_slice %289 {offsets = [0, 0], sizes = [8, 32], strides = [1, 1]} : vector<8x128xf32> to vector<8x32xf32>
    %291 = arith.negf %290 : vector<8x32xf32>
    %292 = math.exp %291 : vector<8x32xf32>
    %cst_65 = arith.constant 1.000000e+00 : f32
    %293 = vector.broadcast %cst_65 : f32 to vector<8x32xf32>
    %294 = arith.addf %293, %292 : vector<8x32xf32>
    %295 = arith.divf %293, %294 : vector<8x32xf32>
    %296 = vector.extract_strided_slice %289 {offsets = [0, 32], sizes = [8, 32], strides = [1, 1]} : vector<8x128xf32> to vector<8x32xf32>
    %297 = arith.negf %296 : vector<8x32xf32>
    %298 = math.exp %297 : vector<8x32xf32>
    %cst_66 = arith.constant 1.000000e+00 : f32
    %299 = vector.broadcast %cst_66 : f32 to vector<8x32xf32>
    %300 = arith.addf %299, %298 : vector<8x32xf32>
    %301 = arith.divf %299, %300 : vector<8x32xf32>
    %302 = vector.extract_strided_slice %289 {offsets = [0, 64], sizes = [8, 32], strides = [1, 1]} : vector<8x128xf32> to vector<8x32xf32>
    %303 = math.tanh %302 : vector<8x32xf32>
    %304 = vector.extract_strided_slice %289 {offsets = [0, 96], sizes = [8, 32], strides = [1, 1]} : vector<8x128xf32> to vector<8x32xf32>
    %305 = arith.negf %304 : vector<8x32xf32>
    %306 = math.exp %305 : vector<8x32xf32>
    %cst_67 = arith.constant 1.000000e+00 : f32
    %307 = vector.broadcast %cst_67 : f32 to vector<8x32xf32>
    %308 = arith.addf %307, %306 : vector<8x32xf32>
    %309 = arith.divf %307, %308 : vector<8x32xf32>
    %310 = arith.mulf %301, %285 : vector<8x32xf32>
    %311 = arith.mulf %295, %303 : vector<8x32xf32>
    %312 = arith.addf %310, %311 : vector<8x32xf32>
    %313 = math.tanh %312 : vector<8x32xf32>
    %314 = arith.mulf %309, %313 : vector<8x32xf32>
    %315 = vector.broadcast %4 : vector<1x32xf32> to vector<8x32xf32>
    %316 = arith.mulf %314, %315 : vector<8x32xf32>
    %cst_68 = arith.constant dense<0.000000e+00> : vector<8xf32>
    %317 = vector.multi_reduction <add>, %316, %cst_68 [1] : vector<8x32xf32> to vector<8xf32>
    %318 = vector.shape_cast %317 : vector<8xf32> to vector<8x1xf32>
    %319 = vector.broadcast %5 : vector<1x1xf32> to vector<8x1xf32>
    %320 = arith.addf %318, %319 : vector<8x1xf32>
    %321 = arith.negf %320 : vector<8x1xf32>
    %322 = math.exp %321 : vector<8x1xf32>
    %cst_69 = arith.constant 1.000000e+00 : f32
    %323 = vector.broadcast %cst_69 : f32 to vector<8x1xf32>
    %324 = arith.addf %323, %322 : vector<8x1xf32>
    %325 = arith.divf %323, %324 : vector<8x1xf32>
    %c0_70 = arith.constant 0 : index
    %c3_71 = arith.constant 3 : index
    %326 = vector.load %arg10[%c0_70, %c3_71] : memref<8x128xf32, #tpu.memory_space<vmem>>, vector<8x1xf32>
    tpu.vector_store %arg10[%c0_70, %c3_71], %325 {strides = array<i32>} : memref<8x128xf32, #tpu.memory_space<vmem>>, vector<8x1xf32>,
    %327 = tpu.concatenate %314, %272 in 1 : vector<8x32xf32>, vector<8x32xf32> -> vector<8x64xf32>
    %cst_72 = arith.constant dense<0.000000e+00> : vector<8x128xf32>
    %328 = tpu.matmul %327, %2, %cst_72 {dimension_numbers = #tpu.dot_dimension_numbers<[1], [0], [0], [1], [0, 0, 1, 1], [], []>} : vector<8x64xf32>, vector<64x128xf32>, vector<8x128xf32> -> vector<8x128xf32>
    %329 = vector.broadcast %3 : vector<1x128xf32> to vector<8x128xf32>
    %330 = arith.addf %328, %329 : vector<8x128xf32>
    %331 = vector.extract_strided_slice %330 {offsets = [0, 0], sizes = [8, 32], strides = [1, 1]} : vector<8x128xf32> to vector<8x32xf32>
    %332 = arith.negf %331 : vector<8x32xf32>
    %333 = math.exp %332 : vector<8x32xf32>
    %cst_73 = arith.constant 1.000000e+00 : f32
    %334 = vector.broadcast %cst_73 : f32 to vector<8x32xf32>
    %335 = arith.addf %334, %333 : vector<8x32xf32>
    %336 = arith.divf %334, %335 : vector<8x32xf32>
    %337 = vector.extract_strided_slice %330 {offsets = [0, 32], sizes = [8, 32], strides = [1, 1]} : vector<8x128xf32> to vector<8x32xf32>
    %338 = arith.negf %337 : vector<8x32xf32>
    %339 = math.exp %338 : vector<8x32xf32>
    %cst_74 = arith.constant 1.000000e+00 : f32
    %340 = vector.broadcast %cst_74 : f32 to vector<8x32xf32>
    %341 = arith.addf %340, %339 : vector<8x32xf32>
    %342 = arith.divf %340, %341 : vector<8x32xf32>
    %343 = vector.extract_strided_slice %330 {offsets = [0, 64], sizes = [8, 32], strides = [1, 1]} : vector<8x128xf32> to vector<8x32xf32>
    %344 = math.tanh %343 : vector<8x32xf32>
    %345 = vector.extract_strided_slice %330 {offsets = [0, 96], sizes = [8, 32], strides = [1, 1]} : vector<8x128xf32> to vector<8x32xf32>
    %346 = arith.negf %345 : vector<8x32xf32>
    %347 = math.exp %346 : vector<8x32xf32>
    %cst_75 = arith.constant 1.000000e+00 : f32
    %348 = vector.broadcast %cst_75 : f32 to vector<8x32xf32>
    %349 = arith.addf %348, %347 : vector<8x32xf32>
    %350 = arith.divf %348, %349 : vector<8x32xf32>
    %351 = arith.mulf %342, %277 : vector<8x32xf32>
    %352 = arith.mulf %336, %344 : vector<8x32xf32>
    %353 = arith.addf %351, %352 : vector<8x32xf32>
    %354 = math.tanh %353 : vector<8x32xf32>
    %355 = arith.mulf %350, %354 : vector<8x32xf32>
    %cst_76 = arith.constant 1.000000e+00 : f32
    %356 = vector.broadcast %cst_76 : f32 to vector<8x1xf32>
    %357 = arith.subf %356, %325 : vector<8x1xf32>
    %358 = vector.broadcast %325 : vector<8x1xf32> to vector<8x32xf32>
    %359 = arith.mulf %358, %355 : vector<8x32xf32>
    %360 = vector.broadcast %357 : vector<8x1xf32> to vector<8x32xf32>
    %361 = arith.mulf %360, %272 : vector<8x32xf32>
    %362 = arith.addf %359, %361 : vector<8x32xf32>
    %363 = vector.broadcast %325 : vector<8x1xf32> to vector<8x32xf32>
    %364 = arith.mulf %363, %353 : vector<8x32xf32>
    %365 = vector.broadcast %357 : vector<8x1xf32> to vector<8x32xf32>
    %366 = arith.mulf %365, %277 : vector<8x32xf32>
    %367 = arith.addf %364, %366 : vector<8x32xf32>
    %c4 = arith.constant 4 : index
    %c0_77 = arith.constant 0 : index
    %c0_78 = arith.constant 0 : index
    %368 = vector.load %arg0[%c4, %c0_77, %c0_78] : memref<8x8x32xf32, #tpu.memory_space<vmem>>, vector<1x8x32xf32>
    %369 = vector.shape_cast %368 : vector<1x8x32xf32> to vector<8x32xf32>
    %cst_79 = arith.constant 1.000000e+00 : f32
    %370 = vector.broadcast %cst_79 : f32 to vector<8x1xf32>
    %371 = arith.subf %370, %325 : vector<8x1xf32>
    %372 = vector.broadcast %371 : vector<8x1xf32> to vector<8x32xf32>
    %373 = arith.mulf %314, %372 : vector<8x32xf32>
    %374 = vector.broadcast %371 : vector<8x1xf32> to vector<8x32xf32>
    %375 = arith.mulf %312, %374 : vector<8x32xf32>
    %376 = tpu.concatenate %369, %373 in 1 : vector<8x32xf32>, vector<8x32xf32> -> vector<8x64xf32>
    %cst_80 = arith.constant dense<0.000000e+00> : vector<8x128xf32>
    %377 = tpu.matmul %376, %0, %cst_80 {dimension_numbers = #tpu.dot_dimension_numbers<[1], [0], [0], [1], [0, 0, 1, 1], [], []>} : vector<8x64xf32>, vector<64x128xf32>, vector<8x128xf32> -> vector<8x128xf32>
    %378 = vector.broadcast %1 : vector<1x128xf32> to vector<8x128xf32>
    %379 = arith.addf %377, %378 : vector<8x128xf32>
    %380 = vector.extract_strided_slice %379 {offsets = [0, 0], sizes = [8, 32], strides = [1, 1]} : vector<8x128xf32> to vector<8x32xf32>
    %381 = arith.negf %380 : vector<8x32xf32>
    %382 = math.exp %381 : vector<8x32xf32>
    %cst_81 = arith.constant 1.000000e+00 : f32
    %383 = vector.broadcast %cst_81 : f32 to vector<8x32xf32>
    %384 = arith.addf %383, %382 : vector<8x32xf32>
    %385 = arith.divf %383, %384 : vector<8x32xf32>
    %386 = vector.extract_strided_slice %379 {offsets = [0, 32], sizes = [8, 32], strides = [1, 1]} : vector<8x128xf32> to vector<8x32xf32>
    %387 = arith.negf %386 : vector<8x32xf32>
    %388 = math.exp %387 : vector<8x32xf32>
    %cst_82 = arith.constant 1.000000e+00 : f32
    %389 = vector.broadcast %cst_82 : f32 to vector<8x32xf32>
    %390 = arith.addf %389, %388 : vector<8x32xf32>
    %391 = arith.divf %389, %390 : vector<8x32xf32>
    %392 = vector.extract_strided_slice %379 {offsets = [0, 64], sizes = [8, 32], strides = [1, 1]} : vector<8x128xf32> to vector<8x32xf32>
    %393 = math.tanh %392 : vector<8x32xf32>
    %394 = vector.extract_strided_slice %379 {offsets = [0, 96], sizes = [8, 32], strides = [1, 1]} : vector<8x128xf32> to vector<8x32xf32>
    %395 = arith.negf %394 : vector<8x32xf32>
    %396 = math.exp %395 : vector<8x32xf32>
    %cst_83 = arith.constant 1.000000e+00 : f32
    %397 = vector.broadcast %cst_83 : f32 to vector<8x32xf32>
    %398 = arith.addf %397, %396 : vector<8x32xf32>
    %399 = arith.divf %397, %398 : vector<8x32xf32>
    %400 = arith.mulf %391, %375 : vector<8x32xf32>
    %401 = arith.mulf %385, %393 : vector<8x32xf32>
    %402 = arith.addf %400, %401 : vector<8x32xf32>
    %403 = math.tanh %402 : vector<8x32xf32>
    %404 = arith.mulf %399, %403 : vector<8x32xf32>
    %405 = vector.broadcast %4 : vector<1x32xf32> to vector<8x32xf32>
    %406 = arith.mulf %404, %405 : vector<8x32xf32>
    %cst_84 = arith.constant dense<0.000000e+00> : vector<8xf32>
    %407 = vector.multi_reduction <add>, %406, %cst_84 [1] : vector<8x32xf32> to vector<8xf32>
    %408 = vector.shape_cast %407 : vector<8xf32> to vector<8x1xf32>
    %409 = vector.broadcast %5 : vector<1x1xf32> to vector<8x1xf32>
    %410 = arith.addf %408, %409 : vector<8x1xf32>
    %411 = arith.negf %410 : vector<8x1xf32>
    %412 = math.exp %411 : vector<8x1xf32>
    %cst_85 = arith.constant 1.000000e+00 : f32
    %413 = vector.broadcast %cst_85 : f32 to vector<8x1xf32>
    %414 = arith.addf %413, %412 : vector<8x1xf32>
    %415 = arith.divf %413, %414 : vector<8x1xf32>
    %c0_86 = arith.constant 0 : index
    %c4_87 = arith.constant 4 : index
    %416 = vector.load %arg10[%c0_86, %c4_87] : memref<8x128xf32, #tpu.memory_space<vmem>>, vector<8x1xf32>
    tpu.vector_store %arg10[%c0_86, %c4_87], %415 {strides = array<i32>} : memref<8x128xf32, #tpu.memory_space<vmem>>, vector<8x1xf32>,
    %417 = tpu.concatenate %404, %362 in 1 : vector<8x32xf32>, vector<8x32xf32> -> vector<8x64xf32>
    %cst_88 = arith.constant dense<0.000000e+00> : vector<8x128xf32>
    %418 = tpu.matmul %417, %2, %cst_88 {dimension_numbers = #tpu.dot_dimension_numbers<[1], [0], [0], [1], [0, 0, 1, 1], [], []>} : vector<8x64xf32>, vector<64x128xf32>, vector<8x128xf32> -> vector<8x128xf32>
    %419 = vector.broadcast %3 : vector<1x128xf32> to vector<8x128xf32>
    %420 = arith.addf %418, %419 : vector<8x128xf32>
    %421 = vector.extract_strided_slice %420 {offsets = [0, 0], sizes = [8, 32], strides = [1, 1]} : vector<8x128xf32> to vector<8x32xf32>
    %422 = arith.negf %421 : vector<8x32xf32>
    %423 = math.exp %422 : vector<8x32xf32>
    %cst_89 = arith.constant 1.000000e+00 : f32
    %424 = vector.broadcast %cst_89 : f32 to vector<8x32xf32>
    %425 = arith.addf %424, %423 : vector<8x32xf32>
    %426 = arith.divf %424, %425 : vector<8x32xf32>
    %427 = vector.extract_strided_slice %420 {offsets = [0, 32], sizes = [8, 32], strides = [1, 1]} : vector<8x128xf32> to vector<8x32xf32>
    %428 = arith.negf %427 : vector<8x32xf32>
    %429 = math.exp %428 : vector<8x32xf32>
    %cst_90 = arith.constant 1.000000e+00 : f32
    %430 = vector.broadcast %cst_90 : f32 to vector<8x32xf32>
    %431 = arith.addf %430, %429 : vector<8x32xf32>
    %432 = arith.divf %430, %431 : vector<8x32xf32>
    %433 = vector.extract_strided_slice %420 {offsets = [0, 64], sizes = [8, 32], strides = [1, 1]} : vector<8x128xf32> to vector<8x32xf32>
    %434 = math.tanh %433 : vector<8x32xf32>
    %435 = vector.extract_strided_slice %420 {offsets = [0, 96], sizes = [8, 32], strides = [1, 1]} : vector<8x128xf32> to vector<8x32xf32>
    %436 = arith.negf %435 : vector<8x32xf32>
    %437 = math.exp %436 : vector<8x32xf32>
    %cst_91 = arith.constant 1.000000e+00 : f32
    %438 = vector.broadcast %cst_91 : f32 to vector<8x32xf32>
    %439 = arith.addf %438, %437 : vector<8x32xf32>
    %440 = arith.divf %438, %439 : vector<8x32xf32>
    %441 = arith.mulf %432, %367 : vector<8x32xf32>
    %442 = arith.mulf %426, %434 : vector<8x32xf32>
    %443 = arith.addf %441, %442 : vector<8x32xf32>
    %444 = math.tanh %443 : vector<8x32xf32>
    %445 = arith.mulf %440, %444 : vector<8x32xf32>
    %cst_92 = arith.constant 1.000000e+00 : f32
    %446 = vector.broadcast %cst_92 : f32 to vector<8x1xf32>
    %447 = arith.subf %446, %415 : vector<8x1xf32>
    %448 = vector.broadcast %415 : vector<8x1xf32> to vector<8x32xf32>
    %449 = arith.mulf %448, %445 : vector<8x32xf32>
    %450 = vector.broadcast %447 : vector<8x1xf32> to vector<8x32xf32>
    %451 = arith.mulf %450, %362 : vector<8x32xf32>
    %452 = arith.addf %449, %451 : vector<8x32xf32>
    %453 = vector.broadcast %415 : vector<8x1xf32> to vector<8x32xf32>
    %454 = arith.mulf %453, %443 : vector<8x32xf32>
    %455 = vector.broadcast %447 : vector<8x1xf32> to vector<8x32xf32>
    %456 = arith.mulf %455, %367 : vector<8x32xf32>
    %457 = arith.addf %454, %456 : vector<8x32xf32>
    %c5 = arith.constant 5 : index
    %c0_93 = arith.constant 0 : index
    %c0_94 = arith.constant 0 : index
    %458 = vector.load %arg0[%c5, %c0_93, %c0_94] : memref<8x8x32xf32, #tpu.memory_space<vmem>>, vector<1x8x32xf32>
    %459 = vector.shape_cast %458 : vector<1x8x32xf32> to vector<8x32xf32>
    %cst_95 = arith.constant 1.000000e+00 : f32
    %460 = vector.broadcast %cst_95 : f32 to vector<8x1xf32>
    %461 = arith.subf %460, %415 : vector<8x1xf32>
    %462 = vector.broadcast %461 : vector<8x1xf32> to vector<8x32xf32>
    %463 = arith.mulf %404, %462 : vector<8x32xf32>
    %464 = vector.broadcast %461 : vector<8x1xf32> to vector<8x32xf32>
    %465 = arith.mulf %402, %464 : vector<8x32xf32>
    %466 = tpu.concatenate %459, %463 in 1 : vector<8x32xf32>, vector<8x32xf32> -> vector<8x64xf32>
    %cst_96 = arith.constant dense<0.000000e+00> : vector<8x128xf32>
    %467 = tpu.matmul %466, %0, %cst_96 {dimension_numbers = #tpu.dot_dimension_numbers<[1], [0], [0], [1], [0, 0, 1, 1], [], []>} : vector<8x64xf32>, vector<64x128xf32>, vector<8x128xf32> -> vector<8x128xf32>
    %468 = vector.broadcast %1 : vector<1x128xf32> to vector<8x128xf32>
    %469 = arith.addf %467, %468 : vector<8x128xf32>
    %470 = vector.extract_strided_slice %469 {offsets = [0, 0], sizes = [8, 32], strides = [1, 1]} : vector<8x128xf32> to vector<8x32xf32>
    %471 = arith.negf %470 : vector<8x32xf32>
    %472 = math.exp %471 : vector<8x32xf32>
    %cst_97 = arith.constant 1.000000e+00 : f32
    %473 = vector.broadcast %cst_97 : f32 to vector<8x32xf32>
    %474 = arith.addf %473, %472 : vector<8x32xf32>
    %475 = arith.divf %473, %474 : vector<8x32xf32>
    %476 = vector.extract_strided_slice %469 {offsets = [0, 32], sizes = [8, 32], strides = [1, 1]} : vector<8x128xf32> to vector<8x32xf32>
    %477 = arith.negf %476 : vector<8x32xf32>
    %478 = math.exp %477 : vector<8x32xf32>
    %cst_98 = arith.constant 1.000000e+00 : f32
    %479 = vector.broadcast %cst_98 : f32 to vector<8x32xf32>
    %480 = arith.addf %479, %478 : vector<8x32xf32>
    %481 = arith.divf %479, %480 : vector<8x32xf32>
    %482 = vector.extract_strided_slice %469 {offsets = [0, 64], sizes = [8, 32], strides = [1, 1]} : vector<8x128xf32> to vector<8x32xf32>
    %483 = math.tanh %482 : vector<8x32xf32>
    %484 = vector.extract_strided_slice %469 {offsets = [0, 96], sizes = [8, 32], strides = [1, 1]} : vector<8x128xf32> to vector<8x32xf32>
    %485 = arith.negf %484 : vector<8x32xf32>
    %486 = math.exp %485 : vector<8x32xf32>
    %cst_99 = arith.constant 1.000000e+00 : f32
    %487 = vector.broadcast %cst_99 : f32 to vector<8x32xf32>
    %488 = arith.addf %487, %486 : vector<8x32xf32>
    %489 = arith.divf %487, %488 : vector<8x32xf32>
    %490 = arith.mulf %481, %465 : vector<8x32xf32>
    %491 = arith.mulf %475, %483 : vector<8x32xf32>
    %492 = arith.addf %490, %491 : vector<8x32xf32>
    %493 = math.tanh %492 : vector<8x32xf32>
    %494 = arith.mulf %489, %493 : vector<8x32xf32>
    %495 = vector.broadcast %4 : vector<1x32xf32> to vector<8x32xf32>
    %496 = arith.mulf %494, %495 : vector<8x32xf32>
    %cst_100 = arith.constant dense<0.000000e+00> : vector<8xf32>
    %497 = vector.multi_reduction <add>, %496, %cst_100 [1] : vector<8x32xf32> to vector<8xf32>
    %498 = vector.shape_cast %497 : vector<8xf32> to vector<8x1xf32>
    %499 = vector.broadcast %5 : vector<1x1xf32> to vector<8x1xf32>
    %500 = arith.addf %498, %499 : vector<8x1xf32>
    %501 = arith.negf %500 : vector<8x1xf32>
    %502 = math.exp %501 : vector<8x1xf32>
    %cst_101 = arith.constant 1.000000e+00 : f32
    %503 = vector.broadcast %cst_101 : f32 to vector<8x1xf32>
    %504 = arith.addf %503, %502 : vector<8x1xf32>
    %505 = arith.divf %503, %504 : vector<8x1xf32>
    %c0_102 = arith.constant 0 : index
    %c5_103 = arith.constant 5 : index
    %506 = vector.load %arg10[%c0_102, %c5_103] : memref<8x128xf32, #tpu.memory_space<vmem>>, vector<8x1xf32>
    tpu.vector_store %arg10[%c0_102, %c5_103], %505 {strides = array<i32>} : memref<8x128xf32, #tpu.memory_space<vmem>>, vector<8x1xf32>,
    %507 = tpu.concatenate %494, %452 in 1 : vector<8x32xf32>, vector<8x32xf32> -> vector<8x64xf32>
    %cst_104 = arith.constant dense<0.000000e+00> : vector<8x128xf32>
    %508 = tpu.matmul %507, %2, %cst_104 {dimension_numbers = #tpu.dot_dimension_numbers<[1], [0], [0], [1], [0, 0, 1, 1], [], []>} : vector<8x64xf32>, vector<64x128xf32>, vector<8x128xf32> -> vector<8x128xf32>
    %509 = vector.broadcast %3 : vector<1x128xf32> to vector<8x128xf32>
    %510 = arith.addf %508, %509 : vector<8x128xf32>
    %511 = vector.extract_strided_slice %510 {offsets = [0, 0], sizes = [8, 32], strides = [1, 1]} : vector<8x128xf32> to vector<8x32xf32>
    %512 = arith.negf %511 : vector<8x32xf32>
    %513 = math.exp %512 : vector<8x32xf32>
    %cst_105 = arith.constant 1.000000e+00 : f32
    %514 = vector.broadcast %cst_105 : f32 to vector<8x32xf32>
    %515 = arith.addf %514, %513 : vector<8x32xf32>
    %516 = arith.divf %514, %515 : vector<8x32xf32>
    %517 = vector.extract_strided_slice %510 {offsets = [0, 32], sizes = [8, 32], strides = [1, 1]} : vector<8x128xf32> to vector<8x32xf32>
    %518 = arith.negf %517 : vector<8x32xf32>
    %519 = math.exp %518 : vector<8x32xf32>
    %cst_106 = arith.constant 1.000000e+00 : f32
    %520 = vector.broadcast %cst_106 : f32 to vector<8x32xf32>
    %521 = arith.addf %520, %519 : vector<8x32xf32>
    %522 = arith.divf %520, %521 : vector<8x32xf32>
    %523 = vector.extract_strided_slice %510 {offsets = [0, 64], sizes = [8, 32], strides = [1, 1]} : vector<8x128xf32> to vector<8x32xf32>
    %524 = math.tanh %523 : vector<8x32xf32>
    %525 = vector.extract_strided_slice %510 {offsets = [0, 96], sizes = [8, 32], strides = [1, 1]} : vector<8x128xf32> to vector<8x32xf32>
    %526 = arith.negf %525 : vector<8x32xf32>
    %527 = math.exp %526 : vector<8x32xf32>
    %cst_107 = arith.constant 1.000000e+00 : f32
    %528 = vector.broadcast %cst_107 : f32 to vector<8x32xf32>
    %529 = arith.addf %528, %527 : vector<8x32xf32>
    %530 = arith.divf %528, %529 : vector<8x32xf32>
    %531 = arith.mulf %522, %457 : vector<8x32xf32>
    %532 = arith.mulf %516, %524 : vector<8x32xf32>
    %533 = arith.addf %531, %532 : vector<8x32xf32>
    %534 = math.tanh %533 : vector<8x32xf32>
    %535 = arith.mulf %530, %534 : vector<8x32xf32>
    %cst_108 = arith.constant 1.000000e+00 : f32
    %536 = vector.broadcast %cst_108 : f32 to vector<8x1xf32>
    %537 = arith.subf %536, %505 : vector<8x1xf32>
    %538 = vector.broadcast %505 : vector<8x1xf32> to vector<8x32xf32>
    %539 = arith.mulf %538, %535 : vector<8x32xf32>
    %540 = vector.broadcast %537 : vector<8x1xf32> to vector<8x32xf32>
    %541 = arith.mulf %540, %452 : vector<8x32xf32>
    %542 = arith.addf %539, %541 : vector<8x32xf32>
    %543 = vector.broadcast %505 : vector<8x1xf32> to vector<8x32xf32>
    %544 = arith.mulf %543, %533 : vector<8x32xf32>
    %545 = vector.broadcast %537 : vector<8x1xf32> to vector<8x32xf32>
    %546 = arith.mulf %545, %457 : vector<8x32xf32>
    %547 = arith.addf %544, %546 : vector<8x32xf32>
    %c6 = arith.constant 6 : index
    %c0_109 = arith.constant 0 : index
    %c0_110 = arith.constant 0 : index
    %548 = vector.load %arg0[%c6, %c0_109, %c0_110] : memref<8x8x32xf32, #tpu.memory_space<vmem>>, vector<1x8x32xf32>
    %549 = vector.shape_cast %548 : vector<1x8x32xf32> to vector<8x32xf32>
    %cst_111 = arith.constant 1.000000e+00 : f32
    %550 = vector.broadcast %cst_111 : f32 to vector<8x1xf32>
    %551 = arith.subf %550, %505 : vector<8x1xf32>
    %552 = vector.broadcast %551 : vector<8x1xf32> to vector<8x32xf32>
    %553 = arith.mulf %494, %552 : vector<8x32xf32>
    %554 = vector.broadcast %551 : vector<8x1xf32> to vector<8x32xf32>
    %555 = arith.mulf %492, %554 : vector<8x32xf32>
    %556 = tpu.concatenate %549, %553 in 1 : vector<8x32xf32>, vector<8x32xf32> -> vector<8x64xf32>
    %cst_112 = arith.constant dense<0.000000e+00> : vector<8x128xf32>
    %557 = tpu.matmul %556, %0, %cst_112 {dimension_numbers = #tpu.dot_dimension_numbers<[1], [0], [0], [1], [0, 0, 1, 1], [], []>} : vector<8x64xf32>, vector<64x128xf32>, vector<8x128xf32> -> vector<8x128xf32>
    %558 = vector.broadcast %1 : vector<1x128xf32> to vector<8x128xf32>
    %559 = arith.addf %557, %558 : vector<8x128xf32>
    %560 = vector.extract_strided_slice %559 {offsets = [0, 0], sizes = [8, 32], strides = [1, 1]} : vector<8x128xf32> to vector<8x32xf32>
    %561 = arith.negf %560 : vector<8x32xf32>
    %562 = math.exp %561 : vector<8x32xf32>
    %cst_113 = arith.constant 1.000000e+00 : f32
    %563 = vector.broadcast %cst_113 : f32 to vector<8x32xf32>
    %564 = arith.addf %563, %562 : vector<8x32xf32>
    %565 = arith.divf %563, %564 : vector<8x32xf32>
    %566 = vector.extract_strided_slice %559 {offsets = [0, 32], sizes = [8, 32], strides = [1, 1]} : vector<8x128xf32> to vector<8x32xf32>
    %567 = arith.negf %566 : vector<8x32xf32>
    %568 = math.exp %567 : vector<8x32xf32>
    %cst_114 = arith.constant 1.000000e+00 : f32
    %569 = vector.broadcast %cst_114 : f32 to vector<8x32xf32>
    %570 = arith.addf %569, %568 : vector<8x32xf32>
    %571 = arith.divf %569, %570 : vector<8x32xf32>
    %572 = vector.extract_strided_slice %559 {offsets = [0, 64], sizes = [8, 32], strides = [1, 1]} : vector<8x128xf32> to vector<8x32xf32>
    %573 = math.tanh %572 : vector<8x32xf32>
    %574 = vector.extract_strided_slice %559 {offsets = [0, 96], sizes = [8, 32], strides = [1, 1]} : vector<8x128xf32> to vector<8x32xf32>
    %575 = arith.negf %574 : vector<8x32xf32>
    %576 = math.exp %575 : vector<8x32xf32>
    %cst_115 = arith.constant 1.000000e+00 : f32
    %577 = vector.broadcast %cst_115 : f32 to vector<8x32xf32>
    %578 = arith.addf %577, %576 : vector<8x32xf32>
    %579 = arith.divf %577, %578 : vector<8x32xf32>
    %580 = arith.mulf %571, %555 : vector<8x32xf32>
    %581 = arith.mulf %565, %573 : vector<8x32xf32>
    %582 = arith.addf %580, %581 : vector<8x32xf32>
    %583 = math.tanh %582 : vector<8x32xf32>
    %584 = arith.mulf %579, %583 : vector<8x32xf32>
    %585 = vector.broadcast %4 : vector<1x32xf32> to vector<8x32xf32>
    %586 = arith.mulf %584, %585 : vector<8x32xf32>
    %cst_116 = arith.constant dense<0.000000e+00> : vector<8xf32>
    %587 = vector.multi_reduction <add>, %586, %cst_116 [1] : vector<8x32xf32> to vector<8xf32>
    %588 = vector.shape_cast %587 : vector<8xf32> to vector<8x1xf32>
    %589 = vector.broadcast %5 : vector<1x1xf32> to vector<8x1xf32>
    %590 = arith.addf %588, %589 : vector<8x1xf32>
    %591 = arith.negf %590 : vector<8x1xf32>
    %592 = math.exp %591 : vector<8x1xf32>
    %cst_117 = arith.constant 1.000000e+00 : f32
    %593 = vector.broadcast %cst_117 : f32 to vector<8x1xf32>
    %594 = arith.addf %593, %592 : vector<8x1xf32>
    %595 = arith.divf %593, %594 : vector<8x1xf32>
    %c0_118 = arith.constant 0 : index
    %c6_119 = arith.constant 6 : index
    %596 = vector.load %arg10[%c0_118, %c6_119] : memref<8x128xf32, #tpu.memory_space<vmem>>, vector<8x1xf32>
    tpu.vector_store %arg10[%c0_118, %c6_119], %595 {strides = array<i32>} : memref<8x128xf32, #tpu.memory_space<vmem>>, vector<8x1xf32>,
    %597 = tpu.concatenate %584, %542 in 1 : vector<8x32xf32>, vector<8x32xf32> -> vector<8x64xf32>
    %cst_120 = arith.constant dense<0.000000e+00> : vector<8x128xf32>
    %598 = tpu.matmul %597, %2, %cst_120 {dimension_numbers = #tpu.dot_dimension_numbers<[1], [0], [0], [1], [0, 0, 1, 1], [], []>} : vector<8x64xf32>, vector<64x128xf32>, vector<8x128xf32> -> vector<8x128xf32>
    %599 = vector.broadcast %3 : vector<1x128xf32> to vector<8x128xf32>
    %600 = arith.addf %598, %599 : vector<8x128xf32>
    %601 = vector.extract_strided_slice %600 {offsets = [0, 0], sizes = [8, 32], strides = [1, 1]} : vector<8x128xf32> to vector<8x32xf32>
    %602 = arith.negf %601 : vector<8x32xf32>
    %603 = math.exp %602 : vector<8x32xf32>
    %cst_121 = arith.constant 1.000000e+00 : f32
    %604 = vector.broadcast %cst_121 : f32 to vector<8x32xf32>
    %605 = arith.addf %604, %603 : vector<8x32xf32>
    %606 = arith.divf %604, %605 : vector<8x32xf32>
    %607 = vector.extract_strided_slice %600 {offsets = [0, 32], sizes = [8, 32], strides = [1, 1]} : vector<8x128xf32> to vector<8x32xf32>
    %608 = arith.negf %607 : vector<8x32xf32>
    %609 = math.exp %608 : vector<8x32xf32>
    %cst_122 = arith.constant 1.000000e+00 : f32
    %610 = vector.broadcast %cst_122 : f32 to vector<8x32xf32>
    %611 = arith.addf %610, %609 : vector<8x32xf32>
    %612 = arith.divf %610, %611 : vector<8x32xf32>
    %613 = vector.extract_strided_slice %600 {offsets = [0, 64], sizes = [8, 32], strides = [1, 1]} : vector<8x128xf32> to vector<8x32xf32>
    %614 = math.tanh %613 : vector<8x32xf32>
    %615 = vector.extract_strided_slice %600 {offsets = [0, 96], sizes = [8, 32], strides = [1, 1]} : vector<8x128xf32> to vector<8x32xf32>
    %616 = arith.negf %615 : vector<8x32xf32>
    %617 = math.exp %616 : vector<8x32xf32>
    %cst_123 = arith.constant 1.000000e+00 : f32
    %618 = vector.broadcast %cst_123 : f32 to vector<8x32xf32>
    %619 = arith.addf %618, %617 : vector<8x32xf32>
    %620 = arith.divf %618, %619 : vector<8x32xf32>
    %621 = arith.mulf %612, %547 : vector<8x32xf32>
    %622 = arith.mulf %606, %614 : vector<8x32xf32>
    %623 = arith.addf %621, %622 : vector<8x32xf32>
    %624 = math.tanh %623 : vector<8x32xf32>
    %625 = arith.mulf %620, %624 : vector<8x32xf32>
    %cst_124 = arith.constant 1.000000e+00 : f32
    %626 = vector.broadcast %cst_124 : f32 to vector<8x1xf32>
    %627 = arith.subf %626, %595 : vector<8x1xf32>
    %628 = vector.broadcast %595 : vector<8x1xf32> to vector<8x32xf32>
    %629 = arith.mulf %628, %625 : vector<8x32xf32>
    %630 = vector.broadcast %627 : vector<8x1xf32> to vector<8x32xf32>
    %631 = arith.mulf %630, %542 : vector<8x32xf32>
    %632 = arith.addf %629, %631 : vector<8x32xf32>
    %633 = vector.broadcast %595 : vector<8x1xf32> to vector<8x32xf32>
    %634 = arith.mulf %633, %623 : vector<8x32xf32>
    %635 = vector.broadcast %627 : vector<8x1xf32> to vector<8x32xf32>
    %636 = arith.mulf %635, %547 : vector<8x32xf32>
    %637 = arith.addf %634, %636 : vector<8x32xf32>
    %c7 = arith.constant 7 : index
    %c0_125 = arith.constant 0 : index
    %c0_126 = arith.constant 0 : index
    %638 = vector.load %arg0[%c7, %c0_125, %c0_126] : memref<8x8x32xf32, #tpu.memory_space<vmem>>, vector<1x8x32xf32>
    %639 = vector.shape_cast %638 : vector<1x8x32xf32> to vector<8x32xf32>
    %cst_127 = arith.constant 1.000000e+00 : f32
    %640 = vector.broadcast %cst_127 : f32 to vector<8x1xf32>
    %641 = arith.subf %640, %595 : vector<8x1xf32>
    %642 = vector.broadcast %641 : vector<8x1xf32> to vector<8x32xf32>
    %643 = arith.mulf %584, %642 : vector<8x32xf32>
    %644 = vector.broadcast %641 : vector<8x1xf32> to vector<8x32xf32>
    %645 = arith.mulf %582, %644 : vector<8x32xf32>
    %646 = tpu.concatenate %639, %643 in 1 : vector<8x32xf32>, vector<8x32xf32> -> vector<8x64xf32>
    %cst_128 = arith.constant dense<0.000000e+00> : vector<8x128xf32>
    %647 = tpu.matmul %646, %0, %cst_128 {dimension_numbers = #tpu.dot_dimension_numbers<[1], [0], [0], [1], [0, 0, 1, 1], [], []>} : vector<8x64xf32>, vector<64x128xf32>, vector<8x128xf32> -> vector<8x128xf32>
    %648 = vector.broadcast %1 : vector<1x128xf32> to vector<8x128xf32>
    %649 = arith.addf %647, %648 : vector<8x128xf32>
    %650 = vector.extract_strided_slice %649 {offsets = [0, 0], sizes = [8, 32], strides = [1, 1]} : vector<8x128xf32> to vector<8x32xf32>
    %651 = arith.negf %650 : vector<8x32xf32>
    %652 = math.exp %651 : vector<8x32xf32>
    %cst_129 = arith.constant 1.000000e+00 : f32
    %653 = vector.broadcast %cst_129 : f32 to vector<8x32xf32>
    %654 = arith.addf %653, %652 : vector<8x32xf32>
    %655 = arith.divf %653, %654 : vector<8x32xf32>
    %656 = vector.extract_strided_slice %649 {offsets = [0, 32], sizes = [8, 32], strides = [1, 1]} : vector<8x128xf32> to vector<8x32xf32>
    %657 = arith.negf %656 : vector<8x32xf32>
    %658 = math.exp %657 : vector<8x32xf32>
    %cst_130 = arith.constant 1.000000e+00 : f32
    %659 = vector.broadcast %cst_130 : f32 to vector<8x32xf32>
    %660 = arith.addf %659, %658 : vector<8x32xf32>
    %661 = arith.divf %659, %660 : vector<8x32xf32>
    %662 = vector.extract_strided_slice %649 {offsets = [0, 64], sizes = [8, 32], strides = [1, 1]} : vector<8x128xf32> to vector<8x32xf32>
    %663 = math.tanh %662 : vector<8x32xf32>
    %664 = vector.extract_strided_slice %649 {offsets = [0, 96], sizes = [8, 32], strides = [1, 1]} : vector<8x128xf32> to vector<8x32xf32>
    %665 = arith.negf %664 : vector<8x32xf32>
    %666 = math.exp %665 : vector<8x32xf32>
    %cst_131 = arith.constant 1.000000e+00 : f32
    %667 = vector.broadcast %cst_131 : f32 to vector<8x32xf32>
    %668 = arith.addf %667, %666 : vector<8x32xf32>
    %669 = arith.divf %667, %668 : vector<8x32xf32>
    %670 = arith.mulf %661, %645 : vector<8x32xf32>
    %671 = arith.mulf %655, %663 : vector<8x32xf32>
    %672 = arith.addf %670, %671 : vector<8x32xf32>
    %673 = math.tanh %672 : vector<8x32xf32>
    %674 = arith.mulf %669, %673 : vector<8x32xf32>
    %675 = vector.broadcast %4 : vector<1x32xf32> to vector<8x32xf32>
    %676 = arith.mulf %674, %675 : vector<8x32xf32>
    %cst_132 = arith.constant dense<0.000000e+00> : vector<8xf32>
    %677 = vector.multi_reduction <add>, %676, %cst_132 [1] : vector<8x32xf32> to vector<8xf32>
    %678 = vector.shape_cast %677 : vector<8xf32> to vector<8x1xf32>
    %679 = vector.broadcast %5 : vector<1x1xf32> to vector<8x1xf32>
    %680 = arith.addf %678, %679 : vector<8x1xf32>
    %681 = arith.negf %680 : vector<8x1xf32>
    %682 = math.exp %681 : vector<8x1xf32>
    %cst_133 = arith.constant 1.000000e+00 : f32
    %683 = vector.broadcast %cst_133 : f32 to vector<8x1xf32>
    %684 = arith.addf %683, %682 : vector<8x1xf32>
    %685 = arith.divf %683, %684 : vector<8x1xf32>
    %c0_134 = arith.constant 0 : index
    %c7_135 = arith.constant 7 : index
    %686 = vector.load %arg10[%c0_134, %c7_135] : memref<8x128xf32, #tpu.memory_space<vmem>>, vector<8x1xf32>
    tpu.vector_store %arg10[%c0_134, %c7_135], %685 {strides = array<i32>} : memref<8x128xf32, #tpu.memory_space<vmem>>, vector<8x1xf32>,
    %687 = tpu.concatenate %674, %632 in 1 : vector<8x32xf32>, vector<8x32xf32> -> vector<8x64xf32>
    %cst_136 = arith.constant dense<0.000000e+00> : vector<8x128xf32>
    %688 = tpu.matmul %687, %2, %cst_136 {dimension_numbers = #tpu.dot_dimension_numbers<[1], [0], [0], [1], [0, 0, 1, 1], [], []>} : vector<8x64xf32>, vector<64x128xf32>, vector<8x128xf32> -> vector<8x128xf32>
    %689 = vector.broadcast %3 : vector<1x128xf32> to vector<8x128xf32>
    %690 = arith.addf %688, %689 : vector<8x128xf32>
    %691 = vector.extract_strided_slice %690 {offsets = [0, 0], sizes = [8, 32], strides = [1, 1]} : vector<8x128xf32> to vector<8x32xf32>
    %692 = arith.negf %691 : vector<8x32xf32>
    %693 = math.exp %692 : vector<8x32xf32>
    %cst_137 = arith.constant 1.000000e+00 : f32
    %694 = vector.broadcast %cst_137 : f32 to vector<8x32xf32>
    %695 = arith.addf %694, %693 : vector<8x32xf32>
    %696 = arith.divf %694, %695 : vector<8x32xf32>
    %697 = vector.extract_strided_slice %690 {offsets = [0, 32], sizes = [8, 32], strides = [1, 1]} : vector<8x128xf32> to vector<8x32xf32>
    %698 = arith.negf %697 : vector<8x32xf32>
    %699 = math.exp %698 : vector<8x32xf32>
    %cst_138 = arith.constant 1.000000e+00 : f32
    %700 = vector.broadcast %cst_138 : f32 to vector<8x32xf32>
    %701 = arith.addf %700, %699 : vector<8x32xf32>
    %702 = arith.divf %700, %701 : vector<8x32xf32>
    %703 = vector.extract_strided_slice %690 {offsets = [0, 64], sizes = [8, 32], strides = [1, 1]} : vector<8x128xf32> to vector<8x32xf32>
    %704 = math.tanh %703 : vector<8x32xf32>
    %705 = vector.extract_strided_slice %690 {offsets = [0, 96], sizes = [8, 32], strides = [1, 1]} : vector<8x128xf32> to vector<8x32xf32>
    %706 = arith.negf %705 : vector<8x32xf32>
    %707 = math.exp %706 : vector<8x32xf32>
    %cst_139 = arith.constant 1.000000e+00 : f32
    %708 = vector.broadcast %cst_139 : f32 to vector<8x32xf32>
    %709 = arith.addf %708, %707 : vector<8x32xf32>
    %710 = arith.divf %708, %709 : vector<8x32xf32>
    %711 = arith.mulf %702, %637 : vector<8x32xf32>
    %712 = arith.mulf %696, %704 : vector<8x32xf32>
    %713 = arith.addf %711, %712 : vector<8x32xf32>
    %714 = math.tanh %713 : vector<8x32xf32>
    %715 = arith.mulf %710, %714 : vector<8x32xf32>
    %cst_140 = arith.constant 1.000000e+00 : f32
    %716 = vector.broadcast %cst_140 : f32 to vector<8x1xf32>
    %717 = arith.subf %716, %685 : vector<8x1xf32>
    %718 = vector.broadcast %685 : vector<8x1xf32> to vector<8x32xf32>
    %719 = arith.mulf %718, %715 : vector<8x32xf32>
    %720 = vector.broadcast %717 : vector<8x1xf32> to vector<8x32xf32>
    %721 = arith.mulf %720, %632 : vector<8x32xf32>
    %722 = arith.addf %719, %721 : vector<8x32xf32>
    %cst_141 = arith.constant 0.000000e+00 : f32
    %723 = vector.broadcast %cst_141 : f32 to vector<8x120xf32>
    %c0_142 = arith.constant 0 : index
    %c8 = arith.constant 8 : index
    %724 = vector.load %arg10[%c0_142, %c8] : memref<8x128xf32, #tpu.memory_space<vmem>>, vector<8x120xf32>
    tpu.vector_store %arg10[%c0_142, %c8], %723 {strides = array<i32>} : memref<8x128xf32, #tpu.memory_space<vmem>>, vector<8x120xf32>,
    %c0_143 = arith.constant 0 : index
    %c0_144 = arith.constant 0 : index
    %725 = vector.load %arg7[%c0_143, %c0_144] : memref<32x128xf32, #tpu.memory_space<vmem>>, vector<32x128xf32>
    %cst_145 = arith.constant dense<0.000000e+00> : vector<8x128xf32>
    %726 = tpu.matmul %722, %725, %cst_145 {dimension_numbers = #tpu.dot_dimension_numbers<[1], [0], [0], [1], [0, 0, 1, 1], [], []>} : vector<8x32xf32>, vector<32x128xf32>, vector<8x128xf32> -> vector<8x128xf32>
    %c0_146 = arith.constant 0 : index
    %c0_147 = arith.constant 0 : index
    %727 = vector.load %arg8[%c0_146, %c0_147] : memref<1x128xf32, #tpu.memory_space<vmem>>, vector<1x128xf32>
    %728 = vector.broadcast %727 : vector<1x128xf32> to vector<8x128xf32>
    %729 = arith.addf %726, %728 : vector<8x128xf32>
    %c0_148 = arith.constant 0 : index
    %c0_149 = arith.constant 0 : index
    %730 = vector.load %arg9[%c0_148, %c0_149] : memref<8x128xf32, #tpu.memory_space<vmem>>, vector<8x128xf32>
    tpu.vector_store %arg9[%c0_148, %c0_149], %729 {strides = array<i32>} : memref<8x128xf32, #tpu.memory_space<vmem>>, vector<8x128xf32>,
    return
  }
}

</mosaic_0001>

<llo_original>
// kernel: tpu_custom_call.1
$region0: #{tpu_custom_call.1}
  #allocation0 [shape = 'u32[]', space=smem, size = 0x4, offset = 0x4, fixed_abs, tag = 'smem constant byte address 0x4 - core index']
  #allocation1 [shape = 'u32[144,128]{1,0:T(1,128)}', space=vmem, size = 0x12000, scoped, tag = 'internal scratch']
  #allocation2 [shape = 'f32[1,1]{1,0:T(1,128)S(1)}', space=vmem, size = 0x200, scoped, tag = 'scoped memory for tpu_custom_call.1']
  %s0 = inlined_call_operand.hbm [shape: f32[8,8,32], index: 0, kind: input, shape index: {}]
  %s1 = inlined_call_operand.hbm [shape: f32[64,128], index: 1, kind: input, shape index: {}]
  %s2 = inlined_call_operand.vmem [shape: f32[1,128], index: 2, kind: input, shape index: {}]
  %s3 = inlined_call_operand.hbm [shape: f32[64,128], index: 3, kind: input, shape index: {}]
  %s4 = inlined_call_operand.vmem [shape: f32[1,128], index: 4, kind: input, shape index: {}]
  %s5 = inlined_call_operand.vmem [shape: f32[1,32], index: 5, kind: input, shape index: {}]
  %s6 = inlined_call_operand.<no memory space> [shape: f32[1,1], index: 6, kind: input, shape index: {}]
  %s7 = inlined_call_operand.hbm [shape: f32[32,128], index: 7, kind: input, shape index: {}]
  %s8 = inlined_call_operand.vmem [shape: f32[1,128], index: 8, kind: input, shape index: {}]
  %s9 = inlined_call_operand.hbm [shape: f32[8,128], index: 9, kind: output, shape index: {0}]
  %s10 = inlined_call_operand.hbm [shape: f32[8,128], index: 10, kind: output, shape index: {1}]
  %11 = xla_tuple %s9, %s10
  %s12 = sld [smem:[#allocation0]]
  $region70: #{tpu_custom_call.1} parent=0
    _
  %s14 = ssub.s32 1, %s12
  %s15 = scalar_select 0, %s14, %s12
  %v16 = vstv %s6
  %17 = vst [vmem:[#allocation2] sm:$0x1] %v16
  $region1: #{tpu_custom_call.1} parent=0
    #allocation3 [shape = 'u8[32768]{0}', space=vmem, size = 0x8000, scoped, tag = 'input window, operand 0, single buffered']
    #allocation4 [shape = 's32[1]{0}', space=sflag, size = 0x4, scoped, tag = 'scoped memory for tpu_custom_call.1']
    #allocation5 [shape = 's32[1]{0}', space=sflag, size = 0x4, scoped, tag = 'scoped memory for tpu_custom_call.1']
    #allocation6 [shape = 'u8[32768]{0}', space=vmem, size = 0x8000, scoped, tag = 'input window, operand 1, single buffered']
    #allocation7 [shape = 's32[1]{0}', space=sflag, size = 0x4, scoped, tag = 'scoped memory for tpu_custom_call.1']
    #allocation8 [shape = 'u8[32768]{0}', space=vmem, size = 0x8000, scoped, tag = 'input window, operand 3, single buffered']
    #allocation9 [shape = 'u8[16384]{0}', space=vmem, size = 0x4000, scoped, tag = 'input window, operand 7, single buffered']
    #allocation10 [shape = 's32[1]{0}', space=sflag, size = 0x4, scoped, tag = 'scoped memory for tpu_custom_call.1']
    #allocation11 [shape = 'u8[4096]{0}', space=vmem, size = 0x1000, scoped, tag = 'output window, operand 0, single buffered']
    #allocation12 [shape = 'u8[4096]{0}', space=vmem, size = 0x1000, scoped, tag = 'output window, operand 1, single buffered']
    #allocation13 [shape = 's32[1]{0}', space=sflag, size = 0x4, scoped, tag = 'scoped memory for tpu_custom_call.1']
    %18 = vsyncpa [#allocation4], 0
    %19 = vsyncpa [#allocation7], 0
    %20 = vsyncpa [#allocation10], 0
    %21 = vsyncpa [#allocation5], 0
    %22 = vsyncpa [#allocation13], 0
    // Predicated region
    $region2: #{tpu_custom_call.1} parent=1 // pred_check
      _
    $region3: #{tpu_custom_call.1} parent=1 // pred_check_branch
      %24 = sbr.rel (0) target = $region5
    $region4: #{tpu_custom_call.1} parent=1 // pred_region
      %s26 = ssub.s32 1024, 1024
      %27 = vsyncadd [#allocation4], %s26
      %s28 = sshll.u32 [#allocation3], 4
      %s29 = int_to_ptr.vmem [resolvable:$true] %s28
      %34 = dma.hbm_to_vmem [thread:$0]  %s0, 1024, %s29, [#allocation4], 128, 128, 8
    $region5: #{tpu_custom_call.1} parent=1 // pred_fallthru
      _
    // Predicated region
    $region6: #{tpu_custom_call.1} parent=1 // pred_check
      _
    $region7: #{tpu_custom_call.1} parent=1 // pred_check_branch
      %36 = sbr.rel (0) target = $region9
    $region8: #{tpu_custom_call.1} parent=1 // pred_region
      %s38 = ssub.s32 1024, 1024
      %39 = vsyncadd [#allocation7], %s38
      %s40 = sshll.u32 [#allocation6], 4
      %s41 = int_to_ptr.vmem [resolvable:$true] %s40
      %46 = dma.hbm_to_vmem [thread:$0]  %s1, 1024, %s41, [#allocation7], 128, 128, 8
    $region9: #{tpu_custom_call.1} parent=1 // pred_fallthru
      _
    // Predicated region
    $region10: #{tpu_custom_call.1} parent=1 // pred_check
      _
    $region11: #{tpu_custom_call.1} parent=1 // pred_check_branch
      %48 = sbr.rel (0) target = $region13
    $region12: #{tpu_custom_call.1} parent=1 // pred_region
      _
    $region13: #{tpu_custom_call.1} parent=1 // pred_fallthru
      _
    // Predicated region
    $region14: #{tpu_custom_call.1} parent=1 // pred_check
      _
    $region15: #{tpu_custom_call.1} parent=1 // pred_check_branch
      %50 = sbr.rel (0) target = $region17
    $region16: #{tpu_custom_call.1} parent=1 // pred_region
      %s52 = ssub.s32 1024, 1024
      %53 = vsyncadd [#allocation7], %s52
      %s54 = sshll.u32 [#allocation8], 4
      %s55 = int_to_ptr.vmem [resolvable:$true] %s54
      %60 = dma.hbm_to_vmem [thread:$0]  %s3, 1024, %s55, [#allocation7], 128, 128, 8
    $region17: #{tpu_custom_call.1} parent=1 // pred_fallthru
      _
    // Predicated region
    $region18: #{tpu_custom_call.1} parent=1 // pred_check
      _
    $region19: #{tpu_custom_call.1} parent=1 // pred_check_branch
      %62 = sbr.rel (0) target = $region21
    $region20: #{tpu_custom_call.1} parent=1 // pred_region
      _
    $region21: #{tpu_custom_call.1} parent=1 // pred_fallthru
      _
    // Predicated region
    $region22: #{tpu_custom_call.1} parent=1 // pred_check
      _
    $region23: #{tpu_custom_call.1} parent=1 // pred_check_branch
      %64 = sbr.rel (0) target = $region25
    $region24: #{tpu_custom_call.1} parent=1 // pred_region
      _
    $region25: #{tpu_custom_call.1} parent=1 // pred_fallthru
      _
    // Predicated region
    $region26: #{tpu_custom_call.1} parent=1 // pred_check
      _
    $region27: #{tpu_custom_call.1} parent=1 // pred_check_branch
      %66 = sbr.rel (0) target = $region29
    $region28: #{tpu_custom_call.1} parent=1 // pred_region
      _
    $region29: #{tpu_custom_call.1} parent=1 // pred_fallthru
      _
    // Predicated region
    $region30: #{tpu_custom_call.1} parent=1 // pred_check
      _
    $region31: #{tpu_custom_call.1} parent=1 // pred_check_branch
      %68 = sbr.rel (0) target = $region33
    $region32: #{tpu_custom_call.1} parent=1 // pred_region
      %s70 = ssub.s32 512, 512
      %71 = vsyncadd [#allocation10], %s70
      %s72 = sshll.u32 [#allocation9], 4
      %s73 = int_to_ptr.vmem [resolvable:$true] %s72
      %78 = dma.hbm_to_vmem [thread:$0]  %s7, 512, %s73, [#allocation10], 128, 128, 8
    $region33: #{tpu_custom_call.1} parent=1 // pred_fallthru
      _
    // Predicated region
    $region34: #{tpu_custom_call.1} parent=1 // pred_check
      _
    $region35: #{tpu_custom_call.1} parent=1 // pred_check_branch
      %80 = sbr.rel (0) target = $region37
    $region36: #{tpu_custom_call.1} parent=1 // pred_region
      _
    $region37: #{tpu_custom_call.1} parent=1 // pred_fallthru
      _
    // Predicated region
    $region38: #{tpu_custom_call.1} parent=1 // pred_check
      _
    $region39: #{tpu_custom_call.1} parent=1 // pred_check_branch
      %82 = sbr.rel (0) target = $region41
    $region40: #{tpu_custom_call.1} parent=1 // pred_region
      %83 = dma.done [#allocation4], 1024
    $region41: #{tpu_custom_call.1} parent=1 // pred_fallthru
      _
    // Predicated region
    $region42: #{tpu_custom_call.1} parent=1 // pred_check
      _
    $region43: #{tpu_custom_call.1} parent=1 // pred_check_branch
      %85 = sbr.rel (0) target = $region45
    $region44: #{tpu_custom_call.1} parent=1 // pred_region
      %86 = dma.done [#allocation7], 1024
    $region45: #{tpu_custom_call.1} parent=1 // pred_fallthru
      _
    // Predicated region
    $region46: #{tpu_custom_call.1} parent=1 // pred_check
      _
    $region47: #{tpu_custom_call.1} parent=1 // pred_check_branch
      %88 = sbr.rel (0) target = $region49
    $region48: #{tpu_custom_call.1} parent=1 // pred_region
      %89 = dma.done [#allocation7], 1024
    $region49: #{tpu_custom_call.1} parent=1 // pred_fallthru
      _
    // Predicated region
    $region50: #{tpu_custom_call.1} parent=1 // pred_check
      _
    $region51: #{tpu_custom_call.1} parent=1 // pred_check_branch
      %91 = sbr.rel (0) target = $region53
    $region52: #{tpu_custom_call.1} parent=1 // pred_region
      %92 = dma.done [#allocation10], 512
    $region53: #{tpu_custom_call.1} parent=1 // pred_fallthru
      _
    %v93 = vld [vmem:[#allocation6] sm:$0xff]
    %v94 = vld [vmem:[#allocation6 + $0x8] sm:$0xff]
    %v95 = vld [vmem:[#allocation6 + $0x10] sm:$0xff]
    %v96 = vld [vmem:[#allocation6 + $0x18] sm:$0xff]
    %v97 = vld [vmem:[#allocation6 + $0x20] sm:$0xff]
    %v98 = vld [vmem:[#allocation6 + $0x28] sm:$0xff]
    %v99 = vld [vmem:[#allocation6 + $0x30] sm:$0xff]
    %v100 = vld [vmem:[#allocation6 + $0x38] sm:$0xff]
    %v101 = vld [vmem:[%s2] sm:$0x1]
    %v102 = vld [vmem:[#allocation8] sm:$0xff]
    %v103 = vld [vmem:[#allocation8 + $0x8] sm:$0xff]
    %v104 = vld [vmem:[#allocation8 + $0x10] sm:$0xff]
    %v105 = vld [vmem:[#allocation8 + $0x18] sm:$0xff]
    %v106 = vld [vmem:[#allocation8 + $0x20] sm:$0xff]
    %v107 = vld [vmem:[#allocation8 + $0x28] sm:$0xff]
    %v108 = vld [vmem:[#allocation8 + $0x30] sm:$0xff]
    %v109 = vld [vmem:[#allocation8 + $0x38] sm:$0xff]
    %v110 = vld [vmem:[%s4] sm:$0x1]
    %v111 = vld [vmem:[%s5] sm:$0x1]
    %v112 = vld [vmem:[#allocation2] sm:$0x1]
    %v113 = vld [vmem:[#allocation3] sm:$0xff]
    %vm114 = vcmask 261120
    %v115 = vsel %vm114, %v113, 0.0
    %v117 = vlaneseq
    %v118 = vshrl.u32 %v117, 7
    %v119 = vsub.s32 0, %v118
    %v120 = vrot.slane %v101, %v119
    %vm122 = vcmask 523264
    %v124 = vsel %vm122, %v115, 0
    %126 = vmatprep.subr.mxu0 0.0
    %127 = vmatpush1.msra.mxu0 %v93
    %128 = vmatprep.subr.mxu0 0.0
    %129 = vmatpush1.msra.mxu0 %v94
    %130 = vmatprep.subr.mxu0 0.0
    %131 = vmatpush1.msra.mxu0 %v95
    %132 = vmatprep.subr.mxu0 0.0
    %133 = vmatpush1.msra.mxu0 %v96
    %134 = vmatprep.subr.mxu0 0.0
    %135 = vmatpush1.msra.mxu0 %v97
    %136 = vmatprep.subr.mxu0 0.0
    %137 = vmatpush1.msra.mxu0 %v98
    %138 = vmatprep.subr.mxu0 0.0
    %139 = vmatpush1.msra.mxu0 %v99
    %140 = vmatprep.subr.mxu0 0.0
    %141 = vmatpush1.msra.mxu0 %v100
    %142 = vmatprep.subr.mxu0 0.0
    %143 = vmatpush1.msra.mxu0 0.0
    %144 = vmatprep.subr.mxu0 0.0
    %145 = vmatpush1.msra.mxu0 0.0
    %146 = vmatprep.subr.mxu0 0.0
    %147 = vmatpush1.msra.mxu0 0.0
    %148 = vmatprep.subr.mxu0 0.0
    %149 = vmatpush1.msra.mxu0 0.0
    %150 = vmatprep.subr.mxu0 0.0
    %151 = vmatpush1.msra.mxu0 0.0
    %152 = vmatprep.subr.mxu0 0.0
    %153 = vmatpush1.msra.mxu0 0.0
    %154 = vmatprep.subr.mxu0 0.0
    %155 = vmatpush1.msra.mxu0 0.0
    %156 = vmatprep.subr.mxu0 0.0
    %157 = vmatpush1.msra.mxu0 0.0
    %158 = vmatprep.subr.mxu0 0.0
    %159 = vmatpush1.msra.mxu0 0.0
    %160 = vmatprep.subr.mxu0 0.0
    %161 = vmatpush1.msra.mxu0 0.0
    %162 = vmatprep.subr.mxu0 0.0
    %163 = vmatpush1.msra.mxu0 0.0
    %164 = vmatprep.subr.mxu0 0.0
    %165 = vmatpush1.msra.mxu0 0.0
    %166 = vmatprep.subr.mxu0 0.0
    %167 = vmatpush1.msra.mxu0 0.0
    %168 = vmatprep.subr.mxu0 0.0
    %169 = vmatpush1.msra.mxu0 0.0
    %170 = vmatprep.subr.mxu0 0.0
    %171 = vmatpush1.msra.mxu0 0.0
    %172 = vmatprep.subr.mxu0 0.0
    %173 = vmatpush1.msra.mxu0 0.0
    %174 = vmatprep.subr.mxu0 0.0
    %175 = vmatpush1.msra.mxu0 0.0
    %176 = vmatprep.subr.mxu0 0.0
    %177 = vmatpush1.msra.mxu0 0.0
    %178 = vmatprep.subr.mxu0 0.0
    %179 = vmatpush1.msra.mxu0 0.0
    %180 = vmatprep.subr.mxu0 0.0
    %181 = vmatpush1.msra.mxu0 0.0
    %182 = vmatprep.subr.mxu0 0.0
    %183 = vmatpush1.msra.mxu0 0.0
    %184 = vmatprep.subr.mxu0 0.0
    %185 = vmatpush1.msra.mxu0 0.0
    %186 = vmatprep.subr.mxu0 0.0
    %187 = vmatpush1.msra.mxu0 0.0
    %188 = vmatprep.subr.mxu0 0.0
    %189 = vmatpush1.msra.mxu0 0.0
    %190 = vmatprep.mubr.f32.mxu0 0.0
    %191 = vmatmul.mubr.f32.gmra.mrb[0].mxu0 %v124
    %v192 = vpop.f32.mrb[0].mxu0
    %v193 = vadd.f32 %v120, %v192
    %v194 = vpop.f32.mrb[0].mxu0
    %195 = vdwg.mxu0
    %v196 = vxor.u32 %v193, 2147483648
    %v197 = vmul.f32 %v196, 1.442695
    %v198 = vpow.pop %v197
    %v199 = vadd.f32 %v198, 1.0
    %v200 = vrcp.pop %v199
    %v201 = vmul.f32 1.0, %v200
    %v202 = vtanh.pop %v193
    %v203 = vmul.f32 %v201, 0.0
    %205 = vrot.lane.b32.xlu0 %v202, 64
    %v206 = vpop.permute.xlu0 %205
    %v208 = vmul.f32 %v201, %v206
    %210 = vrot.lane.b32.xlu0 %v208, 32
    %v211 = vpop.permute.xlu0 %210
    %v213 = vadd.f32 %v203, %v211
    %v214 = vtanh.pop %v213
    %216 = vrot.lane.b32.xlu0 %v214, 64
    %v217 = vpop.permute.xlu0 %216
    %v219 = vmul.f32 %v201, %v217
    %v221 = vlaneseq
    %v222 = vshrl.u32 %v221, 7
    %v223 = vsub.s32 0, %v222
    %v224 = vrot.slane %v111, %v223
    %225 = vrot.lane.b32.xlu0 %v224, 96
    %v226 = vpop.permute.xlu0 %225
    %v228 = vmul.f32 %v219, %v226
    %230 = vrot.lane.b32.xlu0 %v228, 32
    %v231 = vpop.permute.xlu0 %230
    %v233 = vsel %vm114, %v231, 0.0
    %234 = vadd.xlane.f32.xlu0 %v233
    %v235 = vpop.xlane.xlu0 %234
    %v237 = vlaneseq
    %v238 = vshrl.u32 %v237, 7
    %v239 = vsub.s32 0, %v238
    %v240 = vrot.slane %v112, %v239
    %v242 = vadd.f32 %v235, %v240
    %v243 = vxor.u32 %v242, 2147483648
    %v244 = vmul.f32 %v243, 1.442695
    %v245 = vpow.pop %v244
    %v246 = vadd.f32 %v245, 1.0
    %v247 = vrcp.pop %v246
    %v248 = vmul.f32 1.0, %v247
    %vm249 = vcmask 7168
    %250 = vst.msk [vmem:[#allocation12] sm:$0xff] %vm249, %v248
    %252 = vrot.lane.b32.xlu0 %v219, 32
    %v253 = vpop.permute.xlu0 %252
    %v255 = vsel %vm114, %v253, 0.0
    %v257 = vlaneseq
    %v258 = vshrl.u32 %v257, 7
    %v259 = vsub.s32 0, %v258
    %v260 = vrot.slane %v110, %v259
    %v263 = vsel %vm122, %v255, 0
    %265 = vmatprep.subr.mxu0 0.0
    %266 = vmatpush1.msra.mxu0 %v102
    %267 = vmatprep.subr.mxu0 0.0
    %268 = vmatpush1.msra.mxu0 %v103
    %269 = vmatprep.subr.mxu0 0.0
    %270 = vmatpush1.msra.mxu0 %v104
    %271 = vmatprep.subr.mxu0 0.0
    %272 = vmatpush1.msra.mxu0 %v105
    %273 = vmatprep.subr.mxu0 0.0
    %274 = vmatpush1.msra.mxu0 %v106
    %275 = vmatprep.subr.mxu0 0.0
    %276 = vmatpush1.msra.mxu0 %v107
    %277 = vmatprep.subr.mxu0 0.0
    %278 = vmatpush1.msra.mxu0 %v108
    %279 = vmatprep.subr.mxu0 0.0
    %280 = vmatpush1.msra.mxu0 %v109
    %281 = vmatprep.subr.mxu0 0.0
    %282 = vmatpush1.msra.mxu0 0.0
    %283 = vmatprep.subr.mxu0 0.0
    %284 = vmatpush1.msra.mxu0 0.0
    %285 = vmatprep.subr.mxu0 0.0
    %286 = vmatpush1.msra.mxu0 0.0
    %287 = vmatprep.subr.mxu0 0.0
    %288 = vmatpush1.msra.mxu0 0.0
    %289 = vmatprep.subr.mxu0 0.0
    %290 = vmatpush1.msra.mxu0 0.0
    %291 = vmatprep.subr.mxu0 0.0
    %292 = vmatpush1.msra.mxu0 0.0
    %293 = vmatprep.subr.mxu0 0.0
    %294 = vmatpush1.msra.mxu0 0.0
    %295 = vmatprep.subr.mxu0 0.0
    %296 = vmatpush1.msra.mxu0 0.0
    %297 = vmatprep.subr.mxu0 0.0
    %298 = vmatpush1.msra.mxu0 0.0
    %299 = vmatprep.subr.mxu0 0.0
    %300 = vmatpush1.msra.mxu0 0.0
    %301 = vmatprep.subr.mxu0 0.0
    %302 = vmatpush1.msra.mxu0 0.0
    %303 = vmatprep.subr.mxu0 0.0
    %304 = vmatpush1.msra.mxu0 0.0
    %305 = vmatprep.subr.mxu0 0.0
    %306 = vmatpush1.msra.mxu0 0.0
    %307 = vmatprep.subr.mxu0 0.0
    %308 = vmatpush1.msra.mxu0 0.0
    %309 = vmatprep.subr.mxu0 0.0
    %310 = vmatpush1.msra.mxu0 0.0
    %311 = vmatprep.subr.mxu0 0.0
    %312 = vmatpush1.msra.mxu0 0.0
    %313 = vmatprep.subr.mxu0 0.0
    %314 = vmatpush1.msra.mxu0 0.0
    %315 = vmatprep.subr.mxu0 0.0
    %316 = vmatpush1.msra.mxu0 0.0
    %317 = vmatprep.subr.mxu0 0.0
    %318 = vmatpush1.msra.mxu0 0.0
    %319 = vmatprep.subr.mxu0 0.0
    %320 = vmatpush1.msra.mxu0 0.0
    %321 = vmatprep.subr.mxu0 0.0
    %322 = vmatpush1.msra.mxu0 0.0
    %323 = vmatprep.subr.mxu0 0.0
    %324 = vmatpush1.msra.mxu0 0.0
    %325 = vmatprep.subr.mxu0 0.0
    %326 = vmatpush1.msra.mxu0 0.0
    %327 = vmatprep.subr.mxu0 0.0
    %328 = vmatpush1.msra.mxu0 0.0
    %329 = vmatprep.mubr.f32.mxu0 0.0
    %330 = vmatmul.mubr.f32.gmra.mrb[0].mxu0 %v263
    %v331 = vpop.f32.mrb[0].mxu0
    %v332 = vadd.f32 %v260, %v331
    %v333 = vpop.f32.mrb[0].mxu0
    %334 = vdwg.mxu0
    %v335 = vxor.u32 %v332, 2147483648
    %v336 = vmul.f32 %v335, 1.442695
    %v337 = vpow.pop %v336
    %v338 = vadd.f32 %v337, 1.0
    %v339 = vrcp.pop %v338
    %v340 = vmul.f32 1.0, %v339
    %v341 = vtanh.pop %v332
    %v342 = vmul.f32 %v340, 0.0
    %344 = vrot.lane.b32.xlu0 %v341, 64
    %v345 = vpop.permute.xlu0 %344
    %v347 = vmul.f32 %v340, %v345
    %349 = vrot.lane.b32.xlu0 %v347, 32
    %v350 = vpop.permute.xlu0 %349
    %v352 = vadd.f32 %v342, %v350
    %v353 = vtanh.pop %v352
    %355 = vrot.lane.b32.xlu0 %v353, 64
    %v356 = vpop.permute.xlu0 %355
    %v358 = vmul.f32 %v340, %v356
    %v359 = vsub.f32 1.0, %v248
    %361 = vset.pattern.permute.xlu0 0
    %362 = vperm.xlu0 %361, %v248
    %v363 = vpop.permute.xlu0 %362
    %v365 = vmul.f32 %v363, %v358
    %367 = vset.pattern.permute.xlu0 0
    %368 = vperm.xlu0 %367, %v359
    %v369 = vpop.permute.xlu0 %368
    %v371 = vmul.f32 %v369, 0.0
    %v372 = vadd.f32 %v365, %v371
    %v373 = vmul.f32 %v363, %v352
    %v374 = vadd.f32 %v373, %v371
    %s375 = scalar_lea.vmem [#allocation3], 8
    %v376 = vld [vmem:[%s375] sm:$0xff]
    %v377 = vmul.f32 %v219, %v369
    %v378 = vmul.f32 %v213, %v369
    %380 = vrot.lane.b32.xlu0 %v377, 64
    %v381 = vpop.permute.xlu0 %380
    %v383 = vsel %vm114, %v376, %v381
    %v385 = vsel %vm122, %v383, 0
    %387 = vmatprep.subr.mxu0 0.0
    %388 = vmatpush1.msra.mxu0 %v93
    %389 = vmatprep.subr.mxu0 0.0
    %390 = vmatpush1.msra.mxu0 %v94
    %391 = vmatprep.subr.mxu0 0.0
    %392 = vmatpush1.msra.mxu0 %v95
    %393 = vmatprep.subr.mxu0 0.0
    %394 = vmatpush1.msra.mxu0 %v96
    %395 = vmatprep.subr.mxu0 0.0
    %396 = vmatpush1.msra.mxu0 %v97
    %397 = vmatprep.subr.mxu0 0.0
    %398 = vmatpush1.msra.mxu0 %v98
    %399 = vmatprep.subr.mxu0 0.0
    %400 = vmatpush1.msra.mxu0 %v99
    %401 = vmatprep.subr.mxu0 0.0
    %402 = vmatpush1.msra.mxu0 %v100
    %403 = vmatprep.subr.mxu0 0.0
    %404 = vmatpush1.msra.mxu0 0.0
    %405 = vmatprep.subr.mxu0 0.0
    %406 = vmatpush1.msra.mxu0 0.0
    %407 = vmatprep.subr.mxu0 0.0
    %408 = vmatpush1.msra.mxu0 0.0
    %409 = vmatprep.subr.mxu0 0.0
    %410 = vmatpush1.msra.mxu0 0.0
    %411 = vmatprep.subr.mxu0 0.0
    %412 = vmatpush1.msra.mxu0 0.0
    %413 = vmatprep.subr.mxu0 0.0
    %414 = vmatpush1.msra.mxu0 0.0
    %415 = vmatprep.subr.mxu0 0.0
    %416 = vmatpush1.msra.mxu0 0.0
    %417 = vmatprep.subr.mxu0 0.0
    %418 = vmatpush1.msra.mxu0 0.0
    %419 = vmatprep.subr.mxu0 0.0
    %420 = vmatpush1.msra.mxu0 0.0
    %421 = vmatprep.subr.mxu0 0.0
    %422 = vmatpush1.msra.mxu0 0.0
    %423 = vmatprep.subr.mxu0 0.0
    %424 = vmatpush1.msra.mxu0 0.0
    %425 = vmatprep.subr.mxu0 0.0
    %426 = vmatpush1.msra.mxu0 0.0
    %427 = vmatprep.subr.mxu0 0.0
    %428 = vmatpush1.msra.mxu0 0.0
    %429 = vmatprep.subr.mxu0 0.0
    %430 = vmatpush1.msra.mxu0 0.0
    %431 = vmatprep.subr.mxu0 0.0
    %432 = vmatpush1.msra.mxu0 0.0
    %433 = vmatprep.subr.mxu0 0.0
    %434 = vmatpush1.msra.mxu0 0.0
    %435 = vmatprep.subr.mxu0 0.0
    %436 = vmatpush1.msra.mxu0 0.0
    %437 = vmatprep.subr.mxu0 0.0
    %438 = vmatpush1.msra.mxu0 0.0
    %439 = vmatprep.subr.mxu0 0.0
    %440 = vmatpush1.msra.mxu0 0.0
    %441 = vmatprep.subr.mxu0 0.0
    %442 = vmatpush1.msra.mxu0 0.0
    %443 = vmatprep.subr.mxu0 0.0
    %444 = vmatpush1.msra.mxu0 0.0
    %445 = vmatprep.subr.mxu0 0.0
    %446 = vmatpush1.msra.mxu0 0.0
    %447 = vmatprep.subr.mxu0 0.0
    %448 = vmatpush1.msra.mxu0 0.0
    %449 = vmatprep.subr.mxu0 0.0
    %450 = vmatpush1.msra.mxu0 0.0
    %451 = vmatprep.mubr.f32.mxu0 0.0
    %452 = vmatmul.mubr.f32.gmra.mrb[0].mxu0 %v385
    %v453 = vpop.f32.mrb[0].mxu0
    %v454 = vadd.f32 %v120, %v453
    %v455 = vpop.f32.mrb[0].mxu0
    %456 = vdwg.mxu0
    %v457 = vxor.u32 %v454, 2147483648
    %v458 = vmul.f32 %v457, 1.442695
    %v459 = vpow.pop %v458
    %v460 = vadd.f32 %v459, 1.0
    %v461 = vrcp.pop %v460
    %v462 = vmul.f32 1.0, %v461
    %v463 = vtanh.pop %v454
    %v464 = vmul.f32 %v462, %v378
    %466 = vrot.lane.b32.xlu0 %v463, 64
    %v467 = vpop.permute.xlu0 %466
    %v469 = vmul.f32 %v462, %v467
    %471 = vrot.lane.b32.xlu0 %v469, 32
    %v472 = vpop.permute.xlu0 %471
    %v474 = vadd.f32 %v464, %v472
    %v475 = vtanh.pop %v474
    %477 = vrot.lane.b32.xlu0 %v475, 64
    %v478 = vpop.permute.xlu0 %477
    %v480 = vmul.f32 %v462, %v478
    %v481 = vmul.f32 %v480, %v226
    %483 = vrot.lane.b32.xlu0 %v481, 32
    %v484 = vpop.permute.xlu0 %483
    %v486 = vsel %vm114, %v484, 0.0
    %487 = vadd.xlane.f32.xlu0 %v486
    %v488 = vpop.xlane.xlu0 %487
    %v489 = vadd.f32 %v488, %v240
    %v490 = vxor.u32 %v489, 2147483648
    %v491 = vmul.f32 %v490, 1.442695
    %v492 = vpow.pop %v491
    %v493 = vadd.f32 %v492, 1.0
    %v494 = vrcp.pop %v493
    %v495 = vmul.f32 1.0, %v494
    %497 = vrot.lane.b32.xlu0 %v495, 1
    %v498 = vpop.permute.xlu0 %497
    %vm500 = vcmask 15368
    %501 = vst.msk [vmem:[#allocation12] sm:$0xff] %vm500, %v498
    %503 = vrot.lane.b32.xlu0 %v480, 32
    %v504 = vpop.permute.xlu0 %503
    %507 = vrot.lane.b32.xlu0 %v372, 64
    %v508 = vpop.permute.xlu0 %507
    %v510 = vsel %vm114, %v504, %v508
    %v512 = vsel %vm122, %v510, 0
    %514 = vmatprep.subr.mxu0 0.0
    %515 = vmatpush1.msra.mxu0 %v102
    %516 = vmatprep.subr.mxu0 0.0
    %517 = vmatpush1.msra.mxu0 %v103
    %518 = vmatprep.subr.mxu0 0.0
    %519 = vmatpush1.msra.mxu0 %v104
    %520 = vmatprep.subr.mxu0 0.0
    %521 = vmatpush1.msra.mxu0 %v105
    %522 = vmatprep.subr.mxu0 0.0
    %523 = vmatpush1.msra.mxu0 %v106
    %524 = vmatprep.subr.mxu0 0.0
    %525 = vmatpush1.msra.mxu0 %v107
    %526 = vmatprep.subr.mxu0 0.0
    %527 = vmatpush1.msra.mxu0 %v108
    %528 = vmatprep.subr.mxu0 0.0
    %529 = vmatpush1.msra.mxu0 %v109
    %530 = vmatprep.subr.mxu0 0.0
    %531 = vmatpush1.msra.mxu0 0.0
    %532 = vmatprep.subr.mxu0 0.0
    %533 = vmatpush1.msra.mxu0 0.0
    %534 = vmatprep.subr.mxu0 0.0
    %535 = vmatpush1.msra.mxu0 0.0
    %536 = vmatprep.subr.mxu0 0.0
    %537 = vmatpush1.msra.mxu0 0.0
    %538 = vmatprep.subr.mxu0 0.0
    %539 = vmatpush1.msra.mxu0 0.0
    %540 = vmatprep.subr.mxu0 0.0
    %541 = vmatpush1.msra.mxu0 0.0
    %542 = vmatprep.subr.mxu0 0.0
    %543 = vmatpush1.msra.mxu0 0.0
    %544 = vmatprep.subr.mxu0 0.0
    %545 = vmatpush1.msra.mxu0 0.0
    %546 = vmatprep.subr.mxu0 0.0
    %547 = vmatpush1.msra.mxu0 0.0
    %548 = vmatprep.subr.mxu0 0.0
    %549 = vmatpush1.msra.mxu0 0.0
    %550 = vmatprep.subr.mxu0 0.0
    %551 = vmatpush1.msra.mxu0 0.0
    %552 = vmatprep.subr.mxu0 0.0
    %553 = vmatpush1.msra.mxu0 0.0
    %554 = vmatprep.subr.mxu0 0.0
    %555 = vmatpush1.msra.mxu0 0.0
    %556 = vmatprep.subr.mxu0 0.0
    %557 = vmatpush1.msra.mxu0 0.0
    %558 = vmatprep.subr.mxu0 0.0
    %559 = vmatpush1.msra.mxu0 0.0
    %560 = vmatprep.subr.mxu0 0.0
    %561 = vmatpush1.msra.mxu0 0.0
    %562 = vmatprep.subr.mxu0 0.0
    %563 = vmatpush1.msra.mxu0 0.0
    %564 = vmatprep.subr.mxu0 0.0
    %565 = vmatpush1.msra.mxu0 0.0
    %566 = vmatprep.subr.mxu0 0.0
    %567 = vmatpush1.msra.mxu0 0.0
    %568 = vmatprep.subr.mxu0 0.0
    %569 = vmatpush1.msra.mxu0 0.0
    %570 = vmatprep.subr.mxu0 0.0
    %571 = vmatpush1.msra.mxu0 0.0
    %572 = vmatprep.subr.mxu0 0.0
    %573 = vmatpush1.msra.mxu0 0.0
    %574 = vmatprep.subr.mxu0 0.0
    %575 = vmatpush1.msra.mxu0 0.0
    %576 = vmatprep.subr.mxu0 0.0
    %577 = vmatpush1.msra.mxu0 0.0
    %578 = vmatprep.mubr.f32.mxu0 0.0
    %579 = vmatmul.mubr.f32.gmra.mrb[0].mxu0 %v512
    %v580 = vpop.f32.mrb[0].mxu0
    %v581 = vadd.f32 %v260, %v580
    %v582 = vpop.f32.mrb[0].mxu0
    %583 = vdwg.mxu0
    %v584 = vxor.u32 %v581, 2147483648
    %v585 = vmul.f32 %v584, 1.442695
    %v586 = vpow.pop %v585
    %v587 = vadd.f32 %v586, 1.0
    %v588 = vrcp.pop %v587
    %v589 = vmul.f32 1.0, %v588
    %v590 = vtanh.pop %v581
    %v591 = vmul.f32 %v589, %v374
    %593 = vrot.lane.b32.xlu0 %v590, 64
    %v594 = vpop.permute.xlu0 %593
    %v596 = vmul.f32 %v589, %v594
    %598 = vrot.lane.b32.xlu0 %v596, 32
    %v599 = vpop.permute.xlu0 %598
    %v601 = vadd.f32 %v591, %v599
    %v602 = vtanh.pop %v601
    %604 = vrot.lane.b32.xlu0 %v602, 64
    %v605 = vpop.permute.xlu0 %604
    %v607 = vmul.f32 %v589, %v605
    %v608 = vsub.f32 1.0, %v495
    %609 = vset.pattern.permute.xlu0 0
    %610 = vperm.xlu0 %609, %v495
    %v611 = vpop.permute.xlu0 %610
    %v613 = vmul.f32 %v611, %v607
    %615 = vset.pattern.permute.xlu0 0
    %616 = vperm.xlu0 %615, %v608
    %v617 = vpop.permute.xlu0 %616
    %v619 = vmul.f32 %v617, %v372
    %v620 = vadd.f32 %v613, %v619
    %v621 = vmul.f32 %v611, %v601
    %v622 = vmul.f32 %v617, %v374
    %v623 = vadd.f32 %v621, %v622
    %s624 = scalar_lea.vmem [#allocation3], 16
    %v625 = vld [vmem:[%s624] sm:$0xff]
    %v626 = vmul.f32 %v480, %v617
    %v627 = vmul.f32 %v474, %v617
    %629 = vrot.lane.b32.xlu0 %v626, 64
    %v630 = vpop.permute.xlu0 %629
    %v632 = vsel %vm114, %v625, %v630
    %v634 = vsel %vm122, %v632, 0
    %636 = vmatprep.subr.mxu0 0.0
    %637 = vmatpush1.msra.mxu0 %v93
    %638 = vmatprep.subr.mxu0 0.0
    %639 = vmatpush1.msra.mxu0 %v94
    %640 = vmatprep.subr.mxu0 0.0
    %641 = vmatpush1.msra.mxu0 %v95
    %642 = vmatprep.subr.mxu0 0.0
    %643 = vmatpush1.msra.mxu0 %v96
    %644 = vmatprep.subr.mxu0 0.0
    %645 = vmatpush1.msra.mxu0 %v97
    %646 = vmatprep.subr.mxu0 0.0
    %647 = vmatpush1.msra.mxu0 %v98
    %648 = vmatprep.subr.mxu0 0.0
    %649 = vmatpush1.msra.mxu0 %v99
    %650 = vmatprep.subr.mxu0 0.0
    %651 = vmatpush1.msra.mxu0 %v100
    %652 = vmatprep.subr.mxu0 0.0
    %653 = vmatpush1.msra.mxu0 0.0
    %654 = vmatprep.subr.mxu0 0.0
    %655 = vmatpush1.msra.mxu0 0.0
    %656 = vmatprep.subr.mxu0 0.0
    %657 = vmatpush1.msra.mxu0 0.0
    %658 = vmatprep.subr.mxu0 0.0
    %659 = vmatpush1.msra.mxu0 0.0
    %660 = vmatprep.subr.mxu0 0.0
    %661 = vmatpush1.msra.mxu0 0.0
    %662 = vmatprep.subr.mxu0 0.0
    %663 = vmatpush1.msra.mxu0 0.0
    %664 = vmatprep.subr.mxu0 0.0
    %665 = vmatpush1.msra.mxu0 0.0
    %666 = vmatprep.subr.mxu0 0.0
    %667 = vmatpush1.msra.mxu0 0.0
    %668 = vmatprep.subr.mxu0 0.0
    %669 = vmatpush1.msra.mxu0 0.0
    %670 = vmatprep.subr.mxu0 0.0
    %671 = vmatpush1.msra.mxu0 0.0
    %672 = vmatprep.subr.mxu0 0.0
    %673 = vmatpush1.msra.mxu0 0.0
    %674 = vmatprep.subr.mxu0 0.0
    %675 = vmatpush1.msra.mxu0 0.0
    %676 = vmatprep.subr.mxu0 0.0
    %677 = vmatpush1.msra.mxu0 0.0
    %678 = vmatprep.subr.mxu0 0.0
    %679 = vmatpush1.msra.mxu0 0.0
    %680 = vmatprep.subr.mxu0 0.0
    %681 = vmatpush1.msra.mxu0 0.0
    %682 = vmatprep.subr.mxu0 0.0
    %683 = vmatpush1.msra.mxu0 0.0
    %684 = vmatprep.subr.mxu0 0.0
    %685 = vmatpush1.msra.mxu0 0.0
    %686 = vmatprep.subr.mxu0 0.0
    %687 = vmatpush1.msra.mxu0 0.0
    %688 = vmatprep.subr.mxu0 0.0
    %689 = vmatpush1.msra.mxu0 0.0
    %690 = vmatprep.subr.mxu0 0.0
    %691 = vmatpush1.msra.mxu0 0.0
    %692 = vmatprep.subr.mxu0 0.0
    %693 = vmatpush1.msra.mxu0 0.0
    %694 = vmatprep.subr.mxu0 0.0
    %695 = vmatpush1.msra.mxu0 0.0
    %696 = vmatprep.subr.mxu0 0.0
    %697 = vmatpush1.msra.mxu0 0.0
    %698 = vmatprep.subr.mxu0 0.0
    %699 = vmatpush1.msra.mxu0 0.0
    %700 = vmatprep.mubr.f32.mxu0 0.0
    %701 = vmatmul.mubr.f32.gmra.mrb[0].mxu0 %v634
    %v702 = vpop.f32.mrb[0].mxu0
    %v703 = vadd.f32 %v120, %v702
    %v704 = vpop.f32.mrb[0].mxu0
    %705 = vdwg.mxu0
    %v706 = vxor.u32 %v703, 2147483648
    %v707 = vmul.f32 %v706, 1.442695
    %v708 = vpow.pop %v707
    %v709 = vadd.f32 %v708, 1.0
    %v710 = vrcp.pop %v709
    %v711 = vmul.f32 1.0, %v710
    %v712 = vtanh.pop %v703
    %v713 = vmul.f32 %v711, %v627
    %715 = vrot.lane.b32.xlu0 %v712, 64
    %v716 = vpop.permute.xlu0 %715
    %v718 = vmul.f32 %v711, %v716
    %720 = vrot.lane.b32.xlu0 %v718, 32
    %v721 = vpop.permute.xlu0 %720
    %v723 = vadd.f32 %v713, %v721
    %v724 = vtanh.pop %v723
    %726 = vrot.lane.b32.xlu0 %v724, 64
    %v727 = vpop.permute.xlu0 %726
    %v729 = vmul.f32 %v711, %v727
    %v730 = vmul.f32 %v729, %v226
    %732 = vrot.lane.b32.xlu0 %v730, 32
    %v733 = vpop.permute.xlu0 %732
    %v735 = vsel %vm114, %v733, 0.0
    %736 = vadd.xlane.f32.xlu0 %v735
    %v737 = vpop.xlane.xlu0 %736
    %v738 = vadd.f32 %v737, %v240
    %v739 = vxor.u32 %v738, 2147483648
    %v740 = vmul.f32 %v739, 1.442695
    %v741 = vpow.pop %v740
    %v742 = vadd.f32 %v741, 1.0
    %v743 = vrcp.pop %v742
    %v744 = vmul.f32 1.0, %v743
    %746 = vrot.lane.b32.xlu0 %v744, 2
    %v747 = vpop.permute.xlu0 %746
    %vm749 = vcmask 23568
    %750 = vst.msk [vmem:[#allocation12] sm:$0xff] %vm749, %v747
    %752 = vrot.lane.b32.xlu0 %v729, 32
    %v753 = vpop.permute.xlu0 %752
    %756 = vrot.lane.b32.xlu0 %v620, 64
    %v757 = vpop.permute.xlu0 %756
    %v759 = vsel %vm114, %v753, %v757
    %v761 = vsel %vm122, %v759, 0
    %763 = vmatprep.subr.mxu0 0.0
    %764 = vmatpush1.msra.mxu0 %v102
    %765 = vmatprep.subr.mxu0 0.0
    %766 = vmatpush1.msra.mxu0 %v103
    %767 = vmatprep.subr.mxu0 0.0
    %768 = vmatpush1.msra.mxu0 %v104
    %769 = vmatprep.subr.mxu0 0.0
    %770 = vmatpush1.msra.mxu0 %v105
    %771 = vmatprep.subr.mxu0 0.0
    %772 = vmatpush1.msra.mxu0 %v106
    %773 = vmatprep.subr.mxu0 0.0
    %774 = vmatpush1.msra.mxu0 %v107
    %775 = vmatprep.subr.mxu0 0.0
    %776 = vmatpush1.msra.mxu0 %v108
    %777 = vmatprep.subr.mxu0 0.0
    %778 = vmatpush1.msra.mxu0 %v109
    %779 = vmatprep.subr.mxu0 0.0
    %780 = vmatpush1.msra.mxu0 0.0
    %781 = vmatprep.subr.mxu0 0.0
    %782 = vmatpush1.msra.mxu0 0.0
    %783 = vmatprep.subr.mxu0 0.0
    %784 = vmatpush1.msra.mxu0 0.0
    %785 = vmatprep.subr.mxu0 0.0
    %786 = vmatpush1.msra.mxu0 0.0
    %787 = vmatprep.subr.mxu0 0.0
    %788 = vmatpush1.msra.mxu0 0.0
    %789 = vmatprep.subr.mxu0 0.0
    %790 = vmatpush1.msra.mxu0 0.0
    %791 = vmatprep.subr.mxu0 0.0
    %792 = vmatpush1.msra.mxu0 0.0
    %793 = vmatprep.subr.mxu0 0.0
    %794 = vmatpush1.msra.mxu0 0.0
    %795 = vmatprep.subr.mxu0 0.0
    %796 = vmatpush1.msra.mxu0 0.0
    %797 = vmatprep.subr.mxu0 0.0
    %798 = vmatpush1.msra.mxu0 0.0
    %799 = vmatprep.subr.mxu0 0.0
    %800 = vmatpush1.msra.mxu0 0.0
    %801 = vmatprep.subr.mxu0 0.0
    %802 = vmatpush1.msra.mxu0 0.0
    %803 = vmatprep.subr.mxu0 0.0
    %804 = vmatpush1.msra.mxu0 0.0
    %805 = vmatprep.subr.mxu0 0.0
    %806 = vmatpush1.msra.mxu0 0.0
    %807 = vmatprep.subr.mxu0 0.0
    %808 = vmatpush1.msra.mxu0 0.0
    %809 = vmatprep.subr.mxu0 0.0
    %810 = vmatpush1.msra.mxu0 0.0
    %811 = vmatprep.subr.mxu0 0.0
    %812 = vmatpush1.msra.mxu0 0.0
    %813 = vmatprep.subr.mxu0 0.0
    %814 = vmatpush1.msra.mxu0 0.0
    %815 = vmatprep.subr.mxu0 0.0
    %816 = vmatpush1.msra.mxu0 0.0
    %817 = vmatprep.subr.mxu0 0.0
    %818 = vmatpush1.msra.mxu0 0.0
    %819 = vmatprep.subr.mxu0 0.0
    %820 = vmatpush1.msra.mxu0 0.0
    %821 = vmatprep.subr.mxu0 0.0
    %822 = vmatpush1.msra.mxu0 0.0
    %823 = vmatprep.subr.mxu0 0.0
    %824 = vmatpush1.msra.mxu0 0.0
    %825 = vmatprep.subr.mxu0 0.0
    %826 = vmatpush1.msra.mxu0 0.0
    %827 = vmatprep.mubr.f32.mxu0 0.0
    %828 = vmatmul.mubr.f32.gmra.mrb[0].mxu0 %v761
    %v829 = vpop.f32.mrb[0].mxu0
    %v830 = vadd.f32 %v260, %v829
    %v831 = vpop.f32.mrb[0].mxu0
    %832 = vdwg.mxu0
    %v833 = vxor.u32 %v830, 2147483648
    %v834 = vmul.f32 %v833, 1.442695
    %v835 = vpow.pop %v834
    %v836 = vadd.f32 %v835, 1.0
    %v837 = vrcp.pop %v836
    %v838 = vmul.f32 1.0, %v837
    %v839 = vtanh.pop %v830
    %v840 = vmul.f32 %v838, %v623
    %842 = vrot.lane.b32.xlu0 %v839, 64
    %v843 = vpop.permute.xlu0 %842
    %v845 = vmul.f32 %v838, %v843
    %847 = vrot.lane.b32.xlu0 %v845, 32
    %v848 = vpop.permute.xlu0 %847
    %v850 = vadd.f32 %v840, %v848
    %v851 = vtanh.pop %v850
    %853 = vrot.lane.b32.xlu0 %v851, 64
    %v854 = vpop.permute.xlu0 %853
    %v856 = vmul.f32 %v838, %v854
    %v857 = vsub.f32 1.0, %v744
    %858 = vset.pattern.permute.xlu0 0
    %859 = vperm.xlu0 %858, %v744
    %v860 = vpop.permute.xlu0 %859
    %v862 = vmul.f32 %v860, %v856
    %864 = vset.pattern.permute.xlu0 0
    %865 = vperm.xlu0 %864, %v857
    %v866 = vpop.permute.xlu0 %865
    %v868 = vmul.f32 %v866, %v620
    %v869 = vadd.f32 %v862, %v868
    %v870 = vmul.f32 %v860, %v850
    %v871 = vmul.f32 %v866, %v623
    %v872 = vadd.f32 %v870, %v871
    %s873 = scalar_lea.vmem [#allocation3], 24
    %v874 = vld [vmem:[%s873] sm:$0xff]
    %v875 = vmul.f32 %v729, %v866
    %v876 = vmul.f32 %v723, %v866
    %878 = vrot.lane.b32.xlu0 %v875, 64
    %v879 = vpop.permute.xlu0 %878
    %v881 = vsel %vm114, %v874, %v879
    %v883 = vsel %vm122, %v881, 0
    %885 = vmatprep.subr.mxu0 0.0
    %886 = vmatpush1.msra.mxu0 %v93
    %887 = vmatprep.subr.mxu0 0.0
    %888 = vmatpush1.msra.mxu0 %v94
    %889 = vmatprep.subr.mxu0 0.0
    %890 = vmatpush1.msra.mxu0 %v95
    %891 = vmatprep.subr.mxu0 0.0
    %892 = vmatpush1.msra.mxu0 %v96
    %893 = vmatprep.subr.mxu0 0.0
    %894 = vmatpush1.msra.mxu0 %v97
    %895 = vmatprep.subr.mxu0 0.0
    %896 = vmatpush1.msra.mxu0 %v98
    %897 = vmatprep.subr.mxu0 0.0
    %898 = vmatpush1.msra.mxu0 %v99
    %899 = vmatprep.subr.mxu0 0.0
    %900 = vmatpush1.msra.mxu0 %v100
    %901 = vmatprep.subr.mxu0 0.0
    %902 = vmatpush1.msra.mxu0 0.0
    %903 = vmatprep.subr.mxu0 0.0
    %904 = vmatpush1.msra.mxu0 0.0
    %905 = vmatprep.subr.mxu0 0.0
    %906 = vmatpush1.msra.mxu0 0.0
    %907 = vmatprep.subr.mxu0 0.0
    %908 = vmatpush1.msra.mxu0 0.0
    %909 = vmatprep.subr.mxu0 0.0
    %910 = vmatpush1.msra.mxu0 0.0
    %911 = vmatprep.subr.mxu0 0.0
    %912 = vmatpush1.msra.mxu0 0.0
    %913 = vmatprep.subr.mxu0 0.0
    %914 = vmatpush1.msra.mxu0 0.0
    %915 = vmatprep.subr.mxu0 0.0
    %916 = vmatpush1.msra.mxu0 0.0
    %917 = vmatprep.subr.mxu0 0.0
    %918 = vmatpush1.msra.mxu0 0.0
    %919 = vmatprep.subr.mxu0 0.0
    %920 = vmatpush1.msra.mxu0 0.0
    %921 = vmatprep.subr.mxu0 0.0
    %922 = vmatpush1.msra.mxu0 0.0
    %923 = vmatprep.subr.mxu0 0.0
    %924 = vmatpush1.msra.mxu0 0.0
    %925 = vmatprep.subr.mxu0 0.0
    %926 = vmatpush1.msra.mxu0 0.0
    %927 = vmatprep.subr.mxu0 0.0
    %928 = vmatpush1.msra.mxu0 0.0
    %929 = vmatprep.subr.mxu0 0.0
    %930 = vmatpush1.msra.mxu0 0.0
    %931 = vmatprep.subr.mxu0 0.0
    %932 = vmatpush1.msra.mxu0 0.0
    %933 = vmatprep.subr.mxu0 0.0
    %934 = vmatpush1.msra.mxu0 0.0
    %935 = vmatprep.subr.mxu0 0.0
    %936 = vmatpush1.msra.mxu0 0.0
    %937 = vmatprep.subr.mxu0 0.0
    %938 = vmatpush1.msra.mxu0 0.0
    %939 = vmatprep.subr.mxu0 0.0
    %940 = vmatpush1.msra.mxu0 0.0
    %941 = vmatprep.subr.mxu0 0.0
    %942 = vmatpush1.msra.mxu0 0.0
    %943 = vmatprep.subr.mxu0 0.0
    %944 = vmatpush1.msra.mxu0 0.0
    %945 = vmatprep.subr.mxu0 0.0
    %946 = vmatpush1.msra.mxu0 0.0
    %947 = vmatprep.subr.mxu0 0.0
    %948 = vmatpush1.msra.mxu0 0.0
    %949 = vmatprep.mubr.f32.mxu0 0.0
    %950 = vmatmul.mubr.f32.gmra.mrb[0].mxu0 %v883
    %v951 = vpop.f32.mrb[0].mxu0
    %v952 = vadd.f32 %v120, %v951
    %v953 = vpop.f32.mrb[0].mxu0
    %954 = vdwg.mxu0
    %v955 = vxor.u32 %v952, 2147483648
    %v956 = vmul.f32 %v955, 1.442695
    %v957 = vpow.pop %v956
    %v958 = vadd.f32 %v957, 1.0
    %v959 = vrcp.pop %v958
    %v960 = vmul.f32 1.0, %v959
    %v961 = vtanh.pop %v952
    %v962 = vmul.f32 %v960, %v876
    %964 = vrot.lane.b32.xlu0 %v961, 64
    %v965 = vpop.permute.xlu0 %964
    %v967 = vmul.f32 %v960, %v965
    %969 = vrot.lane.b32.xlu0 %v967, 32
    %v970 = vpop.permute.xlu0 %969
    %v972 = vadd.f32 %v962, %v970
    %v973 = vtanh.pop %v972
    %975 = vrot.lane.b32.xlu0 %v973, 64
    %v976 = vpop.permute.xlu0 %975
    %v978 = vmul.f32 %v960, %v976
    %v979 = vmul.f32 %v978, %v226
    %981 = vrot.lane.b32.xlu0 %v979, 32
    %v982 = vpop.permute.xlu0 %981
    %v984 = vsel %vm114, %v982, 0.0
    %985 = vadd.xlane.f32.xlu0 %v984
    %v986 = vpop.xlane.xlu0 %985
    %v987 = vadd.f32 %v986, %v240
    %v988 = vxor.u32 %v987, 2147483648
    %v989 = vmul.f32 %v988, 1.442695
    %v990 = vpow.pop %v989
    %v991 = vadd.f32 %v990, 1.0
    %v992 = vrcp.pop %v991
    %v993 = vmul.f32 1.0, %v992
    %995 = vrot.lane.b32.xlu0 %v993, 3
    %v996 = vpop.permute.xlu0 %995
    %vm998 = vcmask 31768
    %999 = vst.msk [vmem:[#allocation12] sm:$0xff] %vm998, %v996
    %1001 = vrot.lane.b32.xlu0 %v978, 32
    %v1002 = vpop.permute.xlu0 %1001
    %1005 = vrot.lane.b32.xlu0 %v869, 64
    %v1006 = vpop.permute.xlu0 %1005
    %v1008 = vsel %vm114, %v1002, %v1006
    %v1010 = vsel %vm122, %v1008, 0
    %1012 = vmatprep.subr.mxu0 0.0
    %1013 = vmatpush1.msra.mxu0 %v102
    %1014 = vmatprep.subr.mxu0 0.0
    %1015 = vmatpush1.msra.mxu0 %v103
    %1016 = vmatprep.subr.mxu0 0.0
    %1017 = vmatpush1.msra.mxu0 %v104
    %1018 = vmatprep.subr.mxu0 0.0
    %1019 = vmatpush1.msra.mxu0 %v105
    %1020 = vmatprep.subr.mxu0 0.0
    %1021 = vmatpush1.msra.mxu0 %v106
    %1022 = vmatprep.subr.mxu0 0.0
    %1023 = vmatpush1.msra.mxu0 %v107
    %1024 = vmatprep.subr.mxu0 0.0
    %1025 = vmatpush1.msra.mxu0 %v108
    %1026 = vmatprep.subr.mxu0 0.0
    %1027 = vmatpush1.msra.mxu0 %v109
    %1028 = vmatprep.subr.mxu0 0.0
    %1029 = vmatpush1.msra.mxu0 0.0
    %1030 = vmatprep.subr.mxu0 0.0
    %1031 = vmatpush1.msra.mxu0 0.0
    %1032 = vmatprep.subr.mxu0 0.0
    %1033 = vmatpush1.msra.mxu0 0.0
    %1034 = vmatprep.subr.mxu0 0.0
    %1035 = vmatpush1.msra.mxu0 0.0
    %1036 = vmatprep.subr.mxu0 0.0
    %1037 = vmatpush1.msra.mxu0 0.0
    %1038 = vmatprep.subr.mxu0 0.0
    %1039 = vmatpush1.msra.mxu0 0.0
    %1040 = vmatprep.subr.mxu0 0.0
    %1041 = vmatpush1.msra.mxu0 0.0
    %1042 = vmatprep.subr.mxu0 0.0
    %1043 = vmatpush1.msra.mxu0 0.0
    %1044 = vmatprep.subr.mxu0 0.0
    %1045 = vmatpush1.msra.mxu0 0.0
    %1046 = vmatprep.subr.mxu0 0.0
    %1047 = vmatpush1.msra.mxu0 0.0
    %1048 = vmatprep.subr.mxu0 0.0
    %1049 = vmatpush1.msra.mxu0 0.0
    %1050 = vmatprep.subr.mxu0 0.0
    %1051 = vmatpush1.msra.mxu0 0.0
    %1052 = vmatprep.subr.mxu0 0.0
    %1053 = vmatpush1.msra.mxu0 0.0
    %1054 = vmatprep.subr.mxu0 0.0
    %1055 = vmatpush1.msra.mxu0 0.0
    %1056 = vmatprep.subr.mxu0 0.0
    %1057 = vmatpush1.msra.mxu0 0.0
    %1058 = vmatprep.subr.mxu0 0.0
    %1059 = vmatpush1.msra.mxu0 0.0
    %1060 = vmatprep.subr.mxu0 0.0
    %1061 = vmatpush1.msra.mxu0 0.0
    %1062 = vmatprep.subr.mxu0 0.0
    %1063 = vmatpush1.msra.mxu0 0.0
    %1064 = vmatprep.subr.mxu0 0.0
    %1065 = vmatpush1.msra.mxu0 0.0
    %1066 = vmatprep.subr.mxu0 0.0
    %1067 = vmatpush1.msra.mxu0 0.0
    %1068 = vmatprep.subr.mxu0 0.0
    %1069 = vmatpush1.msra.mxu0 0.0
    %1070 = vmatprep.subr.mxu0 0.0
    %1071 = vmatpush1.msra.mxu0 0.0
    %1072 = vmatprep.subr.mxu0 0.0
    %1073 = vmatpush1.msra.mxu0 0.0
    %1074 = vmatprep.subr.mxu0 0.0
    %1075 = vmatpush1.msra.mxu0 0.0
    %1076 = vmatprep.mubr.f32.mxu0 0.0
    %1077 = vmatmul.mubr.f32.gmra.mrb[0].mxu0 %v1010
    %v1078 = vpop.f32.mrb[0].mxu0
    %v1079 = vadd.f32 %v260, %v1078
    %v1080 = vpop.f32.mrb[0].mxu0
    %1081 = vdwg.mxu0
    %v1082 = vxor.u32 %v1079, 2147483648
    %v1083 = vmul.f32 %v1082, 1.442695
    %v1084 = vpow.pop %v1083
    %v1085 = vadd.f32 %v1084, 1.0
    %v1086 = vrcp.pop %v1085
    %v1087 = vmul.f32 1.0, %v1086
    %v1088 = vtanh.pop %v1079
    %v1089 = vmul.f32 %v1087, %v872
    %1091 = vrot.lane.b32.xlu0 %v1088, 64
    %v1092 = vpop.permute.xlu0 %1091
    %v1094 = vmul.f32 %v1087, %v1092
    %1096 = vrot.lane.b32.xlu0 %v1094, 32
    %v1097 = vpop.permute.xlu0 %1096
    %v1099 = vadd.f32 %v1089, %v1097
    %v1100 = vtanh.pop %v1099
    %1102 = vrot.lane.b32.xlu0 %v1100, 64
    %v1103 = vpop.permute.xlu0 %1102
    %v1105 = vmul.f32 %v1087, %v1103
    %v1106 = vsub.f32 1.0, %v993
    %1107 = vset.pattern.permute.xlu0 0
    %1108 = vperm.xlu0 %1107, %v993
    %v1109 = vpop.permute.xlu0 %1108
    %v1111 = vmul.f32 %v1109, %v1105
    %1113 = vset.pattern.permute.xlu0 0
    %1114 = vperm.xlu0 %1113, %v1106
    %v1115 = vpop.permute.xlu0 %1114
    %v1117 = vmul.f32 %v1115, %v869
    %v1118 = vadd.f32 %v1111, %v1117
    %v1119 = vmul.f32 %v1109, %v1099
    %v1120 = vmul.f32 %v1115, %v872
    %v1121 = vadd.f32 %v1119, %v1120
    %s1122 = scalar_lea.vmem [#allocation3], 32
    %v1123 = vld [vmem:[%s1122] sm:$0xff]
    %v1124 = vmul.f32 %v978, %v1115
    %v1125 = vmul.f32 %v972, %v1115
    %1127 = vrot.lane.b32.xlu0 %v1124, 64
    %v1128 = vpop.permute.xlu0 %1127
    %v1130 = vsel %vm114, %v1123, %v1128
    %v1132 = vsel %vm122, %v1130, 0
    %1134 = vmatprep.subr.mxu0 0.0
    %1135 = vmatpush1.msra.mxu0 %v93
    %1136 = vmatprep.subr.mxu0 0.0
    %1137 = vmatpush1.msra.mxu0 %v94
    %1138 = vmatprep.subr.mxu0 0.0
    %1139 = vmatpush1.msra.mxu0 %v95
    %1140 = vmatprep.subr.mxu0 0.0
    %1141 = vmatpush1.msra.mxu0 %v96
    %1142 = vmatprep.subr.mxu0 0.0
    %1143 = vmatpush1.msra.mxu0 %v97
    %1144 = vmatprep.subr.mxu0 0.0
    %1145 = vmatpush1.msra.mxu0 %v98
    %1146 = vmatprep.subr.mxu0 0.0
    %1147 = vmatpush1.msra.mxu0 %v99
    %1148 = vmatprep.subr.mxu0 0.0
    %1149 = vmatpush1.msra.mxu0 %v100
    %1150 = vmatprep.subr.mxu0 0.0
    %1151 = vmatpush1.msra.mxu0 0.0
    %1152 = vmatprep.subr.mxu0 0.0
    %1153 = vmatpush1.msra.mxu0 0.0
    %1154 = vmatprep.subr.mxu0 0.0
    %1155 = vmatpush1.msra.mxu0 0.0
    %1156 = vmatprep.subr.mxu0 0.0
    %1157 = vmatpush1.msra.mxu0 0.0
    %1158 = vmatprep.subr.mxu0 0.0
    %1159 = vmatpush1.msra.mxu0 0.0
    %1160 = vmatprep.subr.mxu0 0.0
    %1161 = vmatpush1.msra.mxu0 0.0
    %1162 = vmatprep.subr.mxu0 0.0
    %1163 = vmatpush1.msra.mxu0 0.0
    %1164 = vmatprep.subr.mxu0 0.0
    %1165 = vmatpush1.msra.mxu0 0.0
    %1166 = vmatprep.subr.mxu0 0.0
    %1167 = vmatpush1.msra.mxu0 0.0
    %1168 = vmatprep.subr.mxu0 0.0
    %1169 = vmatpush1.msra.mxu0 0.0
    %1170 = vmatprep.subr.mxu0 0.0
    %1171 = vmatpush1.msra.mxu0 0.0
    %1172 = vmatprep.subr.mxu0 0.0
    %1173 = vmatpush1.msra.mxu0 0.0
    %1174 = vmatprep.subr.mxu0 0.0
    %1175 = vmatpush1.msra.mxu0 0.0
    %1176 = vmatprep.subr.mxu0 0.0
    %1177 = vmatpush1.msra.mxu0 0.0
    %1178 = vmatprep.subr.mxu0 0.0
    %1179 = vmatpush1.msra.mxu0 0.0
    %1180 = vmatprep.subr.mxu0 0.0
    %1181 = vmatpush1.msra.mxu0 0.0
    %1182 = vmatprep.subr.mxu0 0.0
    %1183 = vmatpush1.msra.mxu0 0.0
    %1184 = vmatprep.subr.mxu0 0.0
    %1185 = vmatpush1.msra.mxu0 0.0
    %1186 = vmatprep.subr.mxu0 0.0
    %1187 = vmatpush1.msra.mxu0 0.0
    %1188 = vmatprep.subr.mxu0 0.0
    %1189 = vmatpush1.msra.mxu0 0.0
    %1190 = vmatprep.subr.mxu0 0.0
    %1191 = vmatpush1.msra.mxu0 0.0
    %1192 = vmatprep.subr.mxu0 0.0
    %1193 = vmatpush1.msra.mxu0 0.0
    %1194 = vmatprep.subr.mxu0 0.0
    %1195 = vmatpush1.msra.mxu0 0.0
    %1196 = vmatprep.subr.mxu0 0.0
    %1197 = vmatpush1.msra.mxu0 0.0
    %1198 = vmatprep.mubr.f32.mxu0 0.0
    %1199 = vmatmul.mubr.f32.gmra.mrb[0].mxu0 %v1132
    %v1200 = vpop.f32.mrb[0].mxu0
    %v1201 = vadd.f32 %v120, %v1200
    %v1202 = vpop.f32.mrb[0].mxu0
    %1203 = vdwg.mxu0
    %v1204 = vxor.u32 %v1201, 2147483648
    %v1205 = vmul.f32 %v1204, 1.442695
    %v1206 = vpow.pop %v1205
    %v1207 = vadd.f32 %v1206, 1.0
    %v1208 = vrcp.pop %v1207
    %v1209 = vmul.f32 1.0, %v1208
    %v1210 = vtanh.pop %v1201
    %v1211 = vmul.f32 %v1209, %v1125
    %1213 = vrot.lane.b32.xlu0 %v1210, 64
    %v1214 = vpop.permute.xlu0 %1213
    %v1216 = vmul.f32 %v1209, %v1214
    %1218 = vrot.lane.b32.xlu0 %v1216, 32
    %v1219 = vpop.permute.xlu0 %1218
    %v1221 = vadd.f32 %v1211, %v1219
    %v1222 = vtanh.pop %v1221
    %1224 = vrot.lane.b32.xlu0 %v1222, 64
    %v1225 = vpop.permute.xlu0 %1224
    %v1227 = vmul.f32 %v1209, %v1225
    %v1228 = vmul.f32 %v1227, %v226
    %1230 = vrot.lane.b32.xlu0 %v1228, 32
    %v1231 = vpop.permute.xlu0 %1230
    %v1233 = vsel %vm114, %v1231, 0.0
    %1234 = vadd.xlane.f32.xlu0 %v1233
    %v1235 = vpop.xlane.xlu0 %1234
    %v1236 = vadd.f32 %v1235, %v240
    %v1237 = vxor.u32 %v1236, 2147483648
    %v1238 = vmul.f32 %v1237, 1.442695
    %v1239 = vpow.pop %v1238
    %v1240 = vadd.f32 %v1239, 1.0
    %v1241 = vrcp.pop %v1240
    %v1242 = vmul.f32 1.0, %v1241
    %1244 = vrot.lane.b32.xlu0 %v1242, 4
    %v1245 = vpop.permute.xlu0 %1244
    %vm1247 = vcmask 39968
    %1248 = vst.msk [vmem:[#allocation12] sm:$0xff] %vm1247, %v1245
    %1250 = vrot.lane.b32.xlu0 %v1227, 32
    %v1251 = vpop.permute.xlu0 %1250
    %1254 = vrot.lane.b32.xlu0 %v1118, 64
    %v1255 = vpop.permute.xlu0 %1254
    %v1257 = vsel %vm114, %v1251, %v1255
    %v1259 = vsel %vm122, %v1257, 0
    %1261 = vmatprep.subr.mxu0 0.0
    %1262 = vmatpush1.msra.mxu0 %v102
    %1263 = vmatprep.subr.mxu0 0.0
    %1264 = vmatpush1.msra.mxu0 %v103
    %1265 = vmatprep.subr.mxu0 0.0
    %1266 = vmatpush1.msra.mxu0 %v104
    %1267 = vmatprep.subr.mxu0 0.0
    %1268 = vmatpush1.msra.mxu0 %v105
    %1269 = vmatprep.subr.mxu0 0.0
    %1270 = vmatpush1.msra.mxu0 %v106
    %1271 = vmatprep.subr.mxu0 0.0
    %1272 = vmatpush1.msra.mxu0 %v107
    %1273 = vmatprep.subr.mxu0 0.0
    %1274 = vmatpush1.msra.mxu0 %v108
    %1275 = vmatprep.subr.mxu0 0.0
    %1276 = vmatpush1.msra.mxu0 %v109
    %1277 = vmatprep.subr.mxu0 0.0
    %1278 = vmatpush1.msra.mxu0 0.0
    %1279 = vmatprep.subr.mxu0 0.0
    %1280 = vmatpush1.msra.mxu0 0.0
    %1281 = vmatprep.subr.mxu0 0.0
    %1282 = vmatpush1.msra.mxu0 0.0
    %1283 = vmatprep.subr.mxu0 0.0
    %1284 = vmatpush1.msra.mxu0 0.0
    %1285 = vmatprep.subr.mxu0 0.0
    %1286 = vmatpush1.msra.mxu0 0.0
    %1287 = vmatprep.subr.mxu0 0.0
    %1288 = vmatpush1.msra.mxu0 0.0
    %1289 = vmatprep.subr.mxu0 0.0
    %1290 = vmatpush1.msra.mxu0 0.0
    %1291 = vmatprep.subr.mxu0 0.0
    %1292 = vmatpush1.msra.mxu0 0.0
    %1293 = vmatprep.subr.mxu0 0.0
    %1294 = vmatpush1.msra.mxu0 0.0
    %1295 = vmatprep.subr.mxu0 0.0
    %1296 = vmatpush1.msra.mxu0 0.0
    %1297 = vmatprep.subr.mxu0 0.0
    %1298 = vmatpush1.msra.mxu0 0.0
    %1299 = vmatprep.subr.mxu0 0.0
    %1300 = vmatpush1.msra.mxu0 0.0
    %1301 = vmatprep.subr.mxu0 0.0
    %1302 = vmatpush1.msra.mxu0 0.0
    %1303 = vmatprep.subr.mxu0 0.0
    %1304 = vmatpush1.msra.mxu0 0.0
    %1305 = vmatprep.subr.mxu0 0.0
    %1306 = vmatpush1.msra.mxu0 0.0
    %1307 = vmatprep.subr.mxu0 0.0
    %1308 = vmatpush1.msra.mxu0 0.0
    %1309 = vmatprep.subr.mxu0 0.0
    %1310 = vmatpush1.msra.mxu0 0.0
    %1311 = vmatprep.subr.mxu0 0.0
    %1312 = vmatpush1.msra.mxu0 0.0
    %1313 = vmatprep.subr.mxu0 0.0
    %1314 = vmatpush1.msra.mxu0 0.0
    %1315 = vmatprep.subr.mxu0 0.0
    %1316 = vmatpush1.msra.mxu0 0.0
    %1317 = vmatprep.subr.mxu0 0.0
    %1318 = vmatpush1.msra.mxu0 0.0
    %1319 = vmatprep.subr.mxu0 0.0
    %1320 = vmatpush1.msra.mxu0 0.0
    %1321 = vmatprep.subr.mxu0 0.0
    %1322 = vmatpush1.msra.mxu0 0.0
    %1323 = vmatprep.subr.mxu0 0.0
    %1324 = vmatpush1.msra.mxu0 0.0
    %1325 = vmatprep.mubr.f32.mxu0 0.0
    %1326 = vmatmul.mubr.f32.gmra.mrb[0].mxu0 %v1259
    %v1327 = vpop.f32.mrb[0].mxu0
    %v1328 = vadd.f32 %v260, %v1327
    %v1329 = vpop.f32.mrb[0].mxu0
    %1330 = vdwg.mxu0
    %v1331 = vxor.u32 %v1328, 2147483648
    %v1332 = vmul.f32 %v1331, 1.442695
    %v1333 = vpow.pop %v1332
    %v1334 = vadd.f32 %v1333, 1.0
    %v1335 = vrcp.pop %v1334
    %v1336 = vmul.f32 1.0, %v1335
    %v1337 = vtanh.pop %v1328
    %v1338 = vmul.f32 %v1336, %v1121
    %1340 = vrot.lane.b32.xlu0 %v1337, 64
    %v1341 = vpop.permute.xlu0 %1340
    %v1343 = vmul.f32 %v1336, %v1341
    %1345 = vrot.lane.b32.xlu0 %v1343, 32
    %v1346 = vpop.permute.xlu0 %1345
    %v1348 = vadd.f32 %v1338, %v1346
    %v1349 = vtanh.pop %v1348
    %1351 = vrot.lane.b32.xlu0 %v1349, 64
    %v1352 = vpop.permute.xlu0 %1351
    %v1354 = vmul.f32 %v1336, %v1352
    %v1355 = vsub.f32 1.0, %v1242
    %1356 = vset.pattern.permute.xlu0 0
    %1357 = vperm.xlu0 %1356, %v1242
    %v1358 = vpop.permute.xlu0 %1357
    %v1360 = vmul.f32 %v1358, %v1354
    %1362 = vset.pattern.permute.xlu0 0
    %1363 = vperm.xlu0 %1362, %v1355
    %v1364 = vpop.permute.xlu0 %1363
    %v1366 = vmul.f32 %v1364, %v1118
    %v1367 = vadd.f32 %v1360, %v1366
    %v1368 = vmul.f32 %v1358, %v1348
    %v1369 = vmul.f32 %v1364, %v1121
    %v1370 = vadd.f32 %v1368, %v1369
    %s1371 = scalar_lea.vmem [#allocation3], 40
    %v1372 = vld [vmem:[%s1371] sm:$0xff]
    %v1373 = vmul.f32 %v1227, %v1364
    %v1374 = vmul.f32 %v1221, %v1364
    %1376 = vrot.lane.b32.xlu0 %v1373, 64
    %v1377 = vpop.permute.xlu0 %1376
    %v1379 = vsel %vm114, %v1372, %v1377
    %v1381 = vsel %vm122, %v1379, 0
    %1383 = vmatprep.subr.mxu0 0.0
    %1384 = vmatpush1.msra.mxu0 %v93
    %1385 = vmatprep.subr.mxu0 0.0
    %1386 = vmatpush1.msra.mxu0 %v94
    %1387 = vmatprep.subr.mxu0 0.0
    %1388 = vmatpush1.msra.mxu0 %v95
    %1389 = vmatprep.subr.mxu0 0.0
    %1390 = vmatpush1.msra.mxu0 %v96
    %1391 = vmatprep.subr.mxu0 0.0
    %1392 = vmatpush1.msra.mxu0 %v97
    %1393 = vmatprep.subr.mxu0 0.0
    %1394 = vmatpush1.msra.mxu0 %v98
    %1395 = vmatprep.subr.mxu0 0.0
    %1396 = vmatpush1.msra.mxu0 %v99
    %1397 = vmatprep.subr.mxu0 0.0
    %1398 = vmatpush1.msra.mxu0 %v100
    %1399 = vmatprep.subr.mxu0 0.0
    %1400 = vmatpush1.msra.mxu0 0.0
    %1401 = vmatprep.subr.mxu0 0.0
    %1402 = vmatpush1.msra.mxu0 0.0
    %1403 = vmatprep.subr.mxu0 0.0
    %1404 = vmatpush1.msra.mxu0 0.0
    %1405 = vmatprep.subr.mxu0 0.0
    %1406 = vmatpush1.msra.mxu0 0.0
    %1407 = vmatprep.subr.mxu0 0.0
    %1408 = vmatpush1.msra.mxu0 0.0
    %1409 = vmatprep.subr.mxu0 0.0
    %1410 = vmatpush1.msra.mxu0 0.0
    %1411 = vmatprep.subr.mxu0 0.0
    %1412 = vmatpush1.msra.mxu0 0.0
    %1413 = vmatprep.subr.mxu0 0.0
    %1414 = vmatpush1.msra.mxu0 0.0
    %1415 = vmatprep.subr.mxu0 0.0
    %1416 = vmatpush1.msra.mxu0 0.0
    %1417 = vmatprep.subr.mxu0 0.0
    %1418 = vmatpush1.msra.mxu0 0.0
    %1419 = vmatprep.subr.mxu0 0.0
    %1420 = vmatpush1.msra.mxu0 0.0
    %1421 = vmatprep.subr.mxu0 0.0
    %1422 = vmatpush1.msra.mxu0 0.0
    %1423 = vmatprep.subr.mxu0 0.0
    %1424 = vmatpush1.msra.mxu0 0.0
    %1425 = vmatprep.subr.mxu0 0.0
    %1426 = vmatpush1.msra.mxu0 0.0
    %1427 = vmatprep.subr.mxu0 0.0
    %1428 = vmatpush1.msra.mxu0 0.0
    %1429 = vmatprep.subr.mxu0 0.0
    %1430 = vmatpush1.msra.mxu0 0.0
    %1431 = vmatprep.subr.mxu0 0.0
    %1432 = vmatpush1.msra.mxu0 0.0
    %1433 = vmatprep.subr.mxu0 0.0
    %1434 = vmatpush1.msra.mxu0 0.0
    %1435 = vmatprep.subr.mxu0 0.0
    %1436 = vmatpush1.msra.mxu0 0.0
    %1437 = vmatprep.subr.mxu0 0.0
    %1438 = vmatpush1.msra.mxu0 0.0
    %1439 = vmatprep.subr.mxu0 0.0
    %1440 = vmatpush1.msra.mxu0 0.0
    %1441 = vmatprep.subr.mxu0 0.0
    %1442 = vmatpush1.msra.mxu0 0.0
    %1443 = vmatprep.subr.mxu0 0.0
    %1444 = vmatpush1.msra.mxu0 0.0
    %1445 = vmatprep.subr.mxu0 0.0
    %1446 = vmatpush1.msra.mxu0 0.0
    %1447 = vmatprep.mubr.f32.mxu0 0.0
    %1448 = vmatmul.mubr.f32.gmra.mrb[0].mxu0 %v1381
    %v1449 = vpop.f32.mrb[0].mxu0
    %v1450 = vadd.f32 %v120, %v1449
    %v1451 = vpop.f32.mrb[0].mxu0
    %1452 = vdwg.mxu0
    %v1453 = vxor.u32 %v1450, 2147483648
    %v1454 = vmul.f32 %v1453, 1.442695
    %v1455 = vpow.pop %v1454
    %v1456 = vadd.f32 %v1455, 1.0
    %v1457 = vrcp.pop %v1456
    %v1458 = vmul.f32 1.0, %v1457
    %v1459 = vtanh.pop %v1450
    %v1460 = vmul.f32 %v1458, %v1374
    %1462 = vrot.lane.b32.xlu0 %v1459, 64
    %v1463 = vpop.permute.xlu0 %1462
    %v1465 = vmul.f32 %v1458, %v1463
    %1467 = vrot.lane.b32.xlu0 %v1465, 32
    %v1468 = vpop.permute.xlu0 %1467
    %v1470 = vadd.f32 %v1460, %v1468
    %v1471 = vtanh.pop %v1470
    %1473 = vrot.lane.b32.xlu0 %v1471, 64
    %v1474 = vpop.permute.xlu0 %1473
    %v1476 = vmul.f32 %v1458, %v1474
    %v1477 = vmul.f32 %v1476, %v226
    %1479 = vrot.lane.b32.xlu0 %v1477, 32
    %v1480 = vpop.permute.xlu0 %1479
    %v1482 = vsel %vm114, %v1480, 0.0
    %1483 = vadd.xlane.f32.xlu0 %v1482
    %v1484 = vpop.xlane.xlu0 %1483
    %v1485 = vadd.f32 %v1484, %v240
    %v1486 = vxor.u32 %v1485, 2147483648
    %v1487 = vmul.f32 %v1486, 1.442695
    %v1488 = vpow.pop %v1487
    %v1489 = vadd.f32 %v1488, 1.0
    %v1490 = vrcp.pop %v1489
    %v1491 = vmul.f32 1.0, %v1490
    %1493 = vrot.lane.b32.xlu0 %v1491, 5
    %v1494 = vpop.permute.xlu0 %1493
    %vm1496 = vcmask 48168
    %1497 = vst.msk [vmem:[#allocation12] sm:$0xff] %vm1496, %v1494
    %1499 = vrot.lane.b32.xlu0 %v1476, 32
    %v1500 = vpop.permute.xlu0 %1499
    %1503 = vrot.lane.b32.xlu0 %v1367, 64
    %v1504 = vpop.permute.xlu0 %1503
    %v1506 = vsel %vm114, %v1500, %v1504
    %v1508 = vsel %vm122, %v1506, 0
    %1510 = vmatprep.subr.mxu0 0.0
    %1511 = vmatpush1.msra.mxu0 %v102
    %1512 = vmatprep.subr.mxu0 0.0
    %1513 = vmatpush1.msra.mxu0 %v103
    %1514 = vmatprep.subr.mxu0 0.0
    %1515 = vmatpush1.msra.mxu0 %v104
    %1516 = vmatprep.subr.mxu0 0.0
    %1517 = vmatpush1.msra.mxu0 %v105
    %1518 = vmatprep.subr.mxu0 0.0
    %1519 = vmatpush1.msra.mxu0 %v106
    %1520 = vmatprep.subr.mxu0 0.0
    %1521 = vmatpush1.msra.mxu0 %v107
    %1522 = vmatprep.subr.mxu0 0.0
    %1523 = vmatpush1.msra.mxu0 %v108
    %1524 = vmatprep.subr.mxu0 0.0
    %1525 = vmatpush1.msra.mxu0 %v109
    %1526 = vmatprep.subr.mxu0 0.0
    %1527 = vmatpush1.msra.mxu0 0.0
    %1528 = vmatprep.subr.mxu0 0.0
    %1529 = vmatpush1.msra.mxu0 0.0
    %1530 = vmatprep.subr.mxu0 0.0
    %1531 = vmatpush1.msra.mxu0 0.0
    %1532 = vmatprep.subr.mxu0 0.0
    %1533 = vmatpush1.msra.mxu0 0.0
    %1534 = vmatprep.subr.mxu0 0.0
    %1535 = vmatpush1.msra.mxu0 0.0
    %1536 = vmatprep.subr.mxu0 0.0
    %1537 = vmatpush1.msra.mxu0 0.0
    %1538 = vmatprep.subr.mxu0 0.0
    %1539 = vmatpush1.msra.mxu0 0.0
    %1540 = vmatprep.subr.mxu0 0.0
    %1541 = vmatpush1.msra.mxu0 0.0
    %1542 = vmatprep.subr.mxu0 0.0
    %1543 = vmatpush1.msra.mxu0 0.0
    %1544 = vmatprep.subr.mxu0 0.0
    %1545 = vmatpush1.msra.mxu0 0.0
    %1546 = vmatprep.subr.mxu0 0.0
    %1547 = vmatpush1.msra.mxu0 0.0
    %1548 = vmatprep.subr.mxu0 0.0
    %1549 = vmatpush1.msra.mxu0 0.0
    %1550 = vmatprep.subr.mxu0 0.0
    %1551 = vmatpush1.msra.mxu0 0.0
    %1552 = vmatprep.subr.mxu0 0.0
    %1553 = vmatpush1.msra.mxu0 0.0
    %1554 = vmatprep.subr.mxu0 0.0
    %1555 = vmatpush1.msra.mxu0 0.0
    %1556 = vmatprep.subr.mxu0 0.0
    %1557 = vmatpush1.msra.mxu0 0.0
    %1558 = vmatprep.subr.mxu0 0.0
    %1559 = vmatpush1.msra.mxu0 0.0
    %1560 = vmatprep.subr.mxu0 0.0
    %1561 = vmatpush1.msra.mxu0 0.0
    %1562 = vmatprep.subr.mxu0 0.0
    %1563 = vmatpush1.msra.mxu0 0.0
    %1564 = vmatprep.subr.mxu0 0.0
    %1565 = vmatpush1.msra.mxu0 0.0
    %1566 = vmatprep.subr.mxu0 0.0
    %1567 = vmatpush1.msra.mxu0 0.0
    %1568 = vmatprep.subr.mxu0 0.0
    %1569 = vmatpush1.msra.mxu0 0.0
    %1570 = vmatprep.subr.mxu0 0.0
    %1571 = vmatpush1.msra.mxu0 0.0
    %1572 = vmatprep.subr.mxu0 0.0
    %1573 = vmatpush1.msra.mxu0 0.0
    %1574 = vmatprep.mubr.f32.mxu0 0.0
    %1575 = vmatmul.mubr.f32.gmra.mrb[0].mxu0 %v1508
    %v1576 = vpop.f32.mrb[0].mxu0
    %v1577 = vadd.f32 %v260, %v1576
    %v1578 = vpop.f32.mrb[0].mxu0
    %1579 = vdwg.mxu0
    %v1580 = vxor.u32 %v1577, 2147483648
    %v1581 = vmul.f32 %v1580, 1.442695
    %v1582 = vpow.pop %v1581
    %v1583 = vadd.f32 %v1582, 1.0
    %v1584 = vrcp.pop %v1583
    %v1585 = vmul.f32 1.0, %v1584
    %v1586 = vtanh.pop %v1577
    %v1587 = vmul.f32 %v1585, %v1370
    %1589 = vrot.lane.b32.xlu0 %v1586, 64
    %v1590 = vpop.permute.xlu0 %1589
    %v1592 = vmul.f32 %v1585, %v1590
    %1594 = vrot.lane.b32.xlu0 %v1592, 32
    %v1595 = vpop.permute.xlu0 %1594
    %v1597 = vadd.f32 %v1587, %v1595
    %v1598 = vtanh.pop %v1597
    %1600 = vrot.lane.b32.xlu0 %v1598, 64
    %v1601 = vpop.permute.xlu0 %1600
    %v1603 = vmul.f32 %v1585, %v1601
    %v1604 = vsub.f32 1.0, %v1491
    %1605 = vset.pattern.permute.xlu0 0
    %1606 = vperm.xlu0 %1605, %v1491
    %v1607 = vpop.permute.xlu0 %1606
    %v1609 = vmul.f32 %v1607, %v1603
    %1611 = vset.pattern.permute.xlu0 0
    %1612 = vperm.xlu0 %1611, %v1604
    %v1613 = vpop.permute.xlu0 %1612
    %v1615 = vmul.f32 %v1613, %v1367
    %v1616 = vadd.f32 %v1609, %v1615
    %v1617 = vmul.f32 %v1607, %v1597
    %v1618 = vmul.f32 %v1613, %v1370
    %v1619 = vadd.f32 %v1617, %v1618
    %s1620 = scalar_lea.vmem [#allocation3], 48
    %v1621 = vld [vmem:[%s1620] sm:$0xff]
    %v1622 = vmul.f32 %v1476, %v1613
    %v1623 = vmul.f32 %v1470, %v1613
    %1625 = vrot.lane.b32.xlu0 %v1622, 64
    %v1626 = vpop.permute.xlu0 %1625
    %v1628 = vsel %vm114, %v1621, %v1626
    %v1630 = vsel %vm122, %v1628, 0
    %1632 = vmatprep.subr.mxu0 0.0
    %1633 = vmatpush1.msra.mxu0 %v93
    %1634 = vmatprep.subr.mxu0 0.0
    %1635 = vmatpush1.msra.mxu0 %v94
    %1636 = vmatprep.subr.mxu0 0.0
    %1637 = vmatpush1.msra.mxu0 %v95
    %1638 = vmatprep.subr.mxu0 0.0
    %1639 = vmatpush1.msra.mxu0 %v96
    %1640 = vmatprep.subr.mxu0 0.0
    %1641 = vmatpush1.msra.mxu0 %v97
    %1642 = vmatprep.subr.mxu0 0.0
    %1643 = vmatpush1.msra.mxu0 %v98
    %1644 = vmatprep.subr.mxu0 0.0
    %1645 = vmatpush1.msra.mxu0 %v99
    %1646 = vmatprep.subr.mxu0 0.0
    %1647 = vmatpush1.msra.mxu0 %v100
    %1648 = vmatprep.subr.mxu0 0.0
    %1649 = vmatpush1.msra.mxu0 0.0
    %1650 = vmatprep.subr.mxu0 0.0
    %1651 = vmatpush1.msra.mxu0 0.0
    %1652 = vmatprep.subr.mxu0 0.0
    %1653 = vmatpush1.msra.mxu0 0.0
    %1654 = vmatprep.subr.mxu0 0.0
    %1655 = vmatpush1.msra.mxu0 0.0
    %1656 = vmatprep.subr.mxu0 0.0
    %1657 = vmatpush1.msra.mxu0 0.0
    %1658 = vmatprep.subr.mxu0 0.0
    %1659 = vmatpush1.msra.mxu0 0.0
    %1660 = vmatprep.subr.mxu0 0.0
    %1661 = vmatpush1.msra.mxu0 0.0
    %1662 = vmatprep.subr.mxu0 0.0
    %1663 = vmatpush1.msra.mxu0 0.0
    %1664 = vmatprep.subr.mxu0 0.0
    %1665 = vmatpush1.msra.mxu0 0.0
    %1666 = vmatprep.subr.mxu0 0.0
    %1667 = vmatpush1.msra.mxu0 0.0
    %1668 = vmatprep.subr.mxu0 0.0
    %1669 = vmatpush1.msra.mxu0 0.0
    %1670 = vmatprep.subr.mxu0 0.0
    %1671 = vmatpush1.msra.mxu0 0.0
    %1672 = vmatprep.subr.mxu0 0.0
    %1673 = vmatpush1.msra.mxu0 0.0
    %1674 = vmatprep.subr.mxu0 0.0
    %1675 = vmatpush1.msra.mxu0 0.0
    %1676 = vmatprep.subr.mxu0 0.0
    %1677 = vmatpush1.msra.mxu0 0.0
    %1678 = vmatprep.subr.mxu0 0.0
    %1679 = vmatpush1.msra.mxu0 0.0
    %1680 = vmatprep.subr.mxu0 0.0
    %1681 = vmatpush1.msra.mxu0 0.0
    %1682 = vmatprep.subr.mxu0 0.0
    %1683 = vmatpush1.msra.mxu0 0.0
    %1684 = vmatprep.subr.mxu0 0.0
    %1685 = vmatpush1.msra.mxu0 0.0
    %1686 = vmatprep.subr.mxu0 0.0
    %1687 = vmatpush1.msra.mxu0 0.0
    %1688 = vmatprep.subr.mxu0 0.0
    %1689 = vmatpush1.msra.mxu0 0.0
    %1690 = vmatprep.subr.mxu0 0.0
    %1691 = vmatpush1.msra.mxu0 0.0
    %1692 = vmatprep.subr.mxu0 0.0
    %1693 = vmatpush1.msra.mxu0 0.0
    %1694 = vmatprep.subr.mxu0 0.0
    %1695 = vmatpush1.msra.mxu0 0.0
    %1696 = vmatprep.mubr.f32.mxu0 0.0
    %1697 = vmatmul.mubr.f32.gmra.mrb[0].mxu0 %v1630
    %v1698 = vpop.f32.mrb[0].mxu0
    %v1699 = vadd.f32 %v120, %v1698
    %v1700 = vpop.f32.mrb[0].mxu0
    %1701 = vdwg.mxu0
    %v1702 = vxor.u32 %v1699, 2147483648
    %v1703 = vmul.f32 %v1702, 1.442695
    %v1704 = vpow.pop %v1703
    %v1705 = vadd.f32 %v1704, 1.0
    %v1706 = vrcp.pop %v1705
    %v1707 = vmul.f32 1.0, %v1706
    %v1708 = vtanh.pop %v1699
    %v1709 = vmul.f32 %v1707, %v1623
    %1711 = vrot.lane.b32.xlu0 %v1708, 64
    %v1712 = vpop.permute.xlu0 %1711
    %v1714 = vmul.f32 %v1707, %v1712
    %1716 = vrot.lane.b32.xlu0 %v1714, 32
    %v1717 = vpop.permute.xlu0 %1716
    %v1719 = vadd.f32 %v1709, %v1717
    %v1720 = vtanh.pop %v1719
    %1722 = vrot.lane.b32.xlu0 %v1720, 64
    %v1723 = vpop.permute.xlu0 %1722
    %v1725 = vmul.f32 %v1707, %v1723
    %v1726 = vmul.f32 %v1725, %v226
    %1728 = vrot.lane.b32.xlu0 %v1726, 32
    %v1729 = vpop.permute.xlu0 %1728
    %v1731 = vsel %vm114, %v1729, 0.0
    %1732 = vadd.xlane.f32.xlu0 %v1731
    %v1733 = vpop.xlane.xlu0 %1732
    %v1734 = vadd.f32 %v1733, %v240
    %v1735 = vxor.u32 %v1734, 2147483648
    %v1736 = vmul.f32 %v1735, 1.442695
    %v1737 = vpow.pop %v1736
    %v1738 = vadd.f32 %v1737, 1.0
    %v1739 = vrcp.pop %v1738
    %v1740 = vmul.f32 1.0, %v1739
    %1742 = vrot.lane.b32.xlu0 %v1740, 6
    %v1743 = vpop.permute.xlu0 %1742
    %vm1745 = vcmask 56368
    %1746 = vst.msk [vmem:[#allocation12] sm:$0xff] %vm1745, %v1743
    %1748 = vrot.lane.b32.xlu0 %v1725, 32
    %v1749 = vpop.permute.xlu0 %1748
    %1752 = vrot.lane.b32.xlu0 %v1616, 64
    %v1753 = vpop.permute.xlu0 %1752
    %v1755 = vsel %vm114, %v1749, %v1753
    %v1757 = vsel %vm122, %v1755, 0
    %1759 = vmatprep.subr.mxu0 0.0
    %1760 = vmatpush1.msra.mxu0 %v102
    %1761 = vmatprep.subr.mxu0 0.0
    %1762 = vmatpush1.msra.mxu0 %v103
    %1763 = vmatprep.subr.mxu0 0.0
    %1764 = vmatpush1.msra.mxu0 %v104
    %1765 = vmatprep.subr.mxu0 0.0
    %1766 = vmatpush1.msra.mxu0 %v105
    %1767 = vmatprep.subr.mxu0 0.0
    %1768 = vmatpush1.msra.mxu0 %v106
    %1769 = vmatprep.subr.mxu0 0.0
    %1770 = vmatpush1.msra.mxu0 %v107
    %1771 = vmatprep.subr.mxu0 0.0
    %1772 = vmatpush1.msra.mxu0 %v108
    %1773 = vmatprep.subr.mxu0 0.0
    %1774 = vmatpush1.msra.mxu0 %v109
    %1775 = vmatprep.subr.mxu0 0.0
    %1776 = vmatpush1.msra.mxu0 0.0
    %1777 = vmatprep.subr.mxu0 0.0
    %1778 = vmatpush1.msra.mxu0 0.0
    %1779 = vmatprep.subr.mxu0 0.0
    %1780 = vmatpush1.msra.mxu0 0.0
    %1781 = vmatprep.subr.mxu0 0.0
    %1782 = vmatpush1.msra.mxu0 0.0
    %1783 = vmatprep.subr.mxu0 0.0
    %1784 = vmatpush1.msra.mxu0 0.0
    %1785 = vmatprep.subr.mxu0 0.0
    %1786 = vmatpush1.msra.mxu0 0.0
    %1787 = vmatprep.subr.mxu0 0.0
    %1788 = vmatpush1.msra.mxu0 0.0
    %1789 = vmatprep.subr.mxu0 0.0
    %1790 = vmatpush1.msra.mxu0 0.0
    %1791 = vmatprep.subr.mxu0 0.0
    %1792 = vmatpush1.msra.mxu0 0.0
    %1793 = vmatprep.subr.mxu0 0.0
    %1794 = vmatpush1.msra.mxu0 0.0
    %1795 = vmatprep.subr.mxu0 0.0
    %1796 = vmatpush1.msra.mxu0 0.0
    %1797 = vmatprep.subr.mxu0 0.0
    %1798 = vmatpush1.msra.mxu0 0.0
    %1799 = vmatprep.subr.mxu0 0.0
    %1800 = vmatpush1.msra.mxu0 0.0
    %1801 = vmatprep.subr.mxu0 0.0
    %1802 = vmatpush1.msra.mxu0 0.0
    %1803 = vmatprep.subr.mxu0 0.0
    %1804 = vmatpush1.msra.mxu0 0.0
    %1805 = vmatprep.subr.mxu0 0.0
    %1806 = vmatpush1.msra.mxu0 0.0
    %1807 = vmatprep.subr.mxu0 0.0
    %1808 = vmatpush1.msra.mxu0 0.0
    %1809 = vmatprep.subr.mxu0 0.0
    %1810 = vmatpush1.msra.mxu0 0.0
    %1811 = vmatprep.subr.mxu0 0.0
    %1812 = vmatpush1.msra.mxu0 0.0
    %1813 = vmatprep.subr.mxu0 0.0
    %1814 = vmatpush1.msra.mxu0 0.0
    %1815 = vmatprep.subr.mxu0 0.0
    %1816 = vmatpush1.msra.mxu0 0.0
    %1817 = vmatprep.subr.mxu0 0.0
    %1818 = vmatpush1.msra.mxu0 0.0
    %1819 = vmatprep.subr.mxu0 0.0
    %1820 = vmatpush1.msra.mxu0 0.0
    %1821 = vmatprep.subr.mxu0 0.0
    %1822 = vmatpush1.msra.mxu0 0.0
    %1823 = vmatprep.mubr.f32.mxu0 0.0
    %1824 = vmatmul.mubr.f32.gmra.mrb[0].mxu0 %v1757
    %v1825 = vpop.f32.mrb[0].mxu0
    %v1826 = vadd.f32 %v260, %v1825
    %v1827 = vpop.f32.mrb[0].mxu0
    %1828 = vdwg.mxu0
    %v1829 = vxor.u32 %v1826, 2147483648
    %v1830 = vmul.f32 %v1829, 1.442695
    %v1831 = vpow.pop %v1830
    %v1832 = vadd.f32 %v1831, 1.0
    %v1833 = vrcp.pop %v1832
    %v1834 = vmul.f32 1.0, %v1833
    %v1835 = vtanh.pop %v1826
    %v1836 = vmul.f32 %v1834, %v1619
    %1838 = vrot.lane.b32.xlu0 %v1835, 64
    %v1839 = vpop.permute.xlu0 %1838
    %v1841 = vmul.f32 %v1834, %v1839
    %1843 = vrot.lane.b32.xlu0 %v1841, 32
    %v1844 = vpop.permute.xlu0 %1843
    %v1846 = vadd.f32 %v1836, %v1844
    %v1847 = vtanh.pop %v1846
    %1849 = vrot.lane.b32.xlu0 %v1847, 64
    %v1850 = vpop.permute.xlu0 %1849
    %v1852 = vmul.f32 %v1834, %v1850
    %v1853 = vsub.f32 1.0, %v1740
    %1854 = vset.pattern.permute.xlu0 0
    %1855 = vperm.xlu0 %1854, %v1740
    %v1856 = vpop.permute.xlu0 %1855
    %v1858 = vmul.f32 %v1856, %v1852
    %1860 = vset.pattern.permute.xlu0 0
    %1861 = vperm.xlu0 %1860, %v1853
    %v1862 = vpop.permute.xlu0 %1861
    %v1864 = vmul.f32 %v1862, %v1616
    %v1865 = vadd.f32 %v1858, %v1864
    %v1866 = vmul.f32 %v1856, %v1846
    %v1867 = vmul.f32 %v1862, %v1619
    %v1868 = vadd.f32 %v1866, %v1867
    %s1869 = scalar_lea.vmem [#allocation3], 56
    %v1870 = vld [vmem:[%s1869] sm:$0xff]
    %v1871 = vmul.f32 %v1725, %v1862
    %v1872 = vmul.f32 %v1719, %v1862
    %1874 = vrot.lane.b32.xlu0 %v1871, 64
    %v1875 = vpop.permute.xlu0 %1874
    %v1877 = vsel %vm114, %v1870, %v1875
    %v1879 = vsel %vm122, %v1877, 0
    %1881 = vmatprep.subr.mxu0 0.0
    %1882 = vmatpush1.msra.mxu0 %v93
    %1883 = vmatprep.subr.mxu0 0.0
    %1884 = vmatpush1.msra.mxu0 %v94
    %1885 = vmatprep.subr.mxu0 0.0
    %1886 = vmatpush1.msra.mxu0 %v95
    %1887 = vmatprep.subr.mxu0 0.0
    %1888 = vmatpush1.msra.mxu0 %v96
    %1889 = vmatprep.subr.mxu0 0.0
    %1890 = vmatpush1.msra.mxu0 %v97
    %1891 = vmatprep.subr.mxu0 0.0
    %1892 = vmatpush1.msra.mxu0 %v98
    %1893 = vmatprep.subr.mxu0 0.0
    %1894 = vmatpush1.msra.mxu0 %v99
    %1895 = vmatprep.subr.mxu0 0.0
    %1896 = vmatpush1.msra.mxu0 %v100
    %1897 = vmatprep.subr.mxu0 0.0
    %1898 = vmatpush1.msra.mxu0 0.0
    %1899 = vmatprep.subr.mxu0 0.0
    %1900 = vmatpush1.msra.mxu0 0.0
    %1901 = vmatprep.subr.mxu0 0.0
    %1902 = vmatpush1.msra.mxu0 0.0
    %1903 = vmatprep.subr.mxu0 0.0
    %1904 = vmatpush1.msra.mxu0 0.0
    %1905 = vmatprep.subr.mxu0 0.0
    %1906 = vmatpush1.msra.mxu0 0.0
    %1907 = vmatprep.subr.mxu0 0.0
    %1908 = vmatpush1.msra.mxu0 0.0
    %1909 = vmatprep.subr.mxu0 0.0
    %1910 = vmatpush1.msra.mxu0 0.0
    %1911 = vmatprep.subr.mxu0 0.0
    %1912 = vmatpush1.msra.mxu0 0.0
    %1913 = vmatprep.subr.mxu0 0.0
    %1914 = vmatpush1.msra.mxu0 0.0
    %1915 = vmatprep.subr.mxu0 0.0
    %1916 = vmatpush1.msra.mxu0 0.0
    %1917 = vmatprep.subr.mxu0 0.0
    %1918 = vmatpush1.msra.mxu0 0.0
    %1919 = vmatprep.subr.mxu0 0.0
    %1920 = vmatpush1.msra.mxu0 0.0
    %1921 = vmatprep.subr.mxu0 0.0
    %1922 = vmatpush1.msra.mxu0 0.0
    %1923 = vmatprep.subr.mxu0 0.0
    %1924 = vmatpush1.msra.mxu0 0.0
    %1925 = vmatprep.subr.mxu0 0.0
    %1926 = vmatpush1.msra.mxu0 0.0
    %1927 = vmatprep.subr.mxu0 0.0
    %1928 = vmatpush1.msra.mxu0 0.0
    %1929 = vmatprep.subr.mxu0 0.0
    %1930 = vmatpush1.msra.mxu0 0.0
    %1931 = vmatprep.subr.mxu0 0.0
    %1932 = vmatpush1.msra.mxu0 0.0
    %1933 = vmatprep.subr.mxu0 0.0
    %1934 = vmatpush1.msra.mxu0 0.0
    %1935 = vmatprep.subr.mxu0 0.0
    %1936 = vmatpush1.msra.mxu0 0.0
    %1937 = vmatprep.subr.mxu0 0.0
    %1938 = vmatpush1.msra.mxu0 0.0
    %1939 = vmatprep.subr.mxu0 0.0
    %1940 = vmatpush1.msra.mxu0 0.0
    %1941 = vmatprep.subr.mxu0 0.0
    %1942 = vmatpush1.msra.mxu0 0.0
    %1943 = vmatprep.subr.mxu0 0.0
    %1944 = vmatpush1.msra.mxu0 0.0
    %1945 = vmatprep.mubr.f32.mxu0 0.0
    %1946 = vmatmul.mubr.f32.gmra.mrb[0].mxu0 %v1879
    %v1947 = vpop.f32.mrb[0].mxu0
    %v1948 = vadd.f32 %v120, %v1947
    %v1949 = vpop.f32.mrb[0].mxu0
    %1950 = vdwg.mxu0
    %v1951 = vxor.u32 %v1948, 2147483648
    %v1952 = vmul.f32 %v1951, 1.442695
    %v1953 = vpow.pop %v1952
    %v1954 = vadd.f32 %v1953, 1.0
    %v1955 = vrcp.pop %v1954
    %v1956 = vmul.f32 1.0, %v1955
    %v1957 = vtanh.pop %v1948
    %v1958 = vmul.f32 %v1956, %v1872
    %1960 = vrot.lane.b32.xlu0 %v1957, 64
    %v1961 = vpop.permute.xlu0 %1960
    %v1963 = vmul.f32 %v1956, %v1961
    %1965 = vrot.lane.b32.xlu0 %v1963, 32
    %v1966 = vpop.permute.xlu0 %1965
    %v1968 = vadd.f32 %v1958, %v1966
    %v1969 = vtanh.pop %v1968
    %1971 = vrot.lane.b32.xlu0 %v1969, 64
    %v1972 = vpop.permute.xlu0 %1971
    %v1974 = vmul.f32 %v1956, %v1972
    %v1975 = vmul.f32 %v1974, %v226
    %1977 = vrot.lane.b32.xlu0 %v1975, 32
    %v1978 = vpop.permute.xlu0 %1977
    %v1980 = vsel %vm114, %v1978, 0.0
    %1981 = vadd.xlane.f32.xlu0 %v1980
    %v1982 = vpop.xlane.xlu0 %1981
    %v1983 = vadd.f32 %v1982, %v240
    %v1984 = vxor.u32 %v1983, 2147483648
    %v1985 = vmul.f32 %v1984, 1.442695
    %v1986 = vpow.pop %v1985
    %v1987 = vadd.f32 %v1986, 1.0
    %v1988 = vrcp.pop %v1987
    %v1989 = vmul.f32 1.0, %v1988
    %1991 = vrot.lane.b32.xlu0 %v1989, 7
    %v1992 = vpop.permute.xlu0 %1991
    %vm1994 = vcmask 64568
    %1995 = vst.msk [vmem:[#allocation12] sm:$0xff] %vm1994, %v1992
    %1997 = vrot.lane.b32.xlu0 %v1974, 32
    %v1998 = vpop.permute.xlu0 %1997
    %2001 = vrot.lane.b32.xlu0 %v1865, 64
    %v2002 = vpop.permute.xlu0 %2001
    %v2004 = vsel %vm114, %v1998, %v2002
    %v2006 = vsel %vm122, %v2004, 0
    %2008 = vmatprep.subr.mxu0 0.0
    %2009 = vmatpush1.msra.mxu0 %v102
    %2010 = vmatprep.subr.mxu0 0.0
    %2011 = vmatpush1.msra.mxu0 %v103
    %2012 = vmatprep.subr.mxu0 0.0
    %2013 = vmatpush1.msra.mxu0 %v104
    %2014 = vmatprep.subr.mxu0 0.0
    %2015 = vmatpush1.msra.mxu0 %v105
    %2016 = vmatprep.subr.mxu0 0.0
    %2017 = vmatpush1.msra.mxu0 %v106
    %2018 = vmatprep.subr.mxu0 0.0
    %2019 = vmatpush1.msra.mxu0 %v107
    %2020 = vmatprep.subr.mxu0 0.0
    %2021 = vmatpush1.msra.mxu0 %v108
    %2022 = vmatprep.subr.mxu0 0.0
    %2023 = vmatpush1.msra.mxu0 %v109
    %2024 = vmatprep.subr.mxu0 0.0
    %2025 = vmatpush1.msra.mxu0 0.0
    %2026 = vmatprep.subr.mxu0 0.0
    %2027 = vmatpush1.msra.mxu0 0.0
    %2028 = vmatprep.subr.mxu0 0.0
    %2029 = vmatpush1.msra.mxu0 0.0
    %2030 = vmatprep.subr.mxu0 0.0
    %2031 = vmatpush1.msra.mxu0 0.0
    %2032 = vmatprep.subr.mxu0 0.0
    %2033 = vmatpush1.msra.mxu0 0.0
    %2034 = vmatprep.subr.mxu0 0.0
    %2035 = vmatpush1.msra.mxu0 0.0
    %2036 = vmatprep.subr.mxu0 0.0
    %2037 = vmatpush1.msra.mxu0 0.0
    %2038 = vmatprep.subr.mxu0 0.0
    %2039 = vmatpush1.msra.mxu0 0.0
    %2040 = vmatprep.subr.mxu0 0.0
    %2041 = vmatpush1.msra.mxu0 0.0
    %2042 = vmatprep.subr.mxu0 0.0
    %2043 = vmatpush1.msra.mxu0 0.0
    %2044 = vmatprep.subr.mxu0 0.0
    %2045 = vmatpush1.msra.mxu0 0.0
    %2046 = vmatprep.subr.mxu0 0.0
    %2047 = vmatpush1.msra.mxu0 0.0
    %2048 = vmatprep.subr.mxu0 0.0
    %2049 = vmatpush1.msra.mxu0 0.0
    %2050 = vmatprep.subr.mxu0 0.0
    %2051 = vmatpush1.msra.mxu0 0.0
    %2052 = vmatprep.subr.mxu0 0.0
    %2053 = vmatpush1.msra.mxu0 0.0
    %2054 = vmatprep.subr.mxu0 0.0
    %2055 = vmatpush1.msra.mxu0 0.0
    %2056 = vmatprep.subr.mxu0 0.0
    %2057 = vmatpush1.msra.mxu0 0.0
    %2058 = vmatprep.subr.mxu0 0.0
    %2059 = vmatpush1.msra.mxu0 0.0
    %2060 = vmatprep.subr.mxu0 0.0
    %2061 = vmatpush1.msra.mxu0 0.0
    %2062 = vmatprep.subr.mxu0 0.0
    %2063 = vmatpush1.msra.mxu0 0.0
    %2064 = vmatprep.subr.mxu0 0.0
    %2065 = vmatpush1.msra.mxu0 0.0
    %2066 = vmatprep.subr.mxu0 0.0
    %2067 = vmatpush1.msra.mxu0 0.0
    %2068 = vmatprep.subr.mxu0 0.0
    %2069 = vmatpush1.msra.mxu0 0.0
    %2070 = vmatprep.subr.mxu0 0.0
    %2071 = vmatpush1.msra.mxu0 0.0
    %2072 = vmatprep.mubr.f32.mxu0 0.0
    %2073 = vmatmul.mubr.f32.gmra.mrb[0].mxu0 %v2006
    %v2074 = vpop.f32.mrb[0].mxu0
    %v2075 = vadd.f32 %v260, %v2074
    %v2076 = vpop.f32.mrb[0].mxu0
    %2077 = vdwg.mxu0
    %v2078 = vxor.u32 %v2075, 2147483648
    %v2079 = vmul.f32 %v2078, 1.442695
    %v2080 = vpow.pop %v2079
    %v2081 = vadd.f32 %v2080, 1.0
    %v2082 = vrcp.pop %v2081
    %v2083 = vmul.f32 1.0, %v2082
    %v2084 = vtanh.pop %v2075
    %v2085 = vmul.f32 %v2083, %v1868
    %2087 = vrot.lane.b32.xlu0 %v2084, 64
    %v2088 = vpop.permute.xlu0 %2087
    %v2090 = vmul.f32 %v2083, %v2088
    %2092 = vrot.lane.b32.xlu0 %v2090, 32
    %v2093 = vpop.permute.xlu0 %2092
    %v2095 = vadd.f32 %v2085, %v2093
    %v2096 = vtanh.pop %v2095
    %2098 = vrot.lane.b32.xlu0 %v2096, 64
    %v2099 = vpop.permute.xlu0 %2098
    %v2101 = vmul.f32 %v2083, %v2099
    %v2102 = vsub.f32 1.0, %v1989
    %2103 = vset.pattern.permute.xlu0 0
    %2104 = vperm.xlu0 %2103, %v1989
    %v2105 = vpop.permute.xlu0 %2104
    %v2107 = vmul.f32 %v2105, %v2101
    %2109 = vset.pattern.permute.xlu0 0
    %2110 = vperm.xlu0 %2109, %v2102
    %v2111 = vpop.permute.xlu0 %2110
    %v2113 = vmul.f32 %v2111, %v1865
    %v2114 = vadd.f32 %v2107, %v2113
    %vm2115 = vcmask 1047616
    %2116 = vst.msk [vmem:[#allocation12] sm:$0xff] %vm2115, 0.0
    %v2117 = vld [vmem:[#allocation9] sm:$0xff]
    %v2118 = vld [vmem:[#allocation9 + $0x8] sm:$0xff]
    %v2119 = vld [vmem:[#allocation9 + $0x10] sm:$0xff]
    %v2120 = vld [vmem:[#allocation9 + $0x18] sm:$0xff]
    %v2121 = vld [vmem:[%s8] sm:$0x1]
    %v2123 = vlaneseq
    %v2124 = vshrl.u32 %v2123, 7
    %v2125 = vsub.s32 0, %v2124
    %v2126 = vrot.slane %v2121, %v2125
    %2129 = vrot.lane.b32.xlu0 %v2114, 32
    %v2130 = vpop.permute.xlu0 %2129
    %v2131 = vsel %vm114, %v2130, 0
    %2133 = vmatprep.subr.mxu0 0.0
    %2134 = vmatpush1.msra.mxu0 %v2117
    %2135 = vmatprep.subr.mxu0 0.0
    %2136 = vmatpush1.msra.mxu0 %v2118
    %2137 = vmatprep.subr.mxu0 0.0
    %2138 = vmatpush1.msra.mxu0 %v2119
    %2139 = vmatprep.subr.mxu0 0.0
    %2140 = vmatpush1.msra.mxu0 %v2120
    %2141 = vmatprep.subr.mxu0 0.0
    %2142 = vmatpush1.msra.mxu0 0.0
    %2143 = vmatprep.subr.mxu0 0.0
    %2144 = vmatpush1.msra.mxu0 0.0
    %2145 = vmatprep.subr.mxu0 0.0
    %2146 = vmatpush1.msra.mxu0 0.0
    %2147 = vmatprep.subr.mxu0 0.0
    %2148 = vmatpush1.msra.mxu0 0.0
    %2149 = vmatprep.subr.mxu0 0.0
    %2150 = vmatpush1.msra.mxu0 0.0
    %2151 = vmatprep.subr.mxu0 0.0
    %2152 = vmatpush1.msra.mxu0 0.0
    %2153 = vmatprep.subr.mxu0 0.0
    %2154 = vmatpush1.msra.mxu0 0.0
    %2155 = vmatprep.subr.mxu0 0.0
    %2156 = vmatpush1.msra.mxu0 0.0
    %2157 = vmatprep.subr.mxu0 0.0
    %2158 = vmatpush1.msra.mxu0 0.0
    %2159 = vmatprep.subr.mxu0 0.0
    %2160 = vmatpush1.msra.mxu0 0.0
    %2161 = vmatprep.subr.mxu0 0.0
    %2162 = vmatpush1.msra.mxu0 0.0
    %2163 = vmatprep.subr.mxu0 0.0
    %2164 = vmatpush1.msra.mxu0 0.0
    %2165 = vmatprep.subr.mxu0 0.0
    %2166 = vmatpush1.msra.mxu0 0.0
    %2167 = vmatprep.subr.mxu0 0.0
    %2168 = vmatpush1.msra.mxu0 0.0
    %2169 = vmatprep.subr.mxu0 0.0
    %2170 = vmatpush1.msra.mxu0 0.0
    %2171 = vmatprep.subr.mxu0 0.0
    %2172 = vmatpush1.msra.mxu0 0.0
    %2173 = vmatprep.subr.mxu0 0.0
    %2174 = vmatpush1.msra.mxu0 0.0
    %2175 = vmatprep.subr.mxu0 0.0
    %2176 = vmatpush1.msra.mxu0 0.0
    %2177 = vmatprep.subr.mxu0 0.0
    %2178 = vmatpush1.msra.mxu0 0.0
    %2179 = vmatprep.subr.mxu0 0.0
    %2180 = vmatpush1.msra.mxu0 0.0
    %2181 = vmatprep.subr.mxu0 0.0
    %2182 = vmatpush1.msra.mxu0 0.0
    %2183 = vmatprep.subr.mxu0 0.0
    %2184 = vmatpush1.msra.mxu0 0.0
    %2185 = vmatprep.subr.mxu0 0.0
    %2186 = vmatpush1.msra.mxu0 0.0
    %2187 = vmatprep.subr.mxu0 0.0
    %2188 = vmatpush1.msra.mxu0 0.0
    %2189 = vmatprep.subr.mxu0 0.0
    %2190 = vmatpush1.msra.mxu0 0.0
    %2191 = vmatprep.subr.mxu0 0.0
    %2192 = vmatpush1.msra.mxu0 0.0
    %2193 = vmatprep.subr.mxu0 0.0
    %2194 = vmatpush1.msra.mxu0 0.0
    %2195 = vmatprep.subr.mxu0 0.0
    %2196 = vmatpush1.msra.mxu0 0.0
    %2197 = vmatprep.mubr.f32.mxu0 0.0
    %2198 = vmatmul.mubr.f32.gmra.mrb[0].mxu0 %v2131
    %v2199 = vpop.f32.mrb[0].mxu0
    %v2200 = vadd.f32 %v2126, %v2199
    %v2201 = vpop.f32.mrb[0].mxu0
    %2202 = vdwg.mxu0
    %2203 = vst [vmem:[#allocation11] sm:$0xff] %v2200
    // Predicated region
    $region54: #{tpu_custom_call.1} parent=1 // pred_check
      _
    $region55: #{tpu_custom_call.1} parent=1 // pred_check_branch
      %2205 = sbr.rel (0) target = $region57
    $region56: #{tpu_custom_call.1} parent=1 // pred_region
      %s2207 = ssub.s32 128, 128
      %2208 = vsyncadd [#allocation5], %s2207
      %s2210 = sshll.u32 [#allocation11], 4
      %s2211 = int_to_ptr.vmem [resolvable:$true] %s2210
      %2213 = dma.vmem_to_hbm [thread:$0]  %s2211, 128, %s9, [#allocation5]
    $region57: #{tpu_custom_call.1} parent=1 // pred_fallthru
      _
    // Predicated region
    $region58: #{tpu_custom_call.1} parent=1 // pred_check
      _
    $region59: #{tpu_custom_call.1} parent=1 // pred_check_branch
      %2215 = sbr.rel (0) target = $region61
    $region60: #{tpu_custom_call.1} parent=1 // pred_region
      %s2217 = ssub.s32 128, 128
      %2218 = vsyncadd [#allocation13], %s2217
      %s2220 = sshll.u32 [#allocation12], 4
      %s2221 = int_to_ptr.vmem [resolvable:$true] %s2220
      %2223 = dma.vmem_to_hbm [thread:$0]  %s2221, 128, %s10, [#allocation13]
    $region61: #{tpu_custom_call.1} parent=1 // pred_fallthru
      _
    // Predicated region
    $region62: #{tpu_custom_call.1} parent=1 // pred_check
      _
    $region63: #{tpu_custom_call.1} parent=1 // pred_check_branch
      %2225 = sbr.rel (0) target = $region65
    $region64: #{tpu_custom_call.1} parent=1 // pred_region
      %2226 = dma.done [#allocation5], 128
    $region65: #{tpu_custom_call.1} parent=1 // pred_fallthru
      _
    // Predicated region
    $region66: #{tpu_custom_call.1} parent=1 // pred_check
      _
    $region67: #{tpu_custom_call.1} parent=1 // pred_check_branch
      %2228 = sbr.rel (0) target = $region69
    $region68: #{tpu_custom_call.1} parent=1 // pred_region
      %2229 = dma.done [#allocation13], 128
    $region69: #{tpu_custom_call.1} parent=1 // pred_fallthru
      _
    %2230 = vsyncpa [#allocation4], 1
    %2231 = vsyncpa [#allocation7], 1
    %2232 = vsyncpa [#allocation10], 1
    %2233 = vsyncpa [#allocation5], 1
    %2234 = vsyncpa [#allocation13], 1

</llo_original>
